<compile_context>
chip_gen: v5e
topology: v5e:2x2
jax: 0.10.0
libtpu: 0.0.40
codegen_flags: <defaults>
</compile_context>

<pallas_src>
from functools import partial

import jax
import jax.numpy as jnp
from jax import lax
from jax.experimental import pallas as pl
from jax.experimental.pallas import tpu as pltpu


# ------------------------------ GELU (exact erf) -----------------------------

def _gelu_exact(x):
    # nn.GELU() default = exact erf GELU.  erf via Abramowitz-Stegun 7.1.26;
    # the divide runs on the EUP (pl.reciprocal, approx) so the epilogue's VALU
    # slots stay free (matters most on v5e).  Error well inside the test tol.
    z = x * 0.7071067811865476
    a = jnp.abs(z)
    t = pl.reciprocal(1.0 + 0.3275911 * a, approx=True)
    poly = t * (0.254829592 + t * (-0.284496736 + t * (1.421413741
             + t * (-1.453152027 + t * 1.061405429))))
    erf_abs = 1.0 - poly * jnp.exp(-a * a)
    erf = jnp.where(z >= 0.0, erf_abs, -erf_abs)
    return 0.5 * x * (1.0 + erf)


# dot_general dimension numbers for A @ B^T (contract the last dim of both).
_TB = (((1,), (1,)), ((), ()))


# ------------------------------ fused kernel ---------------------------------

def _fused_kernel(x_ref, w1_ref, b1_ref, w9_ref, dwb_ref, pww_ref, pwb_ref,
                  w2_ref, b2_ref, o_ref, hp_ref, *, W, HW):
    f32 = jnp.float32
    bf16 = jnp.bfloat16

    # --- 1) Conv2d(dim, hidden, 1): h = x @ w1^T + b1 ----------------- (HW, hid)
    h = lax.dot_general(x_ref[...].astype(bf16), w1_ref[...], _TB,
                        preferred_element_type=f32)
    h = h + b1_ref[...]

    # --- 2) depthwise 3x3, padding=1, groups=hidden -------------------- (HW, hid)
    # Flattened-row stencil: rows of h live at hp[W+1 : W+1+HW]; tap (kh, kw) is
    # the contiguous row window starting at kh*W + kw.  The zero rows above and
    # below provide the H halo; iota masks zero the column wrap of kw=0 / kw=2.
    off = W + 1
    hp_ref[...] = jnp.zeros_like(hp_ref)
    hp_ref[off:off + HW, :] = h

    w9 = w9_ref[...]                                       # (9, hidden), hoisted
    col = lax.broadcasted_iota(jnp.int32, (HW, 1), 0) % W
    not_left = (col >= 1).astype(f32)                      # valid for kw == 0 taps
    not_right = (col <= W - 2).astype(f32)                 # valid for kw == 2 taps

    acc = jnp.zeros_like(h)
    for kh in range(3):
        for kw in range(3):
            s = kh * W + kw
            tap = hp_ref[s:s + HW, :]
            if kw == 0:
                tap = tap * not_left
            elif kw == 2:
                tap = tap * not_right
            acc = acc + tap * w9[kh * 3 + kw:kh * 3 + kw + 1, :]
    dw = acc + dwb_ref[...]

    # --- 3) pointwise 1x1 of DsConv2d, then nn.GELU() ------------------ (HW, hid)
    g = lax.dot_general(dw.astype(bf16), pww_ref[...], _TB,
                        preferred_element_type=f32)
    g = _gelu_exact(g + pwb_ref[...])

    # --- 4) Conv2d(hidden, dim, 1), computed transposed ----------------- (C, HW)
    # y^T = w2 @ g^T keeps B*H*W on the lane axis, so the single HBM store of
    # this kernel is lane-dense and NCHW falls out with a free reshape.
    yt = lax.dot_general(w2_ref[...], g.astype(bf16), _TB,
                         preferred_element_type=f32)
    o_ref[...] = (yt + b2_ref[...]).astype(o_ref.dtype)


# ------------------------------ wrapper --------------------------------------

def mix_feed_forward(params, x):
    """Forward of MixFeedForward; x is NCHW like the PyTorch module."""
    B, C, H, W = x.shape
    hidden = params["w1"].shape[0]
    HW = H * W

    # One small entry transpose of the dim-channel input; the hidden-sized
    # activations never leave VMEM.
    x_nhwc = jnp.transpose(x, (0, 2, 3, 1)).reshape(B, HW, C)

    # Weights stay in their natural PyTorch (out, in) layout (the kernel uses
    # A @ B^T dots); MXU operands pre-cast to bf16 once, f32 accumulation inside.
    w1 = params["w1"].reshape(hidden, C).astype(jnp.bfloat16)
    pww = params["pw_w"].reshape(hidden, hidden).astype(jnp.bfloat16)
    w2 = params["w2"].reshape(C, hidden).astype(jnp.bfloat16)
    w9 = params["dw_w"].reshape(hidden, 9).T.astype(jnp.float32)     # (9, hidden)
    b1 = params["b1"].reshape(1, hidden).astype(jnp.float32)
    dwb = params["dw_b"].reshape(1, hidden).astype(jnp.float32)
    pwb = params["pw_b"].reshape(1, hidden).astype(jnp.float32)
    b2 = params["b2"].reshape(C, 1).astype(jnp.float32)

    out = pl.pallas_call(
        partial(_fused_kernel, W=W, HW=HW),
        out_shape=jax.ShapeDtypeStruct((B, C, HW), jnp.float32),
        grid=(B,),
        in_specs=[
            pl.BlockSpec((None, HW, C), lambda b: (b, 0, 0)),       # x (one batch)
            pl.BlockSpec((hidden, C), lambda b: (0, 0)),            # w1
            pl.BlockSpec((1, hidden), lambda b: (0, 0)),            # b1
            pl.BlockSpec((9, hidden), lambda b: (0, 0)),            # depthwise taps
            pl.BlockSpec((1, hidden), lambda b: (0, 0)),            # dw bias
            pl.BlockSpec((hidden, hidden), lambda b: (0, 0)),       # pw_w
            pl.BlockSpec((1, hidden), lambda b: (0, 0)),            # pw_b
            pl.BlockSpec((C, hidden), lambda b: (0, 0)),            # w2
            pl.BlockSpec((C, 1), lambda b: (0, 0)),                 # b2
        ],
        out_specs=pl.BlockSpec((None, C, HW), lambda b: (b, 0, 0)),
        scratch_shapes=[pltpu.VMEM((HW + 2 * W + 8, hidden), jnp.float32)],
        compiler_params=pltpu.CompilerParams(
            dimension_semantics=("parallel",)),  # B>=2 keeps both v7x TCs busy
    )(x_nhwc, w1, b1, w9, dwb, pww, pwb, w2, b2)

    # TODO(synk): for production H*W*hidden that overflows VMEM, add a grid axis
    # tiling HW in row blocks with a 1-row halo (and hidden in blocks of 128).
    return out.reshape(B, C, H, W)


# ------------------------- pure-JAX reference (f32) --------------------------

def reference_forward(params, x):
    B, C, H, W = x.shape
    hidden = params["w1"].shape[0]
    xr = jnp.transpose(x, (0, 2, 3, 1))
    h = xr @ params["w1"].reshape(hidden, C).T + params["b1"]
    hp = jnp.pad(h, ((0, 0), (1, 1), (1, 1), (0, 0)))
    w9 = params["dw_w"].reshape(hidden, 9)
    dw = jnp.zeros_like(h)
    for kh in range(3):
        for kw in range(3):
            dw = dw + hp[:, kh:kh + H, kw:kw + W, :] * w9[:, kh * 3 + kw]
    dw = dw + params["dw_b"]
    g = dw @ params["pw_w"].reshape(hidden, hidden).T + params["pw_b"]
    g = jax.nn.gelu(g, approximate=False)
    y = g @ params["w2"].reshape(C, hidden).T + params["b2"]
    return jnp.transpose(y, (0, 3, 1, 2))


# ---------------------------------- main -------------------------------------

if __name__ == "__main__":
    B, dim, H, W = 2, 4, 16, 16
    expansion_factor = 8
    hidden = dim * expansion_factor   # 32

    key = jax.random.PRNGKey(0)
    ks = jax.random.split(key, 9)

    def winit(k, shape, fan_in):
        return jax.random.normal(k, shape, jnp.float32) / jnp.sqrt(fan_in)

    params = {
        "w1": winit(ks[0], (hidden, dim, 1, 1), dim),              # Conv2d(dim, hidden, 1)
        "b1": 0.02 * jax.random.normal(ks[1], (hidden,), jnp.float32),
        "dw_w": winit(ks[2], (hidden, 1, 3, 3), 9),                # depthwise 3x3
        "dw_b": 0.02 * jax.random.normal(ks[3], (hidden,), jnp.float32),
        "pw_w": winit(ks[4], (hidden, hidden, 1, 1), hidden),      # pointwise 1x1
        "pw_b": 0.02 * jax.random.normal(ks[5], (hidden,), jnp.float32),
        "w2": winit(ks[6], (dim, hidden, 1, 1), hidden),           # Conv2d(hidden, dim, 1)
        "b2": 0.02 * jax.random.normal(ks[7], (dim,), jnp.float32),
    }
    x = jax.random.normal(ks[8], (B, dim, H, W), jnp.float32)

    fwd = jax.jit(mix_feed_forward)
    out = jax.block_until_ready(fwd(params, x))
    assert out.shape == (B, dim, H, W), out.shape
    assert bool(jnp.isfinite(out).all())

    ref = reference_forward(params, x)
    max_err = float(jnp.max(jnp.abs(out - ref)))
    # bf16 MXU operands with f32 accumulation -> loose tolerance vs f32 reference
    assert max_err < 0.2, max_err
    print("KERNEL_OK")
</pallas_src>

<mosaic_0001>
module attributes {stable_mosaic.version = 11 : i64} {
  func.func @_fused_kernel(%arg0: i32, %arg1: memref<1x256x4xf32, #tpu.memory_space<vmem>>, %arg2: memref<32x4xbf16, #tpu.memory_space<vmem>>, %arg3: memref<1x32xf32, #tpu.memory_space<vmem>>, %arg4: memref<9x32xf32, #tpu.memory_space<vmem>>, %arg5: memref<1x32xf32, #tpu.memory_space<vmem>>, %arg6: memref<32x32xbf16, #tpu.memory_space<vmem>>, %arg7: memref<1x32xf32, #tpu.memory_space<vmem>>, %arg8: memref<4x32xbf16, #tpu.memory_space<vmem>>, %arg9: memref<4x1xf32, #tpu.memory_space<vmem>>, %arg10: memref<1x4x256xf32, #tpu.memory_space<vmem>>, %arg11: memref<296x32xf32, #tpu.memory_space<vmem>>) attributes {dimension_semantics = [#tpu.dimension_semantics<parallel>], iteration_bounds = array<i64: 2>, scalar_prefetch = 0 : i64, scratch_operands = 1 : i64, tpu.core_type = #tpu.core_type<tc>, window_params = [{transform_indices = @transform_0, window_bounds = array<i64: 1, 256, 4>}, {pipeline_mode = #tpu.pipeline_mode<synchronous>, transform_indices = @transform_1, window_bounds = array<i64: 32, 4>}, {pipeline_mode = #tpu.pipeline_mode<synchronous>, transform_indices = @transform_2, window_bounds = array<i64: 1, 32>}, {pipeline_mode = #tpu.pipeline_mode<synchronous>, transform_indices = @transform_3, window_bounds = array<i64: 9, 32>}, {pipeline_mode = #tpu.pipeline_mode<synchronous>, transform_indices = @transform_4, window_bounds = array<i64: 1, 32>}, {pipeline_mode = #tpu.pipeline_mode<synchronous>, transform_indices = @transform_5, window_bounds = array<i64: 32, 32>}, {pipeline_mode = #tpu.pipeline_mode<synchronous>, transform_indices = @transform_6, window_bounds = array<i64: 1, 32>}, {pipeline_mode = #tpu.pipeline_mode<synchronous>, transform_indices = @transform_7, window_bounds = array<i64: 4, 32>}, {pipeline_mode = #tpu.pipeline_mode<synchronous>, transform_indices = @transform_8, window_bounds = array<i64: 4, 1>}, {transform_indices = @transform_9, window_bounds = array<i64: 1, 4, 256>}]} {
    %c0 = arith.constant 0 : index
    %c0_0 = arith.constant 0 : index
    %c0_1 = arith.constant 0 : index
    %0 = vector.load %arg1[%c0, %c0_0, %c0_1] : memref<1x256x4xf32, #tpu.memory_space<vmem>>, vector<1x256x4xf32>
    %1 = vector.shape_cast %0 : vector<1x256x4xf32> to vector<256x4xf32>
    %2 = arith.truncf %1 : vector<256x4xf32> to vector<256x4xbf16>
    %c0_2 = arith.constant 0 : index
    %c0_3 = arith.constant 0 : index
    %3 = vector.load %arg2[%c0_2, %c0_3] : memref<32x4xbf16, #tpu.memory_space<vmem>>, vector<32x4xbf16>
    %cst = arith.constant dense<0.000000e+00> : vector<256x32xf32>
    %4 = tpu.matmul %2, %3, %cst {dimension_numbers = #tpu.dot_dimension_numbers<[1], [1], [0], [0], [0, 0, 1, 0], [], []>} : vector<256x4xbf16>, vector<32x4xbf16>, vector<256x32xf32> -> vector<256x32xf32>
    %c0_4 = arith.constant 0 : index
    %c0_5 = arith.constant 0 : index
    %5 = vector.load %arg3[%c0_4, %c0_5] : memref<1x32xf32, #tpu.memory_space<vmem>>, vector<1x32xf32>
    %6 = vector.broadcast %5 : vector<1x32xf32> to vector<256x32xf32>
    %7 = arith.addf %4, %6 : vector<256x32xf32>
    %cst_6 = arith.constant 0.000000e+00 : f32
    %8 = vector.broadcast %cst_6 : f32 to vector<296x32xf32>
    %c0_7 = arith.constant 0 : index
    %c0_8 = arith.constant 0 : index
    %9 = vector.load %arg11[%c0_7, %c0_8] : memref<296x32xf32, #tpu.memory_space<vmem>>, vector<296x32xf32>
    tpu.vector_store %arg11[%c0_7, %c0_8], %8 {strides = array<i32>} : memref<296x32xf32, #tpu.memory_space<vmem>>, vector<296x32xf32>,
    %c17 = arith.constant 17 : index
    %c0_9 = arith.constant 0 : index
    %10 = vector.load %arg11[%c17, %c0_9] : memref<296x32xf32, #tpu.memory_space<vmem>>, vector<256x32xf32>
    tpu.vector_store %arg11[%c17, %c0_9], %7 {strides = array<i32>} : memref<296x32xf32, #tpu.memory_space<vmem>>, vector<256x32xf32>,
    %c0_10 = arith.constant 0 : index
    %c0_11 = arith.constant 0 : index
    %11 = vector.load %arg4[%c0_10, %c0_11] : memref<9x32xf32, #tpu.memory_space<vmem>>, vector<9x32xf32>
    %12 = tpu.iota {dimensions = array<i32: 0>} : vector<256x1xi32>
    %c16_i32 = arith.constant 16 : i32
    %c0_i32 = arith.constant 0 : i32
    %13 = arith.cmpi eq, %c16_i32, %c0_i32 : i32
    %c1_i32 = arith.constant 1 : i32
    %14 = arith.select %13, %c1_i32, %c16_i32 : i32
    %15 = vector.broadcast %14 : i32 to vector<256x1xi32>
    %16 = arith.remsi %12, %15 : vector<256x1xi32>
    %c0_i32_12 = arith.constant 0 : i32
    %17 = vector.broadcast %c0_i32_12 : i32 to vector<256x1xi32>
    %18 = arith.cmpi ne, %16, %17 : vector<256x1xi32>
    %c0_i32_13 = arith.constant 0 : i32
    %19 = vector.broadcast %c0_i32_13 : i32 to vector<256x1xi32>
    %20 = arith.cmpi slt, %16, %19 : vector<256x1xi32>
    %c0_i32_14 = arith.constant 0 : i32
    %21 = arith.cmpi slt, %14, %c0_i32_14 : i32
    %22 = vector.broadcast %21 : i1 to vector<256x1xi1>
    %23 = vector.broadcast %22 : vector<256x1xi1> to vector<256x1xi1>
    %24 = arith.xori %20, %23 : vector<256x1xi1>
    %25 = arith.andi %24, %18 : vector<256x1xi1>
    %26 = vector.broadcast %14 : i32 to vector<256x1xi32>
    %27 = arith.addi %16, %26 : vector<256x1xi32>
    %28 = arith.select %25, %27, %16 : vector<256x1xi1>, vector<256x1xi32>
    %c1_i32_15 = arith.constant 1 : i32
    %29 = vector.broadcast %c1_i32_15 : i32 to vector<256x1xi32>
    %30 = arith.cmpi sge, %28, %29 : vector<256x1xi32>
    %31 = arith.extui %30 : vector<256x1xi1> to vector<256x1xi32>
    %32 = arith.sitofp %31 : vector<256x1xi32> to vector<256x1xf32>
    %c14_i32 = arith.constant 14 : i32
    %33 = vector.broadcast %c14_i32 : i32 to vector<256x1xi32>
    %34 = arith.cmpi sle, %28, %33 : vector<256x1xi32>
    %35 = arith.extui %34 : vector<256x1xi1> to vector<256x1xi32>
    %36 = arith.sitofp %35 : vector<256x1xi32> to vector<256x1xf32>
    %cst_16 = arith.constant 0.000000e+00 : f32
    %37 = vector.broadcast %cst_16 : f32 to vector<256x32xf32>
    %c0_17 = arith.constant 0 : index
    %c0_18 = arith.constant 0 : index
    %38 = vector.load %arg11[%c0_17, %c0_18] : memref<296x32xf32, #tpu.memory_space<vmem>>, vector<256x32xf32>
    %39 = vector.broadcast %32 : vector<256x1xf32> to vector<256x32xf32>
    %40 = arith.mulf %38, %39 : vector<256x32xf32>
    %41 = vector.extract_strided_slice %11 {offsets = [0, 0], sizes = [1, 32], strides = [1, 1]} : vector<9x32xf32> to vector<1x32xf32>
    %42 = vector.broadcast %41 : vector<1x32xf32> to vector<256x32xf32>
    %43 = arith.mulf %40, %42 : vector<256x32xf32>
    %44 = arith.addf %37, %43 : vector<256x32xf32>
    %c1 = arith.constant 1 : index
    %c0_19 = arith.constant 0 : index
    %45 = vector.load %arg11[%c1, %c0_19] : memref<296x32xf32, #tpu.memory_space<vmem>>, vector<256x32xf32>
    %46 = vector.extract_strided_slice %11 {offsets = [1, 0], sizes = [1, 32], strides = [1, 1]} : vector<9x32xf32> to vector<1x32xf32>
    %47 = vector.broadcast %46 : vector<1x32xf32> to vector<256x32xf32>
    %48 = arith.mulf %45, %47 : vector<256x32xf32>
    %49 = arith.addf %44, %48 : vector<256x32xf32>
    %c2 = arith.constant 2 : index
    %c0_20 = arith.constant 0 : index
    %50 = vector.load %arg11[%c2, %c0_20] : memref<296x32xf32, #tpu.memory_space<vmem>>, vector<256x32xf32>
    %51 = vector.broadcast %36 : vector<256x1xf32> to vector<256x32xf32>
    %52 = arith.mulf %50, %51 : vector<256x32xf32>
    %53 = vector.extract_strided_slice %11 {offsets = [2, 0], sizes = [1, 32], strides = [1, 1]} : vector<9x32xf32> to vector<1x32xf32>
    %54 = vector.broadcast %53 : vector<1x32xf32> to vector<256x32xf32>
    %55 = arith.mulf %52, %54 : vector<256x32xf32>
    %56 = arith.addf %49, %55 : vector<256x32xf32>
    %c16 = arith.constant 16 : index
    %c0_21 = arith.constant 0 : index
    %57 = vector.load %arg11[%c16, %c0_21] : memref<296x32xf32, #tpu.memory_space<vmem>>, vector<256x32xf32>
    %58 = vector.broadcast %32 : vector<256x1xf32> to vector<256x32xf32>
    %59 = arith.mulf %57, %58 : vector<256x32xf32>
    %60 = vector.extract_strided_slice %11 {offsets = [3, 0], sizes = [1, 32], strides = [1, 1]} : vector<9x32xf32> to vector<1x32xf32>
    %61 = vector.broadcast %60 : vector<1x32xf32> to vector<256x32xf32>
    %62 = arith.mulf %59, %61 : vector<256x32xf32>
    %63 = arith.addf %56, %62 : vector<256x32xf32>
    %c17_22 = arith.constant 17 : index
    %c0_23 = arith.constant 0 : index
    %64 = vector.load %arg11[%c17_22, %c0_23] : memref<296x32xf32, #tpu.memory_space<vmem>>, vector<256x32xf32>
    %65 = vector.extract_strided_slice %11 {offsets = [4, 0], sizes = [1, 32], strides = [1, 1]} : vector<9x32xf32> to vector<1x32xf32>
    %66 = vector.broadcast %65 : vector<1x32xf32> to vector<256x32xf32>
    %67 = arith.mulf %64, %66 : vector<256x32xf32>
    %68 = arith.addf %63, %67 : vector<256x32xf32>
    %c18 = arith.constant 18 : index
    %c0_24 = arith.constant 0 : index
    %69 = vector.load %arg11[%c18, %c0_24] : memref<296x32xf32, #tpu.memory_space<vmem>>, vector<256x32xf32>
    %70 = vector.broadcast %36 : vector<256x1xf32> to vector<256x32xf32>
    %71 = arith.mulf %69, %70 : vector<256x32xf32>
    %72 = vector.extract_strided_slice %11 {offsets = [5, 0], sizes = [1, 32], strides = [1, 1]} : vector<9x32xf32> to vector<1x32xf32>
    %73 = vector.broadcast %72 : vector<1x32xf32> to vector<256x32xf32>
    %74 = arith.mulf %71, %73 : vector<256x32xf32>
    %75 = arith.addf %68, %74 : vector<256x32xf32>
    %c32 = arith.constant 32 : index
    %c0_25 = arith.constant 0 : index
    %76 = vector.load %arg11[%c32, %c0_25] : memref<296x32xf32, #tpu.memory_space<vmem>>, vector<256x32xf32>
    %77 = vector.broadcast %32 : vector<256x1xf32> to vector<256x32xf32>
    %78 = arith.mulf %76, %77 : vector<256x32xf32>
    %79 = vector.extract_strided_slice %11 {offsets = [6, 0], sizes = [1, 32], strides = [1, 1]} : vector<9x32xf32> to vector<1x32xf32>
    %80 = vector.broadcast %79 : vector<1x32xf32> to vector<256x32xf32>
    %81 = arith.mulf %78, %80 : vector<256x32xf32>
    %82 = arith.addf %75, %81 : vector<256x32xf32>
    %c33 = arith.constant 33 : index
    %c0_26 = arith.constant 0 : index
    %83 = vector.load %arg11[%c33, %c0_26] : memref<296x32xf32, #tpu.memory_space<vmem>>, vector<256x32xf32>
    %84 = vector.extract_strided_slice %11 {offsets = [7, 0], sizes = [1, 32], strides = [1, 1]} : vector<9x32xf32> to vector<1x32xf32>
    %85 = vector.broadcast %84 : vector<1x32xf32> to vector<256x32xf32>
    %86 = arith.mulf %83, %85 : vector<256x32xf32>
    %87 = arith.addf %82, %86 : vector<256x32xf32>
    %c34 = arith.constant 34 : index
    %c0_27 = arith.constant 0 : index
    %88 = vector.load %arg11[%c34, %c0_27] : memref<296x32xf32, #tpu.memory_space<vmem>>, vector<256x32xf32>
    %89 = vector.broadcast %36 : vector<256x1xf32> to vector<256x32xf32>
    %90 = arith.mulf %88, %89 : vector<256x32xf32>
    %91 = vector.extract_strided_slice %11 {offsets = [8, 0], sizes = [1, 32], strides = [1, 1]} : vector<9x32xf32> to vector<1x32xf32>
    %92 = vector.broadcast %91 : vector<1x32xf32> to vector<256x32xf32>
    %93 = arith.mulf %90, %92 : vector<256x32xf32>
    %94 = arith.addf %87, %93 : vector<256x32xf32>
    %c0_28 = arith.constant 0 : index
    %c0_29 = arith.constant 0 : index
    %95 = vector.load %arg5[%c0_28, %c0_29] : memref<1x32xf32, #tpu.memory_space<vmem>>, vector<1x32xf32>
    %96 = vector.broadcast %95 : vector<1x32xf32> to vector<256x32xf32>
    %97 = arith.addf %94, %96 : vector<256x32xf32>
    %98 = arith.truncf %97 : vector<256x32xf32> to vector<256x32xbf16>
    %c0_30 = arith.constant 0 : index
    %c0_31 = arith.constant 0 : index
    %99 = vector.load %arg6[%c0_30, %c0_31] : memref<32x32xbf16, #tpu.memory_space<vmem>>, vector<32x32xbf16>
    %cst_32 = arith.constant dense<0.000000e+00> : vector<256x32xf32>
    %100 = tpu.matmul %98, %99, %cst_32 {dimension_numbers = #tpu.dot_dimension_numbers<[1], [1], [0], [0], [0, 0, 1, 0], [], []>} : vector<256x32xbf16>, vector<32x32xbf16>, vector<256x32xf32> -> vector<256x32xf32>
    %c0_33 = arith.constant 0 : index
    %c0_34 = arith.constant 0 : index
    %101 = vector.load %arg7[%c0_33, %c0_34] : memref<1x32xf32, #tpu.memory_space<vmem>>, vector<1x32xf32>
    %102 = vector.broadcast %101 : vector<1x32xf32> to vector<256x32xf32>
    %103 = arith.addf %100, %102 : vector<256x32xf32>
    %cst_35 = arith.constant 0.707106769 : f32
    %104 = vector.broadcast %cst_35 : f32 to vector<256x32xf32>
    %105 = arith.mulf %103, %104 : vector<256x32xf32>
    %106 = math.absf %105 : vector<256x32xf32>
    %cst_36 = arith.constant 0.327591091 : f32
    %107 = vector.broadcast %cst_36 : f32 to vector<256x32xf32>
    %108 = arith.mulf %107, %106 : vector<256x32xf32>
    %cst_37 = arith.constant 1.000000e+00 : f32
    %109 = vector.broadcast %cst_37 : f32 to vector<256x32xf32>
    %110 = arith.addf %109, %108 : vector<256x32xf32>
    %111 = tpu.reciprocal %110 {approx = true} : vector<256x32xf32> -> vector<256x32xf32>
    %cst_38 = arith.constant 1.06140542 : f32
    %112 = vector.broadcast %cst_38 : f32 to vector<256x32xf32>
    %113 = arith.mulf %111, %112 : vector<256x32xf32>
    %cst_39 = arith.constant -1.45315206 : f32
    %114 = vector.broadcast %cst_39 : f32 to vector<256x32xf32>
    %115 = arith.addf %114, %113 : vector<256x32xf32>
    %116 = arith.mulf %111, %115 : vector<256x32xf32>
    %cst_40 = arith.constant 1.42141378 : f32
    %117 = vector.broadcast %cst_40 : f32 to vector<256x32xf32>
    %118 = arith.addf %117, %116 : vector<256x32xf32>
    %119 = arith.mulf %111, %118 : vector<256x32xf32>
    %cst_41 = arith.constant -0.284496725 : f32
    %120 = vector.broadcast %cst_41 : f32 to vector<256x32xf32>
    %121 = arith.addf %120, %119 : vector<256x32xf32>
    %122 = arith.mulf %111, %121 : vector<256x32xf32>
    %cst_42 = arith.constant 0.254829586 : f32
    %123 = vector.broadcast %cst_42 : f32 to vector<256x32xf32>
    %124 = arith.addf %123, %122 : vector<256x32xf32>
    %125 = arith.mulf %111, %124 : vector<256x32xf32>
    %cst_43 = arith.constant 0.000000e+00 : f32
    %126 = vector.broadcast %cst_43 : f32 to vector<256x32xf32>
    %127 = arith.subf %126, %106 : vector<256x32xf32>
    %128 = arith.mulf %127, %106 : vector<256x32xf32>
    %129 = math.exp %128 : vector<256x32xf32>
    %130 = arith.mulf %125, %129 : vector<256x32xf32>
    %cst_44 = arith.constant 1.000000e+00 : f32
    %131 = vector.broadcast %cst_44 : f32 to vector<256x32xf32>
    %132 = arith.subf %131, %130 : vector<256x32xf32>
    %cst_45 = arith.constant 0.000000e+00 : f32
    %133 = vector.broadcast %cst_45 : f32 to vector<256x32xf32>
    %134 = arith.cmpf oge, %105, %133 : vector<256x32xf32>
    %cst_46 = arith.constant 0.000000e+00 : f32
    %135 = vector.broadcast %cst_46 : f32 to vector<256x32xf32>
    %136 = arith.subf %135, %132 : vector<256x32xf32>
    %137 = arith.select %134, %132, %136 : vector<256x32xi1>, vector<256x32xf32>
    %cst_47 = arith.constant 5.000000e-01 : f32
    %138 = vector.broadcast %cst_47 : f32 to vector<256x32xf32>
    %139 = arith.mulf %138, %103 : vector<256x32xf32>
    %cst_48 = arith.constant 1.000000e+00 : f32
    %140 = vector.broadcast %cst_48 : f32 to vector<256x32xf32>
    %141 = arith.addf %140, %137 : vector<256x32xf32>
    %142 = arith.mulf %139, %141 : vector<256x32xf32>
    %c0_49 = arith.constant 0 : index
    %c0_50 = arith.constant 0 : index
    %143 = vector.load %arg8[%c0_49, %c0_50] : memref<4x32xbf16, #tpu.memory_space<vmem>>, vector<4x32xbf16>
    %144 = arith.truncf %142 : vector<256x32xf32> to vector<256x32xbf16>
    %cst_51 = arith.constant dense<0.000000e+00> : vector<4x256xf32>
    %145 = tpu.matmul %143, %144, %cst_51 {dimension_numbers = #tpu.dot_dimension_numbers<[1], [1], [0], [0], [0, 0, 1, 0], [], []>} : vector<4x32xbf16>, vector<256x32xbf16>, vector<4x256xf32> -> vector<4x256xf32>
    %c0_52 = arith.constant 0 : index
    %c0_53 = arith.constant 0 : index
    %146 = vector.load %arg9[%c0_52, %c0_53] : memref<4x1xf32, #tpu.memory_space<vmem>>, vector<4x1xf32>
    %147 = vector.broadcast %146 : vector<4x1xf32> to vector<4x256xf32>
    %148 = arith.addf %145, %147 : vector<4x256xf32>
    %c0_54 = arith.constant 0 : index
    %c0_55 = arith.constant 0 : index
    %c0_56 = arith.constant 0 : index
    %149 = vector.load %arg10[%c0_54, %c0_55, %c0_56] : memref<1x4x256xf32, #tpu.memory_space<vmem>>, vector<1x4x256xf32>
    %150 = vector.shape_cast %149 : vector<1x4x256xf32> to vector<4x256xf32>
    %151 = vector.shape_cast %148 : vector<4x256xf32> to vector<1x4x256xf32>
    tpu.vector_store %arg10[%c0_54, %c0_55, %c0_56], %151 {strides = array<i32>} : memref<1x4x256xf32, #tpu.memory_space<vmem>>, vector<1x4x256xf32>,
    return
  }
  func.func @transform_0(%arg0: i32) -> (i32, i32, i32) {
    %c0_i32 = arith.constant 0 : i32
    %c0_i32_0 = arith.constant 0 : i32
    %c0_i32_1 = arith.constant 0 : i32
    return %arg0, %c0_i32, %c0_i32_0 : i32, i32, i32
  }
  func.func @transform_1(%arg0: i32) -> (i32, i32) {
    %c0_i32 = arith.constant 0 : i32
    %c0_i32_0 = arith.constant 0 : i32
    %c0_i32_1 = arith.constant 0 : i32
    return %c0_i32, %c0_i32_0 : i32, i32
  }
  func.func @transform_2(%arg0: i32) -> (i32, i32) {
    %c0_i32 = arith.constant 0 : i32
    %c0_i32_0 = arith.constant 0 : i32
    %c0_i32_1 = arith.constant 0 : i32
    return %c0_i32, %c0_i32_0 : i32, i32
  }
  func.func @transform_3(%arg0: i32) -> (i32, i32) {
    %c0_i32 = arith.constant 0 : i32
    %c0_i32_0 = arith.constant 0 : i32
    %c0_i32_1 = arith.constant 0 : i32
    return %c0_i32, %c0_i32_0 : i32, i32
  }
  func.func @transform_4(%arg0: i32) -> (i32, i32) {
    %c0_i32 = arith.constant 0 : i32
    %c0_i32_0 = arith.constant 0 : i32
    %c0_i32_1 = arith.constant 0 : i32
    return %c0_i32, %c0_i32_0 : i32, i32
  }
  func.func @transform_5(%arg0: i32) -> (i32, i32) {
    %c0_i32 = arith.constant 0 : i32
    %c0_i32_0 = arith.constant 0 : i32
    %c0_i32_1 = arith.constant 0 : i32
    return %c0_i32, %c0_i32_0 : i32, i32
  }
  func.func @transform_6(%arg0: i32) -> (i32, i32) {
    %c0_i32 = arith.constant 0 : i32
    %c0_i32_0 = arith.constant 0 : i32
    %c0_i32_1 = arith.constant 0 : i32
    return %c0_i32, %c0_i32_0 : i32, i32
  }
  func.func @transform_7(%arg0: i32) -> (i32, i32) {
    %c0_i32 = arith.constant 0 : i32
    %c0_i32_0 = arith.constant 0 : i32
    %c0_i32_1 = arith.constant 0 : i32
    return %c0_i32, %c0_i32_0 : i32, i32
  }
  func.func @transform_8(%arg0: i32) -> (i32, i32) {
    %c0_i32 = arith.constant 0 : i32
    %c0_i32_0 = arith.constant 0 : i32
    %c0_i32_1 = arith.constant 0 : i32
    return %c0_i32, %c0_i32_0 : i32, i32
  }
  func.func @transform_9(%arg0: i32) -> (i32, i32, i32) {
    %c0_i32 = arith.constant 0 : i32
    %c0_i32_0 = arith.constant 0 : i32
    %c0_i32_1 = arith.constant 0 : i32
    return %arg0, %c0_i32, %c0_i32_0 : i32, i32, i32
  }
}

</mosaic_0001>

<llo_original>
// kernel: mix_feed_forward.1
$region0: #{mix_feed_forward.1}
  #allocation0 [shape = 'u32[]', space=smem, size = 0x4, offset = 0x4, fixed_abs, tag = 'smem constant byte address 0x4 - core index']
  #allocation1 [shape = 'u32[72,128]{1,0:T(1,128)}', space=vmem, size = 0x9000, scoped, tag = 'internal scratch']
  #allocation2 [shape = 'f32[296,32]{1,0:T(8,128)}', space=vmem, size = 0x25000, scoped, tag = 'scratch operand']
  %s0 = inlined_call_operand.vmem [shape: f32[2,256,4], index: 0, kind: input, shape index: {}]
  %s1 = inlined_call_operand.vmem [shape: bf16[32,4], index: 1, kind: input, shape index: {}]
  %s2 = inlined_call_operand.vmem [shape: f32[1,32], index: 2, kind: input, shape index: {}]
  %s3 = inlined_call_operand.vmem [shape: f32[9,32], index: 3, kind: input, shape index: {}]
  %s4 = inlined_call_operand.vmem [shape: f32[1,32], index: 4, kind: input, shape index: {}]
  %s5 = inlined_call_operand.vmem [shape: bf16[32,32], index: 5, kind: input, shape index: {}]
  %s6 = inlined_call_operand.vmem [shape: f32[1,32], index: 6, kind: input, shape index: {}]
  %s7 = inlined_call_operand.vmem [shape: bf16[4,32], index: 7, kind: input, shape index: {}]
  %s8 = inlined_call_operand.vmem [shape: f32[4,1], index: 8, kind: input, shape index: {}]
  %s9 = inlined_call_operand.vmem [shape: f32[2,4,256], index: 9, kind: output, shape index: {}]
  %s10 = sld [smem:[#allocation0]]
  $region69: #{mix_feed_forward.1} parent=0
    _
  %s12 = ssub.s32 1, %s10
  %s13 = scalar_select 0, %s12, %s10
  loop: start=0, step=1, limit=4
  $region2: #{mix_feed_forward.1} parent=0 // loop_pre_header
    _
  $region3: #{mix_feed_forward.1} parent=0 // loop_header
    %s15 = sphi 0, %s19
    %p16 = scmp.ge.s32.totalorder %s15, 4
    %s25 = sphi 0, %s27
    %s28 = sphi 0, %s25
    %s29 = sphi 0, %s28
    %s45 = sphi 0, %s29
    %s49 = sphi 0, %s49
    %s51 = sphi 0, %s49
    %s52 = sphi 0, %s51
    %s66 = sphi 0, %s52
    %s70 = sphi 0, %s70
    %s72 = sphi 0, %s70
    %s73 = sphi 0, %s72
    %s87 = sphi 0, %s73
    %s91 = sphi 0, %s91
    %s93 = sphi 0, %s91
    %s94 = sphi 0, %s93
    %s108 = sphi 0, %s94
    %s112 = sphi 0, %s112
    %s114 = sphi 0, %s112
    %s115 = sphi 0, %s114
    %s129 = sphi 0, %s115
    %s133 = sphi 0, %s133
    %s135 = sphi 0, %s133
    %s136 = sphi 0, %s135
    %s150 = sphi 0, %s136
    %s154 = sphi 0, %s154
    %s156 = sphi 0, %s154
    %s157 = sphi 0, %s156
    %s171 = sphi 0, %s157
    %s175 = sphi 0, %s175
    %s177 = sphi 0, %s175
    %s178 = sphi 0, %s177
    %s192 = sphi 0, %s178
    %s196 = sphi 0, %s196
    %s198 = sphi 0, %s196
    %s199 = sphi 0, %s198
    %s213 = sphi 0, %s199
    %s219 = sphi 0, %s221
    %s222 = sphi 0, %s219
    %s223 = sphi 0, %s222
    %s239 = sphi 0, %s223
  $region4: #{mix_feed_forward.1} parent=0 // loop_header_branch
    %18 = sbr.rel (%p16) target = $region8
  $region5: #{mix_feed_forward.1} parent=0 // loop_body
    %s20 = ssub.s32 %s15, 1
    %s21 = ssub.s32 %s15, 2
    %s22 = sadd.s32 %s15, 1
    %s23 = ssub.s32 %s15, %s22
    %p24 = scmp.eq.s32.totalorder %s23, 0
    %s26 = sadd.s32 %s25, 1
    %s27 = scalar_select %p24, %s25, %s26
    %p30 = pneg %p24
    %p31 = scmp.eq.s32.totalorder %s15, 1
    %p32 = por %p30, %p31
    %p33 = scmp.ne.s32.totalorder %s25, %s28
    %p34 = scmp.eq.s32.totalorder %s15, 0
    %p35 = por %p33, %p34
    %p36 = scmp.ne.s32.totalorder %s25, %s28
    %p37 = scmp.eq.s32.totalorder %s20, 1
    %p38 = por %p36, %p37
    %p39 = scmp.ne.s32.totalorder %s28, %s29
    %p40 = scmp.eq.s32.totalorder %s20, 0
    %p41 = por %p39, %p40
    %p42 = scmp.ne.s32.totalorder %s28, %s29
    %p43 = scmp.eq.s32.totalorder %s21, 1
    %p44 = por %p42, %p43
    %p46 = scmp.ne.s32.totalorder %s29, %s45
    %p47 = scmp.eq.s32.totalorder %s21, 0
    %p48 = por %p46, %p47
    %s50 = sadd.s32 %s49, 1
    %p53 = scmp.eq.s32.totalorder %s15, 1
    %p54 = scmp.ne.s32.totalorder %s49, %s51
    %p55 = scmp.eq.s32.totalorder %s15, 0
    %p56 = por %p54, %p55
    %p57 = scmp.ne.s32.totalorder %s49, %s51
    %p58 = scmp.eq.s32.totalorder %s20, 1
    %p59 = por %p57, %p58
    %p60 = scmp.ne.s32.totalorder %s51, %s52
    %p61 = scmp.eq.s32.totalorder %s20, 0
    %p62 = por %p60, %p61
    %p63 = scmp.ne.s32.totalorder %s51, %s52
    %p64 = scmp.eq.s32.totalorder %s21, 1
    %p65 = por %p63, %p64
    %p67 = scmp.ne.s32.totalorder %s52, %s66
    %p68 = scmp.eq.s32.totalorder %s21, 0
    %p69 = por %p67, %p68
    %s71 = sadd.s32 %s70, 1
    %p74 = scmp.eq.s32.totalorder %s15, 1
    %p75 = scmp.ne.s32.totalorder %s70, %s72
    %p76 = scmp.eq.s32.totalorder %s15, 0
    %p77 = por %p75, %p76
    %p78 = scmp.ne.s32.totalorder %s70, %s72
    %p79 = scmp.eq.s32.totalorder %s20, 1
    %p80 = por %p78, %p79
    %p81 = scmp.ne.s32.totalorder %s72, %s73
    %p82 = scmp.eq.s32.totalorder %s20, 0
    %p83 = por %p81, %p82
    %p84 = scmp.ne.s32.totalorder %s72, %s73
    %p85 = scmp.eq.s32.totalorder %s21, 1
    %p86 = por %p84, %p85
    %p88 = scmp.ne.s32.totalorder %s73, %s87
    %p89 = scmp.eq.s32.totalorder %s21, 0
    %p90 = por %p88, %p89
    %s92 = sadd.s32 %s91, 1
    %p95 = scmp.eq.s32.totalorder %s15, 1
    %p96 = scmp.ne.s32.totalorder %s91, %s93
    %p97 = scmp.eq.s32.totalorder %s15, 0
    %p98 = por %p96, %p97
    %p99 = scmp.ne.s32.totalorder %s91, %s93
    %p100 = scmp.eq.s32.totalorder %s20, 1
    %p101 = por %p99, %p100
    %p102 = scmp.ne.s32.totalorder %s93, %s94
    %p103 = scmp.eq.s32.totalorder %s20, 0
    %p104 = por %p102, %p103
    %p105 = scmp.ne.s32.totalorder %s93, %s94
    %p106 = scmp.eq.s32.totalorder %s21, 1
    %p107 = por %p105, %p106
    %p109 = scmp.ne.s32.totalorder %s94, %s108
    %p110 = scmp.eq.s32.totalorder %s21, 0
    %p111 = por %p109, %p110
    %s113 = sadd.s32 %s112, 1
    %p116 = scmp.eq.s32.totalorder %s15, 1
    %p117 = scmp.ne.s32.totalorder %s112, %s114
    %p118 = scmp.eq.s32.totalorder %s15, 0
    %p119 = por %p117, %p118
    %p120 = scmp.ne.s32.totalorder %s112, %s114
    %p121 = scmp.eq.s32.totalorder %s20, 1
    %p122 = por %p120, %p121
    %p123 = scmp.ne.s32.totalorder %s114, %s115
    %p124 = scmp.eq.s32.totalorder %s20, 0
    %p125 = por %p123, %p124
    %p126 = scmp.ne.s32.totalorder %s114, %s115
    %p127 = scmp.eq.s32.totalorder %s21, 1
    %p128 = por %p126, %p127
    %p130 = scmp.ne.s32.totalorder %s115, %s129
    %p131 = scmp.eq.s32.totalorder %s21, 0
    %p132 = por %p130, %p131
    %s134 = sadd.s32 %s133, 1
    %p137 = scmp.eq.s32.totalorder %s15, 1
    %p138 = scmp.ne.s32.totalorder %s133, %s135
    %p139 = scmp.eq.s32.totalorder %s15, 0
    %p140 = por %p138, %p139
    %p141 = scmp.ne.s32.totalorder %s133, %s135
    %p142 = scmp.eq.s32.totalorder %s20, 1
    %p143 = por %p141, %p142
    %p144 = scmp.ne.s32.totalorder %s135, %s136
    %p145 = scmp.eq.s32.totalorder %s20, 0
    %p146 = por %p144, %p145
    %p147 = scmp.ne.s32.totalorder %s135, %s136
    %p148 = scmp.eq.s32.totalorder %s21, 1
    %p149 = por %p147, %p148
    %p151 = scmp.ne.s32.totalorder %s136, %s150
    %p152 = scmp.eq.s32.totalorder %s21, 0
    %p153 = por %p151, %p152
    %s155 = sadd.s32 %s154, 1
    %p158 = scmp.eq.s32.totalorder %s15, 1
    %p159 = scmp.ne.s32.totalorder %s154, %s156
    %p160 = scmp.eq.s32.totalorder %s15, 0
    %p161 = por %p159, %p160
    %p162 = scmp.ne.s32.totalorder %s154, %s156
    %p163 = scmp.eq.s32.totalorder %s20, 1
    %p164 = por %p162, %p163
    %p165 = scmp.ne.s32.totalorder %s156, %s157
    %p166 = scmp.eq.s32.totalorder %s20, 0
    %p167 = por %p165, %p166
    %p168 = scmp.ne.s32.totalorder %s156, %s157
    %p169 = scmp.eq.s32.totalorder %s21, 1
    %p170 = por %p168, %p169
    %p172 = scmp.ne.s32.totalorder %s157, %s171
    %p173 = scmp.eq.s32.totalorder %s21, 0
    %p174 = por %p172, %p173
    %s176 = sadd.s32 %s175, 1
    %p179 = scmp.eq.s32.totalorder %s15, 1
    %p180 = scmp.ne.s32.totalorder %s175, %s177
    %p181 = scmp.eq.s32.totalorder %s15, 0
    %p182 = por %p180, %p181
    %p183 = scmp.ne.s32.totalorder %s175, %s177
    %p184 = scmp.eq.s32.totalorder %s20, 1
    %p185 = por %p183, %p184
    %p186 = scmp.ne.s32.totalorder %s177, %s178
    %p187 = scmp.eq.s32.totalorder %s20, 0
    %p188 = por %p186, %p187
    %p189 = scmp.ne.s32.totalorder %s177, %s178
    %p190 = scmp.eq.s32.totalorder %s21, 1
    %p191 = por %p189, %p190
    %p193 = scmp.ne.s32.totalorder %s178, %s192
    %p194 = scmp.eq.s32.totalorder %s21, 0
    %p195 = por %p193, %p194
    %s197 = sadd.s32 %s196, 1
    %p200 = scmp.eq.s32.totalorder %s15, 1
    %p201 = scmp.ne.s32.totalorder %s196, %s198
    %p202 = scmp.eq.s32.totalorder %s15, 0
    %p203 = por %p201, %p202
    %p204 = scmp.ne.s32.totalorder %s196, %s198
    %p205 = scmp.eq.s32.totalorder %s20, 1
    %p206 = por %p204, %p205
    %p207 = scmp.ne.s32.totalorder %s198, %s199
    %p208 = scmp.eq.s32.totalorder %s20, 0
    %p209 = por %p207, %p208
    %p210 = scmp.ne.s32.totalorder %s198, %s199
    %p211 = scmp.eq.s32.totalorder %s21, 1
    %p212 = por %p210, %p211
    %p214 = scmp.ne.s32.totalorder %s199, %s213
    %p215 = scmp.eq.s32.totalorder %s21, 0
    %p216 = por %p214, %p215
    %s217 = ssub.s32 %s15, %s22
    %p218 = scmp.eq.s32.totalorder %s217, 0
    %s220 = sadd.s32 %s219, 1
    %s221 = scalar_select %p218, %s219, %s220
    %p224 = pneg %p218
    %p225 = scmp.eq.s32.totalorder %s15, 1
    %p226 = por %p224, %p225
    %p227 = scmp.ne.s32.totalorder %s219, %s222
    %p228 = scmp.eq.s32.totalorder %s15, 0
    %p229 = por %p227, %p228
    %p230 = scmp.ne.s32.totalorder %s219, %s222
    %p231 = scmp.eq.s32.totalorder %s20, 1
    %p232 = por %p230, %p231
    %p233 = scmp.ne.s32.totalorder %s222, %s223
    %p234 = scmp.eq.s32.totalorder %s20, 0
    %p235 = por %p233, %p234
    %p236 = scmp.ne.s32.totalorder %s222, %s223
    %p237 = scmp.eq.s32.totalorder %s21, 1
    %p238 = por %p236, %p237
    %p240 = scmp.ne.s32.totalorder %s223, %s239
    %p241 = scmp.eq.s32.totalorder %s21, 0
    %p242 = por %p240, %p241
    %p243 = scmp.le.s32.totalorder 1, %s15
    %p244 = scmp.lt.s32.totalorder %s15, 3
    %p245 = pnand %p243, %p244
    %p246 = pneg %p245
    // Predicated region
    $region9: #{mix_feed_forward.1} parent=5 // pred_check
      _
    $region10: #{mix_feed_forward.1} parent=5 // pred_check_branch
      %248 = sbr.rel (%p245) target = $region12
    $region11: #{mix_feed_forward.1} parent=5 // pred_region
      %s249 = ssub.s32 %s15, 1
      // Predicated region
      $region13: #{mix_feed_forward.1} parent=11 // pred_check
        %p250 = pneg %p62
      $region14: #{mix_feed_forward.1} parent=11 // pred_check_branch
        %252 = sbr.rel (%p250) target = $region16
      $region15: #{mix_feed_forward.1} parent=11 // pred_region
        _
      $region16: #{mix_feed_forward.1} parent=11 // pred_fallthru
        _
      // Predicated region
      $region17: #{mix_feed_forward.1} parent=11 // pred_check
        %p253 = pneg %p83
      $region18: #{mix_feed_forward.1} parent=11 // pred_check_branch
        %255 = sbr.rel (%p253) target = $region20
      $region19: #{mix_feed_forward.1} parent=11 // pred_region
        _
      $region20: #{mix_feed_forward.1} parent=11 // pred_fallthru
        _
      // Predicated region
      $region21: #{mix_feed_forward.1} parent=11 // pred_check
        %p256 = pneg %p104
      $region22: #{mix_feed_forward.1} parent=11 // pred_check_branch
        %258 = sbr.rel (%p256) target = $region24
      $region23: #{mix_feed_forward.1} parent=11 // pred_region
        _
      $region24: #{mix_feed_forward.1} parent=11 // pred_fallthru
        _
      // Predicated region
      $region25: #{mix_feed_forward.1} parent=11 // pred_check
        %p259 = pneg %p125
      $region26: #{mix_feed_forward.1} parent=11 // pred_check_branch
        %261 = sbr.rel (%p259) target = $region28
      $region27: #{mix_feed_forward.1} parent=11 // pred_region
        _
      $region28: #{mix_feed_forward.1} parent=11 // pred_fallthru
        _
      // Predicated region
      $region29: #{mix_feed_forward.1} parent=11 // pred_check
        %p262 = pneg %p146
      $region30: #{mix_feed_forward.1} parent=11 // pred_check_branch
        %264 = sbr.rel (%p262) target = $region32
      $region31: #{mix_feed_forward.1} parent=11 // pred_region
        _
      $region32: #{mix_feed_forward.1} parent=11 // pred_fallthru
        _
      // Predicated region
      $region33: #{mix_feed_forward.1} parent=11 // pred_check
        %p265 = pneg %p167
      $region34: #{mix_feed_forward.1} parent=11 // pred_check_branch
        %267 = sbr.rel (%p265) target = $region36
      $region35: #{mix_feed_forward.1} parent=11 // pred_region
        _
      $region36: #{mix_feed_forward.1} parent=11 // pred_fallthru
        _
      // Predicated region
      $region37: #{mix_feed_forward.1} parent=11 // pred_check
        %p268 = pneg %p188
      $region38: #{mix_feed_forward.1} parent=11 // pred_check_branch
        %270 = sbr.rel (%p268) target = $region40
      $region39: #{mix_feed_forward.1} parent=11 // pred_region
        _
      $region40: #{mix_feed_forward.1} parent=11 // pred_fallthru
        _
      // Predicated region
      $region41: #{mix_feed_forward.1} parent=11 // pred_check
        %p271 = pneg %p209
      $region42: #{mix_feed_forward.1} parent=11 // pred_check_branch
        %273 = sbr.rel (%p271) target = $region44
      $region43: #{mix_feed_forward.1} parent=11 // pred_region
        _
      $region44: #{mix_feed_forward.1} parent=11 // pred_fallthru
        _
    $region12: #{mix_feed_forward.1} parent=5 // pred_fallthru
      _
    %p274 = scmp.lt.s32.totalorder %s15, 2
    // Predicated region
    $region45: #{mix_feed_forward.1} parent=5 // pred_check
      %p275 = pneg %p274
    $region46: #{mix_feed_forward.1} parent=5 // pred_check_branch
      %277 = sbr.rel (%p275) target = $region48
    $region47: #{mix_feed_forward.1} parent=5 // pred_region
      // Predicated region
      $region49: #{mix_feed_forward.1} parent=47 // pred_check
        %p278 = pneg %p35
      $region50: #{mix_feed_forward.1} parent=47 // pred_check_branch
        %280 = sbr.rel (%p278) target = $region52
      $region51: #{mix_feed_forward.1} parent=47 // pred_region
        %p281 = scmp.lt.s32.totalorder %s15, 1
        %s282 = scalar_select %p281, %s15, 1
        %s283 = smul.addr %s282, 32
        %s284 = smul.addr %s283, 8
        %s285 = scalar_lea.vmem %s0, %s284
      $region52: #{mix_feed_forward.1} parent=47 // pred_fallthru
        _
    $region48: #{mix_feed_forward.1} parent=5 // pred_fallthru
      _
    %p286 = scmp.le.s32.totalorder 1, %s15
    %p287 = scmp.lt.s32.totalorder %s15, 3
    %p288 = pnand %p286, %p287
    %p289 = pneg %p288
    // Predicated region
    $region53: #{mix_feed_forward.1} parent=5 // pred_check
      _
    $region54: #{mix_feed_forward.1} parent=5 // pred_check_branch
      %291 = sbr.rel (%p288) target = $region56
    $region55: #{mix_feed_forward.1} parent=5 // pred_region
      %s292 = ssub.s32 %s15, 1
      %p293 = scmp.lt.s32.totalorder %s20, 1
      %s294 = scalar_select %p293, %s20, 1
      %s295 = smul.addr %s294, 32
      %s296 = smul.addr %s295, 8
      %s297 = scalar_lea.vmem %s0, %s296
      %p298 = pneg %p41
      %p299 = pneg %p38
      %p300 = pneg %p62
      %p301 = pneg %p59
      %p302 = pneg %p83
      %p303 = pneg %p80
      %p304 = pneg %p104
      %p305 = pneg %p101
      %p306 = pneg %p125
      %p307 = pneg %p122
      %p308 = pneg %p146
      %p309 = pneg %p143
      %p310 = pneg %p167
      %p311 = pneg %p164
      %p312 = pneg %p188
      %p313 = pneg %p185
      %p314 = pneg %p209
      %p315 = pneg %p206
      %p316 = pneg %p235
      %p317 = pneg %p232
      %p318 = scmp.lt.s32.totalorder %s20, 1
      %s319 = scalar_select %p318, %s20, 1
      %s320 = smul.addr %s319, 2
      %s321 = smul.addr %s320, 4
      %s322 = scalar_lea.vmem %s9, %s321
      %p323 = scmp.lt.s32.totalorder %s20, 1
      %s324 = scalar_select %p323, %s20, 1
      %s325 = smul.addr %s324, 32
      %s326 = smul.addr %s325, 8
      %s327 = scalar_lea.vmem %s0, %s326
      %p328 = scmp.lt.s32.totalorder %s20, 1
      %s329 = scalar_select %p328, %s20, 1
      %s330 = smul.addr %s329, 2
      %s331 = smul.addr %s330, 4
      %s332 = scalar_lea.vmem %s9, %s331
      %v334 = vld [vmem:[%s327] sm:$0xff]
      %v335 = vld [vmem:[%s327 + $0x8] sm:$0xff]
      %v336 = vld [vmem:[%s327 + $0x10] sm:$0xff]
      %v337 = vld [vmem:[%s327 + $0x18] sm:$0xff]
      %v338 = vld [vmem:[%s327 + $0x20] sm:$0xff]
      %v339 = vld [vmem:[%s327 + $0x28] sm:$0xff]
      %v340 = vld [vmem:[%s327 + $0x30] sm:$0xff]
      %v341 = vld [vmem:[%s327 + $0x38] sm:$0xff]
      %v342 = vld [vmem:[%s327 + $0x40] sm:$0xff]
      %v343 = vld [vmem:[%s327 + $0x48] sm:$0xff]
      %v344 = vld [vmem:[%s327 + $0x50] sm:$0xff]
      %v345 = vld [vmem:[%s327 + $0x58] sm:$0xff]
      %v346 = vld [vmem:[%s327 + $0x60] sm:$0xff]
      %v347 = vld [vmem:[%s327 + $0x68] sm:$0xff]
      %v348 = vld [vmem:[%s327 + $0x70] sm:$0xff]
      %v349 = vld [vmem:[%s327 + $0x78] sm:$0xff]
      %v350 = vld [vmem:[%s327 + $0x80] sm:$0xff]
      %v351 = vld [vmem:[%s327 + $0x88] sm:$0xff]
      %v352 = vld [vmem:[%s327 + $0x90] sm:$0xff]
      %v353 = vld [vmem:[%s327 + $0x98] sm:$0xff]
      %v354 = vld [vmem:[%s327 + $0xa0] sm:$0xff]
      %v355 = vld [vmem:[%s327 + $0xa8] sm:$0xff]
      %v356 = vld [vmem:[%s327 + $0xb0] sm:$0xff]
      %v357 = vld [vmem:[%s327 + $0xb8] sm:$0xff]
      %v358 = vld [vmem:[%s327 + $0xc0] sm:$0xff]
      %v359 = vld [vmem:[%s327 + $0xc8] sm:$0xff]
      %v360 = vld [vmem:[%s327 + $0xd0] sm:$0xff]
      %v361 = vld [vmem:[%s327 + $0xd8] sm:$0xff]
      %v362 = vld [vmem:[%s327 + $0xe0] sm:$0xff]
      %v363 = vld [vmem:[%s327 + $0xe8] sm:$0xff]
      %v364 = vld [vmem:[%s327 + $0xf0] sm:$0xff]
      %v365 = vld [vmem:[%s327 + $0xf8] sm:$0xff]
      %v366 = vpack.c.bf16 %v335, %v334
      %v367 = vpack.c.bf16 %v337, %v336
      %v368 = vpack.c.bf16 %v339, %v338
      %v369 = vpack.c.bf16 %v341, %v340
      %v370 = vpack.c.bf16 %v343, %v342
      %v371 = vpack.c.bf16 %v345, %v344
      %v372 = vpack.c.bf16 %v347, %v346
      %v373 = vpack.c.bf16 %v349, %v348
      %v374 = vpack.c.bf16 %v351, %v350
      %v375 = vpack.c.bf16 %v353, %v352
      %v376 = vpack.c.bf16 %v355, %v354
      %v377 = vpack.c.bf16 %v357, %v356
      %v378 = vpack.c.bf16 %v359, %v358
      %v379 = vpack.c.bf16 %v361, %v360
      %v380 = vpack.c.bf16 %v363, %v362
      %v381 = vpack.c.bf16 %v365, %v364
      %v382 = vld [vmem:[%s1] sm:$0xf]
      %v383 = vld [vmem:[%s1 + $0x4] sm:$0xf]
      %v384 = vld [vmem:[%s1 + $0x8] sm:$0xf]
      %v385 = vld [vmem:[%s1 + $0xc] sm:$0xf]
      %v386 = vld [vmem:[%s2] sm:$0x1]
      %v388 = vperm.slane %v386, 0
      %v394 = vunpack.c.l.b16 %v382
      %v395 = vunpack.c.l.b16 %v383
      %v396 = vunpack.c.l.b16 %v384
      %v397 = vunpack.c.l.b16 %v385
      %v398 = vpack.c.b16 %v395, %v394
      %v399 = vpack.c.b16 %v397, %v396
      %vm400 = vcmask 31744
      %v402 = vsel %vm400, %v366, 0
      %v405 = vsel %vm400, %v367, 0
      %v408 = vsel %vm400, %v368, 0
      %v411 = vsel %vm400, %v369, 0
      %v414 = vsel %vm400, %v370, 0
      %v417 = vsel %vm400, %v371, 0
      %v420 = vsel %vm400, %v372, 0
      %v423 = vsel %vm400, %v373, 0
      %v426 = vsel %vm400, %v374, 0
      %v429 = vsel %vm400, %v375, 0
      %v432 = vsel %vm400, %v376, 0
      %v435 = vsel %vm400, %v377, 0
      %v438 = vsel %vm400, %v378, 0
      %v441 = vsel %vm400, %v379, 0
      %v444 = vsel %vm400, %v380, 0
      %v447 = vsel %vm400, %v381, 0
      %v450 = vsel %vm400, %v398, 0
      %v453 = vsel %vm400, %v399, 0
      %455 = vmatpush.bf16.xpose.msra.mxu0 0
      %456 = vmatpush.bf16.xpose.msra.mxu0 0
      %457 = vmatpush.bf16.xpose.msra.mxu0 0
      %458 = vmatpush.bf16.xpose.msra.mxu0 0
      %459 = vmatpush.bf16.xpose.msra.mxu0 0
      %460 = vmatpush.bf16.xpose.msra.mxu0 0
      %461 = vmatpush.bf16.xpose.msra.mxu0 %v453
      %462 = vmatpush.bf16.xpose.msra.mxu0 %v450
      %463 = vmatmul.bf16.gmra.mxu0 %v402
      %v464 = vpop.f32.mrf.mxu0
      %v465 = vadd.f32 %v388, %v464
      %v466 = vpop.f32.mrf.mxu0
      %v467 = vadd.f32 %v388, %v466
      %468 = vmatmul.bf16.gmra.mxu0 %v405
      %v469 = vpop.f32.mrf.mxu0
      %v470 = vadd.f32 %v388, %v469
      %v471 = vpop.f32.mrf.mxu0
      %v472 = vadd.f32 %v388, %v471
      %473 = vmatmul.bf16.gmra.mxu0 %v408
      %v474 = vpop.f32.mrf.mxu0
      %v475 = vadd.f32 %v388, %v474
      %v476 = vpop.f32.mrf.mxu0
      %v477 = vadd.f32 %v388, %v476
      %478 = vmatmul.bf16.gmra.mxu0 %v411
      %v479 = vpop.f32.mrf.mxu0
      %v480 = vadd.f32 %v388, %v479
      %v481 = vpop.f32.mrf.mxu0
      %v482 = vadd.f32 %v388, %v481
      %483 = vmatmul.bf16.gmra.mxu0 %v414
      %v484 = vpop.f32.mrf.mxu0
      %v485 = vadd.f32 %v388, %v484
      %v486 = vpop.f32.mrf.mxu0
      %v487 = vadd.f32 %v388, %v486
      %488 = vmatmul.bf16.gmra.mxu0 %v417
      %v489 = vpop.f32.mrf.mxu0
      %v490 = vadd.f32 %v388, %v489
      %v491 = vpop.f32.mrf.mxu0
      %v492 = vadd.f32 %v388, %v491
      %493 = vmatmul.bf16.gmra.mxu0 %v420
      %v494 = vpop.f32.mrf.mxu0
      %v495 = vadd.f32 %v388, %v494
      %v496 = vpop.f32.mrf.mxu0
      %v497 = vadd.f32 %v388, %v496
      %498 = vmatmul.bf16.gmra.mxu0 %v423
      %v499 = vpop.f32.mrf.mxu0
      %v500 = vadd.f32 %v388, %v499
      %v501 = vpop.f32.mrf.mxu0
      %v502 = vadd.f32 %v388, %v501
      %503 = vmatmul.bf16.gmra.mxu0 %v426
      %v504 = vpop.f32.mrf.mxu0
      %v505 = vadd.f32 %v388, %v504
      %v506 = vpop.f32.mrf.mxu0
      %v507 = vadd.f32 %v388, %v506
      %508 = vmatmul.bf16.gmra.mxu0 %v429
      %v509 = vpop.f32.mrf.mxu0
      %v510 = vadd.f32 %v388, %v509
      %v511 = vpop.f32.mrf.mxu0
      %v512 = vadd.f32 %v388, %v511
      %513 = vmatmul.bf16.gmra.mxu0 %v432
      %v514 = vpop.f32.mrf.mxu0
      %v515 = vadd.f32 %v388, %v514
      %v516 = vpop.f32.mrf.mxu0
      %v517 = vadd.f32 %v388, %v516
      %518 = vmatmul.bf16.gmra.mxu0 %v435
      %v519 = vpop.f32.mrf.mxu0
      %v520 = vadd.f32 %v388, %v519
      %v521 = vpop.f32.mrf.mxu0
      %v522 = vadd.f32 %v388, %v521
      %523 = vmatmul.bf16.gmra.mxu0 %v438
      %v524 = vpop.f32.mrf.mxu0
      %v525 = vadd.f32 %v388, %v524
      %v526 = vpop.f32.mrf.mxu0
      %v527 = vadd.f32 %v388, %v526
      %528 = vmatmul.bf16.gmra.mxu0 %v441
      %v529 = vpop.f32.mrf.mxu0
      %v530 = vadd.f32 %v388, %v529
      %v531 = vpop.f32.mrf.mxu0
      %v532 = vadd.f32 %v388, %v531
      %533 = vmatmul.bf16.gmra.mxu0 %v444
      %v534 = vpop.f32.mrf.mxu0
      %v535 = vadd.f32 %v388, %v534
      %v536 = vpop.f32.mrf.mxu0
      %v537 = vadd.f32 %v388, %v536
      %538 = vmatmul.bf16.gmra.mxu0 %v447
      %v539 = vpop.f32.mrf.mxu0
      %v540 = vadd.f32 %v388, %v539
      %v541 = vpop.f32.mrf.mxu0
      %v542 = vadd.f32 %v388, %v541
      %543 = vdwg.mxu0
      %vm544 = vcmask 261120
      %545 = vst.msk [vmem:[#allocation2] sm:$0xff] %vm544, 0.0
      %546 = vst.msk [vmem:[#allocation2 + $0x8] sm:$0xff] %vm544, 0.0
      %547 = vst.msk [vmem:[#allocation2 + $0x10] sm:$0xff] %vm544, 0.0
      %548 = vst.msk [vmem:[#allocation2 + $0x18] sm:$0xff] %vm544, 0.0
      %549 = vst.msk [vmem:[#allocation2 + $0x20] sm:$0xff] %vm544, 0.0
      %550 = vst.msk [vmem:[#allocation2 + $0x28] sm:$0xff] %vm544, 0.0
      %551 = vst.msk [vmem:[#allocation2 + $0x30] sm:$0xff] %vm544, 0.0
      %552 = vst.msk [vmem:[#allocation2 + $0x38] sm:$0xff] %vm544, 0.0
      %553 = vst.msk [vmem:[#allocation2 + $0x40] sm:$0xff] %vm544, 0.0
      %554 = vst.msk [vmem:[#allocation2 + $0x48] sm:$0xff] %vm544, 0.0
      %555 = vst.msk [vmem:[#allocation2 + $0x50] sm:$0xff] %vm544, 0.0
      %556 = vst.msk [vmem:[#allocation2 + $0x58] sm:$0xff] %vm544, 0.0
      %557 = vst.msk [vmem:[#allocation2 + $0x60] sm:$0xff] %vm544, 0.0
      %558 = vst.msk [vmem:[#allocation2 + $0x68] sm:$0xff] %vm544, 0.0
      %559 = vst.msk [vmem:[#allocation2 + $0x70] sm:$0xff] %vm544, 0.0
      %560 = vst.msk [vmem:[#allocation2 + $0x78] sm:$0xff] %vm544, 0.0
      %561 = vst.msk [vmem:[#allocation2 + $0x80] sm:$0xff] %vm544, 0.0
      %562 = vst.msk [vmem:[#allocation2 + $0x88] sm:$0xff] %vm544, 0.0
      %563 = vst.msk [vmem:[#allocation2 + $0x90] sm:$0xff] %vm544, 0.0
      %564 = vst.msk [vmem:[#allocation2 + $0x98] sm:$0xff] %vm544, 0.0
      %565 = vst.msk [vmem:[#allocation2 + $0xa0] sm:$0xff] %vm544, 0.0
      %566 = vst.msk [vmem:[#allocation2 + $0xa8] sm:$0xff] %vm544, 0.0
      %567 = vst.msk [vmem:[#allocation2 + $0xb0] sm:$0xff] %vm544, 0.0
      %568 = vst.msk [vmem:[#allocation2 + $0xb8] sm:$0xff] %vm544, 0.0
      %569 = vst.msk [vmem:[#allocation2 + $0xc0] sm:$0xff] %vm544, 0.0
      %570 = vst.msk [vmem:[#allocation2 + $0xc8] sm:$0xff] %vm544, 0.0
      %571 = vst.msk [vmem:[#allocation2 + $0xd0] sm:$0xff] %vm544, 0.0
      %572 = vst.msk [vmem:[#allocation2 + $0xd8] sm:$0xff] %vm544, 0.0
      %573 = vst.msk [vmem:[#allocation2 + $0xe0] sm:$0xff] %vm544, 0.0
      %574 = vst.msk [vmem:[#allocation2 + $0xe8] sm:$0xff] %vm544, 0.0
      %575 = vst.msk [vmem:[#allocation2 + $0xf0] sm:$0xff] %vm544, 0.0
      %576 = vst.msk [vmem:[#allocation2 + $0xf8] sm:$0xff] %vm544, 0.0
      %577 = vst.msk [vmem:[#allocation2 + $0x100] sm:$0xff] %vm544, 0.0
      %578 = vst.msk [vmem:[#allocation2 + $0x108] sm:$0xff] %vm544, 0.0
      %579 = vst.msk [vmem:[#allocation2 + $0x110] sm:$0xff] %vm544, 0.0
      %580 = vst.msk [vmem:[#allocation2 + $0x118] sm:$0xff] %vm544, 0.0
      %581 = vst.msk [vmem:[#allocation2 + $0x120] sm:$0xff] %vm544, 0.0
      %582 = vst.msk [vmem:[#allocation2 + $0x11] sm:$0xff] %vm544, %v465
      %583 = vst.msk [vmem:[#allocation2 + $0x19] sm:$0xff] %vm544, %v467
      %584 = vst.msk [vmem:[#allocation2 + $0x21] sm:$0xff] %vm544, %v470
      %585 = vst.msk [vmem:[#allocation2 + $0x29] sm:$0xff] %vm544, %v472
      %586 = vst.msk [vmem:[#allocation2 + $0x31] sm:$0xff] %vm544, %v475
      %587 = vst.msk [vmem:[#allocation2 + $0x39] sm:$0xff] %vm544, %v477
      %588 = vst.msk [vmem:[#allocation2 + $0x41] sm:$0xff] %vm544, %v480
      %589 = vst.msk [vmem:[#allocation2 + $0x49] sm:$0xff] %vm544, %v482
      %590 = vst.msk [vmem:[#allocation2 + $0x51] sm:$0xff] %vm544, %v485
      %591 = vst.msk [vmem:[#allocation2 + $0x59] sm:$0xff] %vm544, %v487
      %592 = vst.msk [vmem:[#allocation2 + $0x61] sm:$0xff] %vm544, %v490
      %593 = vst.msk [vmem:[#allocation2 + $0x69] sm:$0xff] %vm544, %v492
      %594 = vst.msk [vmem:[#allocation2 + $0x71] sm:$0xff] %vm544, %v495
      %595 = vst.msk [vmem:[#allocation2 + $0x79] sm:$0xff] %vm544, %v497
      %596 = vst.msk [vmem:[#allocation2 + $0x81] sm:$0xff] %vm544, %v500
      %597 = vst.msk [vmem:[#allocation2 + $0x89] sm:$0xff] %vm544, %v502
      %598 = vst.msk [vmem:[#allocation2 + $0x91] sm:$0xff] %vm544, %v505
      %599 = vst.msk [vmem:[#allocation2 + $0x99] sm:$0xff] %vm544, %v507
      %600 = vst.msk [vmem:[#allocation2 + $0xa1] sm:$0xff] %vm544, %v510
      %601 = vst.msk [vmem:[#allocation2 + $0xa9] sm:$0xff] %vm544, %v512
      %602 = vst.msk [vmem:[#allocation2 + $0xb1] sm:$0xff] %vm544, %v515
      %603 = vst.msk [vmem:[#allocation2 + $0xb9] sm:$0xff] %vm544, %v517
      %604 = vst.msk [vmem:[#allocation2 + $0xc1] sm:$0xff] %vm544, %v520
      %605 = vst.msk [vmem:[#allocation2 + $0xc9] sm:$0xff] %vm544, %v522
      %606 = vst.msk [vmem:[#allocation2 + $0xd1] sm:$0xff] %vm544, %v525
      %607 = vst.msk [vmem:[#allocation2 + $0xd9] sm:$0xff] %vm544, %v527
      %608 = vst.msk [vmem:[#allocation2 + $0xe1] sm:$0xff] %vm544, %v530
      %609 = vst.msk [vmem:[#allocation2 + $0xe9] sm:$0xff] %vm544, %v532
      %610 = vst.msk [vmem:[#allocation2 + $0xf1] sm:$0xff] %vm544, %v535
      %611 = vst.msk [vmem:[#allocation2 + $0xf9] sm:$0xff] %vm544, %v537
      %612 = vst.msk [vmem:[#allocation2 + $0x101] sm:$0xff] %vm544, %v540
      %613 = vst.msk [vmem:[#allocation2 + $0x109] sm:$0xff] %vm544, %v542
      %v614 = vld [vmem:[%s3] sm:$0xff]
      %v615 = vld [vmem:[%s3 + $0x8] sm:$0x1]
      %v616 = vlaneseq
      %v617 = vshrl.u32 %v616, 7
      %v618 = vadd.s32 %v617, 8
      %v619 = vadd.s32 %v617, 16
      %v620 = vadd.s32 %v617, 24
      %v621 = vadd.s32 %v617, 32
      %v622 = vadd.s32 %v617, 40
      %v623 = vadd.s32 %v617, 48
      %v624 = vadd.s32 %v617, 56
      %v625 = vadd.s32 %v617, 64
      %v626 = vadd.s32 %v617, 72
      %v627 = vadd.s32 %v617, 80
      %v628 = vadd.s32 %v617, 88
      %v629 = vadd.s32 %v617, 96
      %v630 = vadd.s32 %v617, 104
      %v631 = vadd.s32 %v617, 112
      %v632 = vadd.s32 %v617, 120
      %v633 = vadd.s32 %v617, 128
      %v634 = vadd.s32 %v617, 136
      %v635 = vadd.s32 %v617, 144
      %v636 = vadd.s32 %v617, 152
      %v637 = vadd.s32 %v617, 160
      %v638 = vadd.s32 %v617, 168
      %v639 = vadd.s32 %v617, 176
      %v640 = vadd.s32 %v617, 184
      %v641 = vadd.s32 %v617, 192
      %v642 = vadd.s32 %v617, 200
      %v643 = vadd.s32 %v617, 208
      %v644 = vadd.s32 %v617, 216
      %v645 = vadd.s32 %v617, 224
      %v646 = vadd.s32 %v617, 232
      %v647 = vadd.s32 %v617, 240
      %v648 = vadd.s32 %v617, 248
      %vm649 = vcmp.lt.s32.totalorder %v617, 0
      %v650 = vsub.s32 0, %v617
      %v651 = vsel %vm649, %v650, %v617
      %v652 = vshrl.u32 %v651, 4
      %v653 = vand.u32 %v651, 15
      %v654 = vsub.s32 0, %v653
      %v655 = vsel %vm649, %v654, %v653
      %vm656 = vcmp.lt.s32.totalorder %v618, 0
      %v657 = vsub.s32 0, %v618
      %v658 = vsel %vm656, %v657, %v618
      %v659 = vshrl.u32 %v658, 4
      %v660 = vand.u32 %v658, 15
      %v661 = vsub.s32 0, %v660
      %v662 = vsel %vm656, %v661, %v660
      %vm663 = vcmp.lt.s32.totalorder %v619, 0
      %v664 = vsub.s32 0, %v619
      %v665 = vsel %vm663, %v664, %v619
      %v666 = vshrl.u32 %v665, 4
      %v667 = vand.u32 %v665, 15
      %v668 = vsub.s32 0, %v667
      %v669 = vsel %vm663, %v668, %v667
      %vm670 = vcmp.lt.s32.totalorder %v620, 0
      %v671 = vsub.s32 0, %v620
      %v672 = vsel %vm670, %v671, %v620
      %v673 = vshrl.u32 %v672, 4
      %v674 = vand.u32 %v672, 15
      %v675 = vsub.s32 0, %v674
      %v676 = vsel %vm670, %v675, %v674
      %vm677 = vcmp.lt.s32.totalorder %v621, 0
      %v678 = vsub.s32 0, %v621
      %v679 = vsel %vm677, %v678, %v621
      %v680 = vshrl.u32 %v679, 4
      %v681 = vand.u32 %v679, 15
      %v682 = vsub.s32 0, %v681
      %v683 = vsel %vm677, %v682, %v681
      %vm684 = vcmp.lt.s32.totalorder %v622, 0
      %v685 = vsub.s32 0, %v622
      %v686 = vsel %vm684, %v685, %v622
      %v687 = vshrl.u32 %v686, 4
      %v688 = vand.u32 %v686, 15
      %v689 = vsub.s32 0, %v688
      %v690 = vsel %vm684, %v689, %v688
      %vm691 = vcmp.lt.s32.totalorder %v623, 0
      %v692 = vsub.s32 0, %v623
      %v693 = vsel %vm691, %v692, %v623
      %v694 = vshrl.u32 %v693, 4
      %v695 = vand.u32 %v693, 15
      %v696 = vsub.s32 0, %v695
      %v697 = vsel %vm691, %v696, %v695
      %vm698 = vcmp.lt.s32.totalorder %v624, 0
      %v699 = vsub.s32 0, %v624
      %v700 = vsel %vm698, %v699, %v624
      %v701 = vshrl.u32 %v700, 4
      %v702 = vand.u32 %v700, 15
      %v703 = vsub.s32 0, %v702
      %v704 = vsel %vm698, %v703, %v702
      %vm705 = vcmp.lt.s32.totalorder %v625, 0
      %v706 = vsub.s32 0, %v625
      %v707 = vsel %vm705, %v706, %v625
      %v708 = vshrl.u32 %v707, 4
      %v709 = vand.u32 %v707, 15
      %v710 = vsub.s32 0, %v709
      %v711 = vsel %vm705, %v710, %v709
      %vm712 = vcmp.lt.s32.totalorder %v626, 0
      %v713 = vsub.s32 0, %v626
      %v714 = vsel %vm712, %v713, %v626
      %v715 = vshrl.u32 %v714, 4
      %v716 = vand.u32 %v714, 15
      %v717 = vsub.s32 0, %v716
      %v718 = vsel %vm712, %v717, %v716
      %vm719 = vcmp.lt.s32.totalorder %v627, 0
      %v720 = vsub.s32 0, %v627
      %v721 = vsel %vm719, %v720, %v627
      %v722 = vshrl.u32 %v721, 4
      %v723 = vand.u32 %v721, 15
      %v724 = vsub.s32 0, %v723
      %v725 = vsel %vm719, %v724, %v723
      %vm726 = vcmp.lt.s32.totalorder %v628, 0
      %v727 = vsub.s32 0, %v628
      %v728 = vsel %vm726, %v727, %v628
      %v729 = vshrl.u32 %v728, 4
      %v730 = vand.u32 %v728, 15
      %v731 = vsub.s32 0, %v730
      %v732 = vsel %vm726, %v731, %v730
      %vm733 = vcmp.lt.s32.totalorder %v629, 0
      %v734 = vsub.s32 0, %v629
      %v735 = vsel %vm733, %v734, %v629
      %v736 = vshrl.u32 %v735, 4
      %v737 = vand.u32 %v735, 15
      %v738 = vsub.s32 0, %v737
      %v739 = vsel %vm733, %v738, %v737
      %vm740 = vcmp.lt.s32.totalorder %v630, 0
      %v741 = vsub.s32 0, %v630
      %v742 = vsel %vm740, %v741, %v630
      %v743 = vshrl.u32 %v742, 4
      %v744 = vand.u32 %v742, 15
      %v745 = vsub.s32 0, %v744
      %v746 = vsel %vm740, %v745, %v744
      %vm747 = vcmp.lt.s32.totalorder %v631, 0
      %v748 = vsub.s32 0, %v631
      %v749 = vsel %vm747, %v748, %v631
      %v750 = vshrl.u32 %v749, 4
      %v751 = vand.u32 %v749, 15
      %v752 = vsub.s32 0, %v751
      %v753 = vsel %vm747, %v752, %v751
      %vm754 = vcmp.lt.s32.totalorder %v632, 0
      %v755 = vsub.s32 0, %v632
      %v756 = vsel %vm754, %v755, %v632
      %v757 = vshrl.u32 %v756, 4
      %v758 = vand.u32 %v756, 15
      %v759 = vsub.s32 0, %v758
      %v760 = vsel %vm754, %v759, %v758
      %vm761 = vcmp.lt.s32.totalorder %v633, 0
      %v762 = vsub.s32 0, %v633
      %v763 = vsel %vm761, %v762, %v633
      %v764 = vshrl.u32 %v763, 4
      %v765 = vand.u32 %v763, 15
      %v766 = vsub.s32 0, %v765
      %v767 = vsel %vm761, %v766, %v765
      %vm768 = vcmp.lt.s32.totalorder %v634, 0
      %v769 = vsub.s32 0, %v634
      %v770 = vsel %vm768, %v769, %v634
      %v771 = vshrl.u32 %v770, 4
      %v772 = vand.u32 %v770, 15
      %v773 = vsub.s32 0, %v772
      %v774 = vsel %vm768, %v773, %v772
      %vm775 = vcmp.lt.s32.totalorder %v635, 0
      %v776 = vsub.s32 0, %v635
      %v777 = vsel %vm775, %v776, %v635
      %v778 = vshrl.u32 %v777, 4
      %v779 = vand.u32 %v777, 15
      %v780 = vsub.s32 0, %v779
      %v781 = vsel %vm775, %v780, %v779
      %vm782 = vcmp.lt.s32.totalorder %v636, 0
      %v783 = vsub.s32 0, %v636
      %v784 = vsel %vm782, %v783, %v636
      %v785 = vshrl.u32 %v784, 4
      %v786 = vand.u32 %v784, 15
      %v787 = vsub.s32 0, %v786
      %v788 = vsel %vm782, %v787, %v786
      %vm789 = vcmp.lt.s32.totalorder %v637, 0
      %v790 = vsub.s32 0, %v637
      %v791 = vsel %vm789, %v790, %v637
      %v792 = vshrl.u32 %v791, 4
      %v793 = vand.u32 %v791, 15
      %v794 = vsub.s32 0, %v793
      %v795 = vsel %vm789, %v794, %v793
      %vm796 = vcmp.lt.s32.totalorder %v638, 0
      %v797 = vsub.s32 0, %v638
      %v798 = vsel %vm796, %v797, %v638
      %v799 = vshrl.u32 %v798, 4
      %v800 = vand.u32 %v798, 15
      %v801 = vsub.s32 0, %v800
      %v802 = vsel %vm796, %v801, %v800
      %vm803 = vcmp.lt.s32.totalorder %v639, 0
      %v804 = vsub.s32 0, %v639
      %v805 = vsel %vm803, %v804, %v639
      %v806 = vshrl.u32 %v805, 4
      %v807 = vand.u32 %v805, 15
      %v808 = vsub.s32 0, %v807
      %v809 = vsel %vm803, %v808, %v807
      %vm810 = vcmp.lt.s32.totalorder %v640, 0
      %v811 = vsub.s32 0, %v640
      %v812 = vsel %vm810, %v811, %v640
      %v813 = vshrl.u32 %v812, 4
      %v814 = vand.u32 %v812, 15
      %v815 = vsub.s32 0, %v814
      %v816 = vsel %vm810, %v815, %v814
      %vm817 = vcmp.lt.s32.totalorder %v641, 0
      %v818 = vsub.s32 0, %v641
      %v819 = vsel %vm817, %v818, %v641
      %v820 = vshrl.u32 %v819, 4
      %v821 = vand.u32 %v819, 15
      %v822 = vsub.s32 0, %v821
      %v823 = vsel %vm817, %v822, %v821
      %vm824 = vcmp.lt.s32.totalorder %v642, 0
      %v825 = vsub.s32 0, %v642
      %v826 = vsel %vm824, %v825, %v642
      %v827 = vshrl.u32 %v826, 4
      %v828 = vand.u32 %v826, 15
      %v829 = vsub.s32 0, %v828
      %v830 = vsel %vm824, %v829, %v828
      %vm831 = vcmp.lt.s32.totalorder %v643, 0
      %v832 = vsub.s32 0, %v643
      %v833 = vsel %vm831, %v832, %v643
      %v834 = vshrl.u32 %v833, 4
      %v835 = vand.u32 %v833, 15
      %v836 = vsub.s32 0, %v835
      %v837 = vsel %vm831, %v836, %v835
      %vm838 = vcmp.lt.s32.totalorder %v644, 0
      %v839 = vsub.s32 0, %v644
      %v840 = vsel %vm838, %v839, %v644
      %v841 = vshrl.u32 %v840, 4
      %v842 = vand.u32 %v840, 15
      %v843 = vsub.s32 0, %v842
      %v844 = vsel %vm838, %v843, %v842
      %vm845 = vcmp.lt.s32.totalorder %v645, 0
      %v846 = vsub.s32 0, %v645
      %v847 = vsel %vm845, %v846, %v645
      %v848 = vshrl.u32 %v847, 4
      %v849 = vand.u32 %v847, 15
      %v850 = vsub.s32 0, %v849
      %v851 = vsel %vm845, %v850, %v849
      %vm852 = vcmp.lt.s32.totalorder %v646, 0
      %v853 = vsub.s32 0, %v646
      %v854 = vsel %vm852, %v853, %v646
      %v855 = vshrl.u32 %v854, 4
      %v856 = vand.u32 %v854, 15
      %v857 = vsub.s32 0, %v856
      %v858 = vsel %vm852, %v857, %v856
      %vm859 = vcmp.lt.s32.totalorder %v647, 0
      %v860 = vsub.s32 0, %v647
      %v861 = vsel %vm859, %v860, %v647
      %v862 = vshrl.u32 %v861, 4
      %v863 = vand.u32 %v861, 15
      %v864 = vsub.s32 0, %v863
      %v865 = vsel %vm859, %v864, %v863
      %vm866 = vcmp.lt.s32.totalorder %v648, 0
      %v867 = vsub.s32 0, %v648
      %v868 = vsel %vm866, %v867, %v648
      %v869 = vshrl.u32 %v868, 4
      %v870 = vand.u32 %v868, 15
      %v871 = vsub.s32 0, %v870
      %v872 = vsel %vm866, %v871, %v870
      %vm873 = vcmp.ne.s32.totalorder %v655, 0
      %vm874 = vcmp.ne.s32.totalorder %v662, 0
      %vm875 = vcmp.ne.s32.totalorder %v669, 0
      %vm876 = vcmp.ne.s32.totalorder %v676, 0
      %vm877 = vcmp.ne.s32.totalorder %v683, 0
      %vm878 = vcmp.ne.s32.totalorder %v690, 0
      %vm879 = vcmp.ne.s32.totalorder %v697, 0
      %vm880 = vcmp.ne.s32.totalorder %v704, 0
      %vm881 = vcmp.ne.s32.totalorder %v711, 0
      %vm882 = vcmp.ne.s32.totalorder %v718, 0
      %vm883 = vcmp.ne.s32.totalorder %v725, 0
      %vm884 = vcmp.ne.s32.totalorder %v732, 0
      %vm885 = vcmp.ne.s32.totalorder %v739, 0
      %vm886 = vcmp.ne.s32.totalorder %v746, 0
      %vm887 = vcmp.ne.s32.totalorder %v753, 0
      %vm888 = vcmp.ne.s32.totalorder %v760, 0
      %vm889 = vcmp.ne.s32.totalorder %v767, 0
      %vm890 = vcmp.ne.s32.totalorder %v774, 0
      %vm891 = vcmp.ne.s32.totalorder %v781, 0
      %vm892 = vcmp.ne.s32.totalorder %v788, 0
      %vm893 = vcmp.ne.s32.totalorder %v795, 0
      %vm894 = vcmp.ne.s32.totalorder %v802, 0
      %vm895 = vcmp.ne.s32.totalorder %v809, 0
      %vm896 = vcmp.ne.s32.totalorder %v816, 0
      %vm897 = vcmp.ne.s32.totalorder %v823, 0
      %vm898 = vcmp.ne.s32.totalorder %v830, 0
      %vm899 = vcmp.ne.s32.totalorder %v837, 0
      %vm900 = vcmp.ne.s32.totalorder %v844, 0
      %vm901 = vcmp.ne.s32.totalorder %v851, 0
      %vm902 = vcmp.ne.s32.totalorder %v858, 0
      %vm903 = vcmp.ne.s32.totalorder %v865, 0
      %vm904 = vcmp.ne.s32.totalorder %v872, 0
      %vm905 = vcmp.lt.s32.totalorder %v655, 0
      %vm906 = vcmp.lt.s32.totalorder %v662, 0
      %vm907 = vcmp.lt.s32.totalorder %v669, 0
      %vm908 = vcmp.lt.s32.totalorder %v676, 0
      %vm909 = vcmp.lt.s32.totalorder %v683, 0
      %vm910 = vcmp.lt.s32.totalorder %v690, 0
      %vm911 = vcmp.lt.s32.totalorder %v697, 0
      %vm912 = vcmp.lt.s32.totalorder %v704, 0
      %vm913 = vcmp.lt.s32.totalorder %v711, 0
      %vm914 = vcmp.lt.s32.totalorder %v718, 0
      %vm915 = vcmp.lt.s32.totalorder %v725, 0
      %vm916 = vcmp.lt.s32.totalorder %v732, 0
      %vm917 = vcmp.lt.s32.totalorder %v739, 0
      %vm918 = vcmp.lt.s32.totalorder %v746, 0
      %vm919 = vcmp.lt.s32.totalorder %v753, 0
      %vm920 = vcmp.lt.s32.totalorder %v760, 0
      %vm921 = vcmp.lt.s32.totalorder %v767, 0
      %vm922 = vcmp.lt.s32.totalorder %v774, 0
      %vm923 = vcmp.lt.s32.totalorder %v781, 0
      %vm924 = vcmp.lt.s32.totalorder %v788, 0
      %vm925 = vcmp.lt.s32.totalorder %v795, 0
      %vm926 = vcmp.lt.s32.totalorder %v802, 0
      %vm927 = vcmp.lt.s32.totalorder %v809, 0
      %vm928 = vcmp.lt.s32.totalorder %v816, 0
      %vm929 = vcmp.lt.s32.totalorder %v823, 0
      %vm930 = vcmp.lt.s32.totalorder %v830, 0
      %vm931 = vcmp.lt.s32.totalorder %v837, 0
      %vm932 = vcmp.lt.s32.totalorder %v844, 0
      %vm933 = vcmp.lt.s32.totalorder %v851, 0
      %vm934 = vcmp.lt.s32.totalorder %v858, 0
      %vm935 = vcmp.lt.s32.totalorder %v865, 0
      %vm936 = vcmp.lt.s32.totalorder %v872, 0
      %vm937 = vmand %vm905, %vm873
      %vm938 = vmand %vm906, %vm874
      %vm939 = vmand %vm907, %vm875
      %vm940 = vmand %vm908, %vm876
      %vm941 = vmand %vm909, %vm877
      %vm942 = vmand %vm910, %vm878
      %vm943 = vmand %vm911, %vm879
      %vm944 = vmand %vm912, %vm880
      %vm945 = vmand %vm913, %vm881
      %vm946 = vmand %vm914, %vm882
      %vm947 = vmand %vm915, %vm883
      %vm948 = vmand %vm916, %vm884
      %vm949 = vmand %vm917, %vm885
      %vm950 = vmand %vm918, %vm886
      %vm951 = vmand %vm919, %vm887
      %vm952 = vmand %vm920, %vm888
      %vm953 = vmand %vm921, %vm889
      %vm954 = vmand %vm922, %vm890
      %vm955 = vmand %vm923, %vm891
      %vm956 = vmand %vm924, %vm892
      %vm957 = vmand %vm925, %vm893
      %vm958 = vmand %vm926, %vm894
      %vm959 = vmand %vm927, %vm895
      %vm960 = vmand %vm928, %vm896
      %vm961 = vmand %vm929, %vm897
      %vm962 = vmand %vm930, %vm898
      %vm963 = vmand %vm931, %vm899
      %vm964 = vmand %vm932, %vm900
      %vm965 = vmand %vm933, %vm901
      %vm966 = vmand %vm934, %vm902
      %vm967 = vmand %vm935, %vm903
      %vm968 = vmand %vm936, %vm904
      %v969 = vadd.s32 %v655, 16
      %v970 = vadd.s32 %v662, 16
      %v971 = vadd.s32 %v669, 16
      %v972 = vadd.s32 %v676, 16
      %v973 = vadd.s32 %v683, 16
      %v974 = vadd.s32 %v690, 16
      %v975 = vadd.s32 %v697, 16
      %v976 = vadd.s32 %v704, 16
      %v977 = vadd.s32 %v711, 16
      %v978 = vadd.s32 %v718, 16
      %v979 = vadd.s32 %v725, 16
      %v980 = vadd.s32 %v732, 16
      %v981 = vadd.s32 %v739, 16
      %v982 = vadd.s32 %v746, 16
      %v983 = vadd.s32 %v753, 16
      %v984 = vadd.s32 %v760, 16
      %v985 = vadd.s32 %v767, 16
      %v986 = vadd.s32 %v774, 16
      %v987 = vadd.s32 %v781, 16
      %v988 = vadd.s32 %v788, 16
      %v989 = vadd.s32 %v795, 16
      %v990 = vadd.s32 %v802, 16
      %v991 = vadd.s32 %v809, 16
      %v992 = vadd.s32 %v816, 16
      %v993 = vadd.s32 %v823, 16
      %v994 = vadd.s32 %v830, 16
      %v995 = vadd.s32 %v837, 16
      %v996 = vadd.s32 %v844, 16
      %v997 = vadd.s32 %v851, 16
      %v998 = vadd.s32 %v858, 16
      %v999 = vadd.s32 %v865, 16
      %v1000 = vadd.s32 %v872, 16
      %v1001 = vsel %vm937, %v969, %v655
      %v1002 = vsel %vm938, %v970, %v662
      %v1003 = vsel %vm939, %v971, %v669
      %v1004 = vsel %vm940, %v972, %v676
      %v1005 = vsel %vm941, %v973, %v683
      %v1006 = vsel %vm942, %v974, %v690
      %v1007 = vsel %vm943, %v975, %v697
      %v1008 = vsel %vm944, %v976, %v704
      %v1009 = vsel %vm945, %v977, %v711
      %v1010 = vsel %vm946, %v978, %v718
      %v1011 = vsel %vm947, %v979, %v725
      %v1012 = vsel %vm948, %v980, %v732
      %v1013 = vsel %vm949, %v981, %v739
      %v1014 = vsel %vm950, %v982, %v746
      %v1015 = vsel %vm951, %v983, %v753
      %v1016 = vsel %vm952, %v984, %v760
      %v1017 = vsel %vm953, %v985, %v767
      %v1018 = vsel %vm954, %v986, %v774
      %v1019 = vsel %vm955, %v987, %v781
      %v1020 = vsel %vm956, %v988, %v788
      %v1021 = vsel %vm957, %v989, %v795
      %v1022 = vsel %vm958, %v990, %v802
      %v1023 = vsel %vm959, %v991, %v809
      %v1024 = vsel %vm960, %v992, %v816
      %v1025 = vsel %vm961, %v993, %v823
      %v1026 = vsel %vm962, %v994, %v830
      %v1027 = vsel %vm963, %v995, %v837
      %v1028 = vsel %vm964, %v996, %v844
      %v1029 = vsel %vm965, %v997, %v851
      %v1030 = vsel %vm966, %v998, %v858
      %v1031 = vsel %vm967, %v999, %v865
      %v1032 = vsel %vm968, %v1000, %v872
      %vm1033 = vcmp.ge.s32.totalorder %v1001, 1
      %vm1034 = vcmp.ge.s32.totalorder %v1002, 1
      %vm1035 = vcmp.ge.s32.totalorder %v1003, 1
      %vm1036 = vcmp.ge.s32.totalorder %v1004, 1
      %vm1037 = vcmp.ge.s32.totalorder %v1005, 1
      %vm1038 = vcmp.ge.s32.totalorder %v1006, 1
      %vm1039 = vcmp.ge.s32.totalorder %v1007, 1
      %vm1040 = vcmp.ge.s32.totalorder %v1008, 1
      %vm1041 = vcmp.ge.s32.totalorder %v1009, 1
      %vm1042 = vcmp.ge.s32.totalorder %v1010, 1
      %vm1043 = vcmp.ge.s32.totalorder %v1011, 1
      %vm1044 = vcmp.ge.s32.totalorder %v1012, 1
      %vm1045 = vcmp.ge.s32.totalorder %v1013, 1
      %vm1046 = vcmp.ge.s32.totalorder %v1014, 1
      %vm1047 = vcmp.ge.s32.totalorder %v1015, 1
      %vm1048 = vcmp.ge.s32.totalorder %v1016, 1
      %vm1049 = vcmp.ge.s32.totalorder %v1017, 1
      %vm1050 = vcmp.ge.s32.totalorder %v1018, 1
      %vm1051 = vcmp.ge.s32.totalorder %v1019, 1
      %vm1052 = vcmp.ge.s32.totalorder %v1020, 1
      %vm1053 = vcmp.ge.s32.totalorder %v1021, 1
      %vm1054 = vcmp.ge.s32.totalorder %v1022, 1
      %vm1055 = vcmp.ge.s32.totalorder %v1023, 1
      %vm1056 = vcmp.ge.s32.totalorder %v1024, 1
      %vm1057 = vcmp.ge.s32.totalorder %v1025, 1
      %vm1058 = vcmp.ge.s32.totalorder %v1026, 1
      %vm1059 = vcmp.ge.s32.totalorder %v1027, 1
      %vm1060 = vcmp.ge.s32.totalorder %v1028, 1
      %vm1061 = vcmp.ge.s32.totalorder %v1029, 1
      %vm1062 = vcmp.ge.s32.totalorder %v1030, 1
      %vm1063 = vcmp.ge.s32.totalorder %v1031, 1
      %vm1064 = vcmp.ge.s32.totalorder %v1032, 1
      %v1065 = vsel %vm1033, 1, 0
      %v1066 = vsel %vm1034, 1, 0
      %v1067 = vsel %vm1035, 1, 0
      %v1068 = vsel %vm1036, 1, 0
      %v1069 = vsel %vm1037, 1, 0
      %v1070 = vsel %vm1038, 1, 0
      %v1071 = vsel %vm1039, 1, 0
      %v1072 = vsel %vm1040, 1, 0
      %v1073 = vsel %vm1041, 1, 0
      %v1074 = vsel %vm1042, 1, 0
      %v1075 = vsel %vm1043, 1, 0
      %v1076 = vsel %vm1044, 1, 0
      %v1077 = vsel %vm1045, 1, 0
      %v1078 = vsel %vm1046, 1, 0
      %v1079 = vsel %vm1047, 1, 0
      %v1080 = vsel %vm1048, 1, 0
      %v1081 = vsel %vm1049, 1, 0
      %v1082 = vsel %vm1050, 1, 0
      %v1083 = vsel %vm1051, 1, 0
      %v1084 = vsel %vm1052, 1, 0
      %v1085 = vsel %vm1053, 1, 0
      %v1086 = vsel %vm1054, 1, 0
      %v1087 = vsel %vm1055, 1, 0
      %v1088 = vsel %vm1056, 1, 0
      %v1089 = vsel %vm1057, 1, 0
      %v1090 = vsel %vm1058, 1, 0
      %v1091 = vsel %vm1059, 1, 0
      %v1092 = vsel %vm1060, 1, 0
      %v1093 = vsel %vm1061, 1, 0
      %v1094 = vsel %vm1062, 1, 0
      %v1095 = vsel %vm1063, 1, 0
      %v1096 = vsel %vm1064, 1, 0
      %v1097 = vcvt.s32.f32 %v1065
      %v1098 = vcvt.s32.f32 %v1066
      %v1099 = vcvt.s32.f32 %v1067
      %v1100 = vcvt.s32.f32 %v1068
      %v1101 = vcvt.s32.f32 %v1069
      %v1102 = vcvt.s32.f32 %v1070
      %v1103 = vcvt.s32.f32 %v1071
      %v1104 = vcvt.s32.f32 %v1072
      %v1105 = vcvt.s32.f32 %v1073
      %v1106 = vcvt.s32.f32 %v1074
      %v1107 = vcvt.s32.f32 %v1075
      %v1108 = vcvt.s32.f32 %v1076
      %v1109 = vcvt.s32.f32 %v1077
      %v1110 = vcvt.s32.f32 %v1078
      %v1111 = vcvt.s32.f32 %v1079
      %v1112 = vcvt.s32.f32 %v1080
      %v1113 = vcvt.s32.f32 %v1081
      %v1114 = vcvt.s32.f32 %v1082
      %v1115 = vcvt.s32.f32 %v1083
      %v1116 = vcvt.s32.f32 %v1084
      %v1117 = vcvt.s32.f32 %v1085
      %v1118 = vcvt.s32.f32 %v1086
      %v1119 = vcvt.s32.f32 %v1087
      %v1120 = vcvt.s32.f32 %v1088
      %v1121 = vcvt.s32.f32 %v1089
      %v1122 = vcvt.s32.f32 %v1090
      %v1123 = vcvt.s32.f32 %v1091
      %v1124 = vcvt.s32.f32 %v1092
      %v1125 = vcvt.s32.f32 %v1093
      %v1126 = vcvt.s32.f32 %v1094
      %v1127 = vcvt.s32.f32 %v1095
      %v1128 = vcvt.s32.f32 %v1096
      %vm1129 = vcmp.le.s32.totalorder %v1001, 14
      %vm1130 = vcmp.le.s32.totalorder %v1002, 14
      %vm1131 = vcmp.le.s32.totalorder %v1003, 14
      %vm1132 = vcmp.le.s32.totalorder %v1004, 14
      %vm1133 = vcmp.le.s32.totalorder %v1005, 14
      %vm1134 = vcmp.le.s32.totalorder %v1006, 14
      %vm1135 = vcmp.le.s32.totalorder %v1007, 14
      %vm1136 = vcmp.le.s32.totalorder %v1008, 14
      %vm1137 = vcmp.le.s32.totalorder %v1009, 14
      %vm1138 = vcmp.le.s32.totalorder %v1010, 14
      %vm1139 = vcmp.le.s32.totalorder %v1011, 14
      %vm1140 = vcmp.le.s32.totalorder %v1012, 14
      %vm1141 = vcmp.le.s32.totalorder %v1013, 14
      %vm1142 = vcmp.le.s32.totalorder %v1014, 14
      %vm1143 = vcmp.le.s32.totalorder %v1015, 14
      %vm1144 = vcmp.le.s32.totalorder %v1016, 14
      %vm1145 = vcmp.le.s32.totalorder %v1017, 14
      %vm1146 = vcmp.le.s32.totalorder %v1018, 14
      %vm1147 = vcmp.le.s32.totalorder %v1019, 14
      %vm1148 = vcmp.le.s32.totalorder %v1020, 14
      %vm1149 = vcmp.le.s32.totalorder %v1021, 14
      %vm1150 = vcmp.le.s32.totalorder %v1022, 14
      %vm1151 = vcmp.le.s32.totalorder %v1023, 14
      %vm1152 = vcmp.le.s32.totalorder %v1024, 14
      %vm1153 = vcmp.le.s32.totalorder %v1025, 14
      %vm1154 = vcmp.le.s32.totalorder %v1026, 14
      %vm1155 = vcmp.le.s32.totalorder %v1027, 14
      %vm1156 = vcmp.le.s32.totalorder %v1028, 14
      %vm1157 = vcmp.le.s32.totalorder %v1029, 14
      %vm1158 = vcmp.le.s32.totalorder %v1030, 14
      %vm1159 = vcmp.le.s32.totalorder %v1031, 14
      %vm1160 = vcmp.le.s32.totalorder %v1032, 14
      %v1161 = vsel %vm1129, 1, 0
      %v1162 = vsel %vm1130, 1, 0
      %v1163 = vsel %vm1131, 1, 0
      %v1164 = vsel %vm1132, 1, 0
      %v1165 = vsel %vm1133, 1, 0
      %v1166 = vsel %vm1134, 1, 0
      %v1167 = vsel %vm1135, 1, 0
      %v1168 = vsel %vm1136, 1, 0
      %v1169 = vsel %vm1137, 1, 0
      %v1170 = vsel %vm1138, 1, 0
      %v1171 = vsel %vm1139, 1, 0
      %v1172 = vsel %vm1140, 1, 0
      %v1173 = vsel %vm1141, 1, 0
      %v1174 = vsel %vm1142, 1, 0
      %v1175 = vsel %vm1143, 1, 0
      %v1176 = vsel %vm1144, 1, 0
      %v1177 = vsel %vm1145, 1, 0
      %v1178 = vsel %vm1146, 1, 0
      %v1179 = vsel %vm1147, 1, 0
      %v1180 = vsel %vm1148, 1, 0
      %v1181 = vsel %vm1149, 1, 0
      %v1182 = vsel %vm1150, 1, 0
      %v1183 = vsel %vm1151, 1, 0
      %v1184 = vsel %vm1152, 1, 0
      %v1185 = vsel %vm1153, 1, 0
      %v1186 = vsel %vm1154, 1, 0
      %v1187 = vsel %vm1155, 1, 0
      %v1188 = vsel %vm1156, 1, 0
      %v1189 = vsel %vm1157, 1, 0
      %v1190 = vsel %vm1158, 1, 0
      %v1191 = vsel %vm1159, 1, 0
      %v1192 = vsel %vm1160, 1, 0
      %v1193 = vcvt.s32.f32 %v1161
      %v1194 = vcvt.s32.f32 %v1162
      %v1195 = vcvt.s32.f32 %v1163
      %v1196 = vcvt.s32.f32 %v1164
      %v1197 = vcvt.s32.f32 %v1165
      %v1198 = vcvt.s32.f32 %v1166
      %v1199 = vcvt.s32.f32 %v1167
      %v1200 = vcvt.s32.f32 %v1168
      %v1201 = vcvt.s32.f32 %v1169
      %v1202 = vcvt.s32.f32 %v1170
      %v1203 = vcvt.s32.f32 %v1171
      %v1204 = vcvt.s32.f32 %v1172
      %v1205 = vcvt.s32.f32 %v1173
      %v1206 = vcvt.s32.f32 %v1174
      %v1207 = vcvt.s32.f32 %v1175
      %v1208 = vcvt.s32.f32 %v1176
      %v1209 = vcvt.s32.f32 %v1177
      %v1210 = vcvt.s32.f32 %v1178
      %v1211 = vcvt.s32.f32 %v1179
      %v1212 = vcvt.s32.f32 %v1180
      %v1213 = vcvt.s32.f32 %v1181
      %v1214 = vcvt.s32.f32 %v1182
      %v1215 = vcvt.s32.f32 %v1183
      %v1216 = vcvt.s32.f32 %v1184
      %v1217 = vcvt.s32.f32 %v1185
      %v1218 = vcvt.s32.f32 %v1186
      %v1219 = vcvt.s32.f32 %v1187
      %v1220 = vcvt.s32.f32 %v1188
      %v1221 = vcvt.s32.f32 %v1189
      %v1222 = vcvt.s32.f32 %v1190
      %v1223 = vcvt.s32.f32 %v1191
      %v1224 = vcvt.s32.f32 %v1192
      %v1225 = vld [vmem:[#allocation2] sm:$0xff]
      %v1226 = vld [vmem:[#allocation2 + $0x8] sm:$0xff]
      %v1227 = vld [vmem:[#allocation2 + $0x10] sm:$0xff]
      %v1228 = vld [vmem:[#allocation2 + $0x18] sm:$0xff]
      %v1229 = vld [vmem:[#allocation2 + $0x20] sm:$0xff]
      %v1230 = vld [vmem:[#allocation2 + $0x28] sm:$0xff]
      %v1231 = vld [vmem:[#allocation2 + $0x30] sm:$0xff]
      %v1232 = vld [vmem:[#allocation2 + $0x38] sm:$0xff]
      %v1233 = vld [vmem:[#allocation2 + $0x40] sm:$0xff]
      %v1234 = vld [vmem:[#allocation2 + $0x48] sm:$0xff]
      %v1235 = vld [vmem:[#allocation2 + $0x50] sm:$0xff]
      %v1236 = vld [vmem:[#allocation2 + $0x58] sm:$0xff]
      %v1237 = vld [vmem:[#allocation2 + $0x60] sm:$0xff]
      %v1238 = vld [vmem:[#allocation2 + $0x68] sm:$0xff]
      %v1239 = vld [vmem:[#allocation2 + $0x70] sm:$0xff]
      %v1240 = vld [vmem:[#allocation2 + $0x78] sm:$0xff]
      %v1241 = vld [vmem:[#allocation2 + $0x80] sm:$0xff]
      %v1242 = vld [vmem:[#allocation2 + $0x88] sm:$0xff]
      %v1243 = vld [vmem:[#allocation2 + $0x90] sm:$0xff]
      %v1244 = vld [vmem:[#allocation2 + $0x98] sm:$0xff]
      %v1245 = vld [vmem:[#allocation2 + $0xa0] sm:$0xff]
      %v1246 = vld [vmem:[#allocation2 + $0xa8] sm:$0xff]
      %v1247 = vld [vmem:[#allocation2 + $0xb0] sm:$0xff]
      %v1248 = vld [vmem:[#allocation2 + $0xb8] sm:$0xff]
      %v1249 = vld [vmem:[#allocation2 + $0xc0] sm:$0xff]
      %v1250 = vld [vmem:[#allocation2 + $0xc8] sm:$0xff]
      %v1251 = vld [vmem:[#allocation2 + $0xd0] sm:$0xff]
      %v1252 = vld [vmem:[#allocation2 + $0xd8] sm:$0xff]
      %v1253 = vld [vmem:[#allocation2 + $0xe0] sm:$0xff]
      %v1254 = vld [vmem:[#allocation2 + $0xe8] sm:$0xff]
      %v1255 = vld [vmem:[#allocation2 + $0xf0] sm:$0xff]
      %v1256 = vld [vmem:[#allocation2 + $0xf8] sm:$0xff]
      %v1257 = vmul.f32 %v1225, %v1097
      %v1258 = vmul.f32 %v1226, %v1098
      %v1259 = vmul.f32 %v1227, %v1099
      %v1260 = vmul.f32 %v1228, %v1100
      %v1261 = vmul.f32 %v1229, %v1101
      %v1262 = vmul.f32 %v1230, %v1102
      %v1263 = vmul.f32 %v1231, %v1103
      %v1264 = vmul.f32 %v1232, %v1104
      %v1265 = vmul.f32 %v1233, %v1105
      %v1266 = vmul.f32 %v1234, %v1106
      %v1267 = vmul.f32 %v1235, %v1107
      %v1268 = vmul.f32 %v1236, %v1108
      %v1269 = vmul.f32 %v1237, %v1109
      %v1270 = vmul.f32 %v1238, %v1110
      %v1271 = vmul.f32 %v1239, %v1111
      %v1272 = vmul.f32 %v1240, %v1112
      %v1273 = vmul.f32 %v1241, %v1113
      %v1274 = vmul.f32 %v1242, %v1114
      %v1275 = vmul.f32 %v1243, %v1115
      %v1276 = vmul.f32 %v1244, %v1116
      %v1277 = vmul.f32 %v1245, %v1117
      %v1278 = vmul.f32 %v1246, %v1118
      %v1279 = vmul.f32 %v1247, %v1119
      %v1280 = vmul.f32 %v1248, %v1120
      %v1281 = vmul.f32 %v1249, %v1121
      %v1282 = vmul.f32 %v1250, %v1122
      %v1283 = vmul.f32 %v1251, %v1123
      %v1284 = vmul.f32 %v1252, %v1124
      %v1285 = vmul.f32 %v1253, %v1125
      %v1286 = vmul.f32 %v1254, %v1126
      %v1287 = vmul.f32 %v1255, %v1127
      %v1288 = vmul.f32 %v1256, %v1128
      %v1289 = vperm.slane %v614, 0
      %v1290 = vmul.f32 %v1257, %v1289
      %v1291 = vmul.f32 %v1258, %v1289
      %v1292 = vmul.f32 %v1259, %v1289
      %v1293 = vmul.f32 %v1260, %v1289
      %v1294 = vmul.f32 %v1261, %v1289
      %v1295 = vmul.f32 %v1262, %v1289
      %v1296 = vmul.f32 %v1263, %v1289
      %v1297 = vmul.f32 %v1264, %v1289
      %v1298 = vmul.f32 %v1265, %v1289
      %v1299 = vmul.f32 %v1266, %v1289
      %v1300 = vmul.f32 %v1267, %v1289
      %v1301 = vmul.f32 %v1268, %v1289
      %v1302 = vmul.f32 %v1269, %v1289
      %v1303 = vmul.f32 %v1270, %v1289
      %v1304 = vmul.f32 %v1271, %v1289
      %v1305 = vmul.f32 %v1272, %v1289
      %v1306 = vmul.f32 %v1273, %v1289
      %v1307 = vmul.f32 %v1274, %v1289
      %v1308 = vmul.f32 %v1275, %v1289
      %v1309 = vmul.f32 %v1276, %v1289
      %v1310 = vmul.f32 %v1277, %v1289
      %v1311 = vmul.f32 %v1278, %v1289
      %v1312 = vmul.f32 %v1279, %v1289
      %v1313 = vmul.f32 %v1280, %v1289
      %v1314 = vmul.f32 %v1281, %v1289
      %v1315 = vmul.f32 %v1282, %v1289
      %v1316 = vmul.f32 %v1283, %v1289
      %v1317 = vmul.f32 %v1284, %v1289
      %v1318 = vmul.f32 %v1285, %v1289
      %v1319 = vmul.f32 %v1286, %v1289
      %v1320 = vmul.f32 %v1287, %v1289
      %v1321 = vmul.f32 %v1288, %v1289
      %v1322 = vadd.f32 %v1290, 0.0
      %v1323 = vadd.f32 %v1291, 0.0
      %v1324 = vadd.f32 %v1292, 0.0
      %v1325 = vadd.f32 %v1293, 0.0
      %v1326 = vadd.f32 %v1294, 0.0
      %v1327 = vadd.f32 %v1295, 0.0
      %v1328 = vadd.f32 %v1296, 0.0
      %v1329 = vadd.f32 %v1297, 0.0
      %v1330 = vadd.f32 %v1298, 0.0
      %v1331 = vadd.f32 %v1299, 0.0
      %v1332 = vadd.f32 %v1300, 0.0
      %v1333 = vadd.f32 %v1301, 0.0
      %v1334 = vadd.f32 %v1302, 0.0
      %v1335 = vadd.f32 %v1303, 0.0
      %v1336 = vadd.f32 %v1304, 0.0
      %v1337 = vadd.f32 %v1305, 0.0
      %v1338 = vadd.f32 %v1306, 0.0
      %v1339 = vadd.f32 %v1307, 0.0
      %v1340 = vadd.f32 %v1308, 0.0
      %v1341 = vadd.f32 %v1309, 0.0
      %v1342 = vadd.f32 %v1310, 0.0
      %v1343 = vadd.f32 %v1311, 0.0
      %v1344 = vadd.f32 %v1312, 0.0
      %v1345 = vadd.f32 %v1313, 0.0
      %v1346 = vadd.f32 %v1314, 0.0
      %v1347 = vadd.f32 %v1315, 0.0
      %v1348 = vadd.f32 %v1316, 0.0
      %v1349 = vadd.f32 %v1317, 0.0
      %v1350 = vadd.f32 %v1318, 0.0
      %v1351 = vadd.f32 %v1319, 0.0
      %v1352 = vadd.f32 %v1320, 0.0
      %v1353 = vadd.f32 %v1321, 0.0
      %v1354 = vld [vmem:[#allocation2 + $0x1] sm:$0xff]
      %v1355 = vld [vmem:[#allocation2 + $0x9] sm:$0xff]
      %v1356 = vld [vmem:[#allocation2 + $0x11] sm:$0xff]
      %v1357 = vld [vmem:[#allocation2 + $0x19] sm:$0xff]
      %v1358 = vld [vmem:[#allocation2 + $0x21] sm:$0xff]
      %v1359 = vld [vmem:[#allocation2 + $0x29] sm:$0xff]
      %v1360 = vld [vmem:[#allocation2 + $0x31] sm:$0xff]
      %v1361 = vld [vmem:[#allocation2 + $0x39] sm:$0xff]
      %v1362 = vld [vmem:[#allocation2 + $0x41] sm:$0xff]
      %v1363 = vld [vmem:[#allocation2 + $0x49] sm:$0xff]
      %v1364 = vld [vmem:[#allocation2 + $0x51] sm:$0xff]
      %v1365 = vld [vmem:[#allocation2 + $0x59] sm:$0xff]
      %v1366 = vld [vmem:[#allocation2 + $0x61] sm:$0xff]
      %v1367 = vld [vmem:[#allocation2 + $0x69] sm:$0xff]
      %v1368 = vld [vmem:[#allocation2 + $0x71] sm:$0xff]
      %v1369 = vld [vmem:[#allocation2 + $0x79] sm:$0xff]
      %v1370 = vld [vmem:[#allocation2 + $0x81] sm:$0xff]
      %v1371 = vld [vmem:[#allocation2 + $0x89] sm:$0xff]
      %v1372 = vld [vmem:[#allocation2 + $0x91] sm:$0xff]
      %v1373 = vld [vmem:[#allocation2 + $0x99] sm:$0xff]
      %v1374 = vld [vmem:[#allocation2 + $0xa1] sm:$0xff]
      %v1375 = vld [vmem:[#allocation2 + $0xa9] sm:$0xff]
      %v1376 = vld [vmem:[#allocation2 + $0xb1] sm:$0xff]
      %v1377 = vld [vmem:[#allocation2 + $0xb9] sm:$0xff]
      %v1378 = vld [vmem:[#allocation2 + $0xc1] sm:$0xff]
      %v1379 = vld [vmem:[#allocation2 + $0xc9] sm:$0xff]
      %v1380 = vld [vmem:[#allocation2 + $0xd1] sm:$0xff]
      %v1381 = vld [vmem:[#allocation2 + $0xd9] sm:$0xff]
      %v1382 = vld [vmem:[#allocation2 + $0xe1] sm:$0xff]
      %v1383 = vld [vmem:[#allocation2 + $0xe9] sm:$0xff]
      %v1384 = vld [vmem:[#allocation2 + $0xf1] sm:$0xff]
      %v1385 = vld [vmem:[#allocation2 + $0xf9] sm:$0xff]
      %v1386 = vperm.slane %v614, 1
      %v1387 = vmul.f32 %v1354, %v1386
      %v1388 = vmul.f32 %v1355, %v1386
      %v1389 = vmul.f32 %v1356, %v1386
      %v1390 = vmul.f32 %v1357, %v1386
      %v1391 = vmul.f32 %v1358, %v1386
      %v1392 = vmul.f32 %v1359, %v1386
      %v1393 = vmul.f32 %v1360, %v1386
      %v1394 = vmul.f32 %v1361, %v1386
      %v1395 = vmul.f32 %v1362, %v1386
      %v1396 = vmul.f32 %v1363, %v1386
      %v1397 = vmul.f32 %v1364, %v1386
      %v1398 = vmul.f32 %v1365, %v1386
      %v1399 = vmul.f32 %v1366, %v1386
      %v1400 = vmul.f32 %v1367, %v1386
      %v1401 = vmul.f32 %v1368, %v1386
      %v1402 = vmul.f32 %v1369, %v1386
      %v1403 = vmul.f32 %v1370, %v1386
      %v1404 = vmul.f32 %v1371, %v1386
      %v1405 = vmul.f32 %v1372, %v1386
      %v1406 = vmul.f32 %v1373, %v1386
      %v1407 = vmul.f32 %v1374, %v1386
      %v1408 = vmul.f32 %v1375, %v1386
      %v1409 = vmul.f32 %v1376, %v1386
      %v1410 = vmul.f32 %v1377, %v1386
      %v1411 = vmul.f32 %v1378, %v1386
      %v1412 = vmul.f32 %v1379, %v1386
      %v1413 = vmul.f32 %v1380, %v1386
      %v1414 = vmul.f32 %v1381, %v1386
      %v1415 = vmul.f32 %v1382, %v1386
      %v1416 = vmul.f32 %v1383, %v1386
      %v1417 = vmul.f32 %v1384, %v1386
      %v1418 = vmul.f32 %v1385, %v1386
      %v1419 = vadd.f32 %v1322, %v1387
      %v1420 = vadd.f32 %v1323, %v1388
      %v1421 = vadd.f32 %v1324, %v1389
      %v1422 = vadd.f32 %v1325, %v1390
      %v1423 = vadd.f32 %v1326, %v1391
      %v1424 = vadd.f32 %v1327, %v1392
      %v1425 = vadd.f32 %v1328, %v1393
      %v1426 = vadd.f32 %v1329, %v1394
      %v1427 = vadd.f32 %v1330, %v1395
      %v1428 = vadd.f32 %v1331, %v1396
      %v1429 = vadd.f32 %v1332, %v1397
      %v1430 = vadd.f32 %v1333, %v1398
      %v1431 = vadd.f32 %v1334, %v1399
      %v1432 = vadd.f32 %v1335, %v1400
      %v1433 = vadd.f32 %v1336, %v1401
      %v1434 = vadd.f32 %v1337, %v1402
      %v1435 = vadd.f32 %v1338, %v1403
      %v1436 = vadd.f32 %v1339, %v1404
      %v1437 = vadd.f32 %v1340, %v1405
      %v1438 = vadd.f32 %v1341, %v1406
      %v1439 = vadd.f32 %v1342, %v1407
      %v1440 = vadd.f32 %v1343, %v1408
      %v1441 = vadd.f32 %v1344, %v1409
      %v1442 = vadd.f32 %v1345, %v1410
      %v1443 = vadd.f32 %v1346, %v1411
      %v1444 = vadd.f32 %v1347, %v1412
      %v1445 = vadd.f32 %v1348, %v1413
      %v1446 = vadd.f32 %v1349, %v1414
      %v1447 = vadd.f32 %v1350, %v1415
      %v1448 = vadd.f32 %v1351, %v1416
      %v1449 = vadd.f32 %v1352, %v1417
      %v1450 = vadd.f32 %v1353, %v1418
      %v1451 = vld [vmem:[#allocation2 + $0x2] sm:$0xff]
      %v1452 = vld [vmem:[#allocation2 + $0xa] sm:$0xff]
      %v1453 = vld [vmem:[#allocation2 + $0x12] sm:$0xff]
      %v1454 = vld [vmem:[#allocation2 + $0x1a] sm:$0xff]
      %v1455 = vld [vmem:[#allocation2 + $0x22] sm:$0xff]
      %v1456 = vld [vmem:[#allocation2 + $0x2a] sm:$0xff]
      %v1457 = vld [vmem:[#allocation2 + $0x32] sm:$0xff]
      %v1458 = vld [vmem:[#allocation2 + $0x3a] sm:$0xff]
      %v1459 = vld [vmem:[#allocation2 + $0x42] sm:$0xff]
      %v1460 = vld [vmem:[#allocation2 + $0x4a] sm:$0xff]
      %v1461 = vld [vmem:[#allocation2 + $0x52] sm:$0xff]
      %v1462 = vld [vmem:[#allocation2 + $0x5a] sm:$0xff]
      %v1463 = vld [vmem:[#allocation2 + $0x62] sm:$0xff]
      %v1464 = vld [vmem:[#allocation2 + $0x6a] sm:$0xff]
      %v1465 = vld [vmem:[#allocation2 + $0x72] sm:$0xff]
      %v1466 = vld [vmem:[#allocation2 + $0x7a] sm:$0xff]
      %v1467 = vld [vmem:[#allocation2 + $0x82] sm:$0xff]
      %v1468 = vld [vmem:[#allocation2 + $0x8a] sm:$0xff]
      %v1469 = vld [vmem:[#allocation2 + $0x92] sm:$0xff]
      %v1470 = vld [vmem:[#allocation2 + $0x9a] sm:$0xff]
      %v1471 = vld [vmem:[#allocation2 + $0xa2] sm:$0xff]
      %v1472 = vld [vmem:[#allocation2 + $0xaa] sm:$0xff]
      %v1473 = vld [vmem:[#allocation2 + $0xb2] sm:$0xff]
      %v1474 = vld [vmem:[#allocation2 + $0xba] sm:$0xff]
      %v1475 = vld [vmem:[#allocation2 + $0xc2] sm:$0xff]
      %v1476 = vld [vmem:[#allocation2 + $0xca] sm:$0xff]
      %v1477 = vld [vmem:[#allocation2 + $0xd2] sm:$0xff]
      %v1478 = vld [vmem:[#allocation2 + $0xda] sm:$0xff]
      %v1479 = vld [vmem:[#allocation2 + $0xe2] sm:$0xff]
      %v1480 = vld [vmem:[#allocation2 + $0xea] sm:$0xff]
      %v1481 = vld [vmem:[#allocation2 + $0xf2] sm:$0xff]
      %v1482 = vld [vmem:[#allocation2 + $0xfa] sm:$0xff]
      %v1483 = vmul.f32 %v1451, %v1193
      %v1484 = vmul.f32 %v1452, %v1194
      %v1485 = vmul.f32 %v1453, %v1195
      %v1486 = vmul.f32 %v1454, %v1196
      %v1487 = vmul.f32 %v1455, %v1197
      %v1488 = vmul.f32 %v1456, %v1198
      %v1489 = vmul.f32 %v1457, %v1199
      %v1490 = vmul.f32 %v1458, %v1200
      %v1491 = vmul.f32 %v1459, %v1201
      %v1492 = vmul.f32 %v1460, %v1202
      %v1493 = vmul.f32 %v1461, %v1203
      %v1494 = vmul.f32 %v1462, %v1204
      %v1495 = vmul.f32 %v1463, %v1205
      %v1496 = vmul.f32 %v1464, %v1206
      %v1497 = vmul.f32 %v1465, %v1207
      %v1498 = vmul.f32 %v1466, %v1208
      %v1499 = vmul.f32 %v1467, %v1209
      %v1500 = vmul.f32 %v1468, %v1210
      %v1501 = vmul.f32 %v1469, %v1211
      %v1502 = vmul.f32 %v1470, %v1212
      %v1503 = vmul.f32 %v1471, %v1213
      %v1504 = vmul.f32 %v1472, %v1214
      %v1505 = vmul.f32 %v1473, %v1215
      %v1506 = vmul.f32 %v1474, %v1216
      %v1507 = vmul.f32 %v1475, %v1217
      %v1508 = vmul.f32 %v1476, %v1218
      %v1509 = vmul.f32 %v1477, %v1219
      %v1510 = vmul.f32 %v1478, %v1220
      %v1511 = vmul.f32 %v1479, %v1221
      %v1512 = vmul.f32 %v1480, %v1222
      %v1513 = vmul.f32 %v1481, %v1223
      %v1514 = vmul.f32 %v1482, %v1224
      %v1515 = vperm.slane %v614, 2
      %v1516 = vmul.f32 %v1483, %v1515
      %v1517 = vmul.f32 %v1484, %v1515
      %v1518 = vmul.f32 %v1485, %v1515
      %v1519 = vmul.f32 %v1486, %v1515
      %v1520 = vmul.f32 %v1487, %v1515
      %v1521 = vmul.f32 %v1488, %v1515
      %v1522 = vmul.f32 %v1489, %v1515
      %v1523 = vmul.f32 %v1490, %v1515
      %v1524 = vmul.f32 %v1491, %v1515
      %v1525 = vmul.f32 %v1492, %v1515
      %v1526 = vmul.f32 %v1493, %v1515
      %v1527 = vmul.f32 %v1494, %v1515
      %v1528 = vmul.f32 %v1495, %v1515
      %v1529 = vmul.f32 %v1496, %v1515
      %v1530 = vmul.f32 %v1497, %v1515
      %v1531 = vmul.f32 %v1498, %v1515
      %v1532 = vmul.f32 %v1499, %v1515
      %v1533 = vmul.f32 %v1500, %v1515
      %v1534 = vmul.f32 %v1501, %v1515
      %v1535 = vmul.f32 %v1502, %v1515
      %v1536 = vmul.f32 %v1503, %v1515
      %v1537 = vmul.f32 %v1504, %v1515
      %v1538 = vmul.f32 %v1505, %v1515
      %v1539 = vmul.f32 %v1506, %v1515
      %v1540 = vmul.f32 %v1507, %v1515
      %v1541 = vmul.f32 %v1508, %v1515
      %v1542 = vmul.f32 %v1509, %v1515
      %v1543 = vmul.f32 %v1510, %v1515
      %v1544 = vmul.f32 %v1511, %v1515
      %v1545 = vmul.f32 %v1512, %v1515
      %v1546 = vmul.f32 %v1513, %v1515
      %v1547 = vmul.f32 %v1514, %v1515
      %v1548 = vadd.f32 %v1419, %v1516
      %v1549 = vadd.f32 %v1420, %v1517
      %v1550 = vadd.f32 %v1421, %v1518
      %v1551 = vadd.f32 %v1422, %v1519
      %v1552 = vadd.f32 %v1423, %v1520
      %v1553 = vadd.f32 %v1424, %v1521
      %v1554 = vadd.f32 %v1425, %v1522
      %v1555 = vadd.f32 %v1426, %v1523
      %v1556 = vadd.f32 %v1427, %v1524
      %v1557 = vadd.f32 %v1428, %v1525
      %v1558 = vadd.f32 %v1429, %v1526
      %v1559 = vadd.f32 %v1430, %v1527
      %v1560 = vadd.f32 %v1431, %v1528
      %v1561 = vadd.f32 %v1432, %v1529
      %v1562 = vadd.f32 %v1433, %v1530
      %v1563 = vadd.f32 %v1434, %v1531
      %v1564 = vadd.f32 %v1435, %v1532
      %v1565 = vadd.f32 %v1436, %v1533
      %v1566 = vadd.f32 %v1437, %v1534
      %v1567 = vadd.f32 %v1438, %v1535
      %v1568 = vadd.f32 %v1439, %v1536
      %v1569 = vadd.f32 %v1440, %v1537
      %v1570 = vadd.f32 %v1441, %v1538
      %v1571 = vadd.f32 %v1442, %v1539
      %v1572 = vadd.f32 %v1443, %v1540
      %v1573 = vadd.f32 %v1444, %v1541
      %v1574 = vadd.f32 %v1445, %v1542
      %v1575 = vadd.f32 %v1446, %v1543
      %v1576 = vadd.f32 %v1447, %v1544
      %v1577 = vadd.f32 %v1448, %v1545
      %v1578 = vadd.f32 %v1449, %v1546
      %v1579 = vadd.f32 %v1450, %v1547
      %v1580 = vld [vmem:[#allocation2 + $0x100] sm:$0xff]
      %v1581 = vld [vmem:[#allocation2 + $0x108] sm:$0xff]
      %v1582 = vmul.f32 %v1227, %v1097
      %v1583 = vmul.f32 %v1228, %v1098
      %v1584 = vmul.f32 %v1229, %v1099
      %v1585 = vmul.f32 %v1230, %v1100
      %v1586 = vmul.f32 %v1231, %v1101
      %v1587 = vmul.f32 %v1232, %v1102
      %v1588 = vmul.f32 %v1233, %v1103
      %v1589 = vmul.f32 %v1234, %v1104
      %v1590 = vmul.f32 %v1235, %v1105
      %v1591 = vmul.f32 %v1236, %v1106
      %v1592 = vmul.f32 %v1237, %v1107
      %v1593 = vmul.f32 %v1238, %v1108
      %v1594 = vmul.f32 %v1239, %v1109
      %v1595 = vmul.f32 %v1240, %v1110
      %v1596 = vmul.f32 %v1241, %v1111
      %v1597 = vmul.f32 %v1242, %v1112
      %v1598 = vmul.f32 %v1243, %v1113
      %v1599 = vmul.f32 %v1244, %v1114
      %v1600 = vmul.f32 %v1245, %v1115
      %v1601 = vmul.f32 %v1246, %v1116
      %v1602 = vmul.f32 %v1247, %v1117
      %v1603 = vmul.f32 %v1248, %v1118
      %v1604 = vmul.f32 %v1249, %v1119
      %v1605 = vmul.f32 %v1250, %v1120
      %v1606 = vmul.f32 %v1251, %v1121
      %v1607 = vmul.f32 %v1252, %v1122
      %v1608 = vmul.f32 %v1253, %v1123
      %v1609 = vmul.f32 %v1254, %v1124
      %v1610 = vmul.f32 %v1255, %v1125
      %v1611 = vmul.f32 %v1256, %v1126
      %v1612 = vmul.f32 %v1580, %v1127
      %v1613 = vmul.f32 %v1581, %v1128
      %v1614 = vperm.slane %v614, 3
      %v1615 = vmul.f32 %v1582, %v1614
      %v1616 = vmul.f32 %v1583, %v1614
      %v1617 = vmul.f32 %v1584, %v1614
      %v1618 = vmul.f32 %v1585, %v1614
      %v1619 = vmul.f32 %v1586, %v1614
      %v1620 = vmul.f32 %v1587, %v1614
      %v1621 = vmul.f32 %v1588, %v1614
      %v1622 = vmul.f32 %v1589, %v1614
      %v1623 = vmul.f32 %v1590, %v1614
      %v1624 = vmul.f32 %v1591, %v1614
      %v1625 = vmul.f32 %v1592, %v1614
      %v1626 = vmul.f32 %v1593, %v1614
      %v1627 = vmul.f32 %v1594, %v1614
      %v1628 = vmul.f32 %v1595, %v1614
      %v1629 = vmul.f32 %v1596, %v1614
      %v1630 = vmul.f32 %v1597, %v1614
      %v1631 = vmul.f32 %v1598, %v1614
      %v1632 = vmul.f32 %v1599, %v1614
      %v1633 = vmul.f32 %v1600, %v1614
      %v1634 = vmul.f32 %v1601, %v1614
      %v1635 = vmul.f32 %v1602, %v1614
      %v1636 = vmul.f32 %v1603, %v1614
      %v1637 = vmul.f32 %v1604, %v1614
      %v1638 = vmul.f32 %v1605, %v1614
      %v1639 = vmul.f32 %v1606, %v1614
      %v1640 = vmul.f32 %v1607, %v1614
      %v1641 = vmul.f32 %v1608, %v1614
      %v1642 = vmul.f32 %v1609, %v1614
      %v1643 = vmul.f32 %v1610, %v1614
      %v1644 = vmul.f32 %v1611, %v1614
      %v1645 = vmul.f32 %v1612, %v1614
      %v1646 = vmul.f32 %v1613, %v1614
      %v1647 = vadd.f32 %v1548, %v1615
      %v1648 = vadd.f32 %v1549, %v1616
      %v1649 = vadd.f32 %v1550, %v1617
      %v1650 = vadd.f32 %v1551, %v1618
      %v1651 = vadd.f32 %v1552, %v1619
      %v1652 = vadd.f32 %v1553, %v1620
      %v1653 = vadd.f32 %v1554, %v1621
      %v1654 = vadd.f32 %v1555, %v1622
      %v1655 = vadd.f32 %v1556, %v1623
      %v1656 = vadd.f32 %v1557, %v1624
      %v1657 = vadd.f32 %v1558, %v1625
      %v1658 = vadd.f32 %v1559, %v1626
      %v1659 = vadd.f32 %v1560, %v1627
      %v1660 = vadd.f32 %v1561, %v1628
      %v1661 = vadd.f32 %v1562, %v1629
      %v1662 = vadd.f32 %v1563, %v1630
      %v1663 = vadd.f32 %v1564, %v1631
      %v1664 = vadd.f32 %v1565, %v1632
      %v1665 = vadd.f32 %v1566, %v1633
      %v1666 = vadd.f32 %v1567, %v1634
      %v1667 = vadd.f32 %v1568, %v1635
      %v1668 = vadd.f32 %v1569, %v1636
      %v1669 = vadd.f32 %v1570, %v1637
      %v1670 = vadd.f32 %v1571, %v1638
      %v1671 = vadd.f32 %v1572, %v1639
      %v1672 = vadd.f32 %v1573, %v1640
      %v1673 = vadd.f32 %v1574, %v1641
      %v1674 = vadd.f32 %v1575, %v1642
      %v1675 = vadd.f32 %v1576, %v1643
      %v1676 = vadd.f32 %v1577, %v1644
      %v1677 = vadd.f32 %v1578, %v1645
      %v1678 = vadd.f32 %v1579, %v1646
      %v1679 = vld [vmem:[#allocation2 + $0x101] sm:$0xff]
      %v1680 = vld [vmem:[#allocation2 + $0x109] sm:$0xff]
      %v1681 = vperm.slane %v614, 4
      %v1682 = vmul.f32 %v1356, %v1681
      %v1683 = vmul.f32 %v1357, %v1681
      %v1684 = vmul.f32 %v1358, %v1681
      %v1685 = vmul.f32 %v1359, %v1681
      %v1686 = vmul.f32 %v1360, %v1681
      %v1687 = vmul.f32 %v1361, %v1681
      %v1688 = vmul.f32 %v1362, %v1681
      %v1689 = vmul.f32 %v1363, %v1681
      %v1690 = vmul.f32 %v1364, %v1681
      %v1691 = vmul.f32 %v1365, %v1681
      %v1692 = vmul.f32 %v1366, %v1681
      %v1693 = vmul.f32 %v1367, %v1681
      %v1694 = vmul.f32 %v1368, %v1681
      %v1695 = vmul.f32 %v1369, %v1681
      %v1696 = vmul.f32 %v1370, %v1681
      %v1697 = vmul.f32 %v1371, %v1681
      %v1698 = vmul.f32 %v1372, %v1681
      %v1699 = vmul.f32 %v1373, %v1681
      %v1700 = vmul.f32 %v1374, %v1681
      %v1701 = vmul.f32 %v1375, %v1681
      %v1702 = vmul.f32 %v1376, %v1681
      %v1703 = vmul.f32 %v1377, %v1681
      %v1704 = vmul.f32 %v1378, %v1681
      %v1705 = vmul.f32 %v1379, %v1681
      %v1706 = vmul.f32 %v1380, %v1681
      %v1707 = vmul.f32 %v1381, %v1681
      %v1708 = vmul.f32 %v1382, %v1681
      %v1709 = vmul.f32 %v1383, %v1681
      %v1710 = vmul.f32 %v1384, %v1681
      %v1711 = vmul.f32 %v1385, %v1681
      %v1712 = vmul.f32 %v1679, %v1681
      %v1713 = vmul.f32 %v1680, %v1681
      %v1714 = vadd.f32 %v1647, %v1682
      %v1715 = vadd.f32 %v1648, %v1683
      %v1716 = vadd.f32 %v1649, %v1684
      %v1717 = vadd.f32 %v1650, %v1685
      %v1718 = vadd.f32 %v1651, %v1686
      %v1719 = vadd.f32 %v1652, %v1687
      %v1720 = vadd.f32 %v1653, %v1688
      %v1721 = vadd.f32 %v1654, %v1689
      %v1722 = vadd.f32 %v1655, %v1690
      %v1723 = vadd.f32 %v1656, %v1691
      %v1724 = vadd.f32 %v1657, %v1692
      %v1725 = vadd.f32 %v1658, %v1693
      %v1726 = vadd.f32 %v1659, %v1694
      %v1727 = vadd.f32 %v1660, %v1695
      %v1728 = vadd.f32 %v1661, %v1696
      %v1729 = vadd.f32 %v1662, %v1697
      %v1730 = vadd.f32 %v1663, %v1698
      %v1731 = vadd.f32 %v1664, %v1699
      %v1732 = vadd.f32 %v1665, %v1700
      %v1733 = vadd.f32 %v1666, %v1701
      %v1734 = vadd.f32 %v1667, %v1702
      %v1735 = vadd.f32 %v1668, %v1703
      %v1736 = vadd.f32 %v1669, %v1704
      %v1737 = vadd.f32 %v1670, %v1705
      %v1738 = vadd.f32 %v1671, %v1706
      %v1739 = vadd.f32 %v1672, %v1707
      %v1740 = vadd.f32 %v1673, %v1708
      %v1741 = vadd.f32 %v1674, %v1709
      %v1742 = vadd.f32 %v1675, %v1710
      %v1743 = vadd.f32 %v1676, %v1711
      %v1744 = vadd.f32 %v1677, %v1712
      %v1745 = vadd.f32 %v1678, %v1713
      %v1746 = vld [vmem:[#allocation2 + $0x102] sm:$0xff]
      %v1747 = vld [vmem:[#allocation2 + $0x10a] sm:$0xff]
      %v1748 = vmul.f32 %v1453, %v1193
      %v1749 = vmul.f32 %v1454, %v1194
      %v1750 = vmul.f32 %v1455, %v1195
      %v1751 = vmul.f32 %v1456, %v1196
      %v1752 = vmul.f32 %v1457, %v1197
      %v1753 = vmul.f32 %v1458, %v1198
      %v1754 = vmul.f32 %v1459, %v1199
      %v1755 = vmul.f32 %v1460, %v1200
      %v1756 = vmul.f32 %v1461, %v1201
      %v1757 = vmul.f32 %v1462, %v1202
      %v1758 = vmul.f32 %v1463, %v1203
      %v1759 = vmul.f32 %v1464, %v1204
      %v1760 = vmul.f32 %v1465, %v1205
      %v1761 = vmul.f32 %v1466, %v1206
      %v1762 = vmul.f32 %v1467, %v1207
      %v1763 = vmul.f32 %v1468, %v1208
      %v1764 = vmul.f32 %v1469, %v1209
      %v1765 = vmul.f32 %v1470, %v1210
      %v1766 = vmul.f32 %v1471, %v1211
      %v1767 = vmul.f32 %v1472, %v1212
      %v1768 = vmul.f32 %v1473, %v1213
      %v1769 = vmul.f32 %v1474, %v1214
      %v1770 = vmul.f32 %v1475, %v1215
      %v1771 = vmul.f32 %v1476, %v1216
      %v1772 = vmul.f32 %v1477, %v1217
      %v1773 = vmul.f32 %v1478, %v1218
      %v1774 = vmul.f32 %v1479, %v1219
      %v1775 = vmul.f32 %v1480, %v1220
      %v1776 = vmul.f32 %v1481, %v1221
      %v1777 = vmul.f32 %v1482, %v1222
      %v1778 = vmul.f32 %v1746, %v1223
      %v1779 = vmul.f32 %v1747, %v1224
      %v1780 = vperm.slane %v614, 5
      %v1781 = vmul.f32 %v1748, %v1780
      %v1782 = vmul.f32 %v1749, %v1780
      %v1783 = vmul.f32 %v1750, %v1780
      %v1784 = vmul.f32 %v1751, %v1780
      %v1785 = vmul.f32 %v1752, %v1780
      %v1786 = vmul.f32 %v1753, %v1780
      %v1787 = vmul.f32 %v1754, %v1780
      %v1788 = vmul.f32 %v1755, %v1780
      %v1789 = vmul.f32 %v1756, %v1780
      %v1790 = vmul.f32 %v1757, %v1780
      %v1791 = vmul.f32 %v1758, %v1780
      %v1792 = vmul.f32 %v1759, %v1780
      %v1793 = vmul.f32 %v1760, %v1780
      %v1794 = vmul.f32 %v1761, %v1780
      %v1795 = vmul.f32 %v1762, %v1780
      %v1796 = vmul.f32 %v1763, %v1780
      %v1797 = vmul.f32 %v1764, %v1780
      %v1798 = vmul.f32 %v1765, %v1780
      %v1799 = vmul.f32 %v1766, %v1780
      %v1800 = vmul.f32 %v1767, %v1780
      %v1801 = vmul.f32 %v1768, %v1780
      %v1802 = vmul.f32 %v1769, %v1780
      %v1803 = vmul.f32 %v1770, %v1780
      %v1804 = vmul.f32 %v1771, %v1780
      %v1805 = vmul.f32 %v1772, %v1780
      %v1806 = vmul.f32 %v1773, %v1780
      %v1807 = vmul.f32 %v1774, %v1780
      %v1808 = vmul.f32 %v1775, %v1780
      %v1809 = vmul.f32 %v1776, %v1780
      %v1810 = vmul.f32 %v1777, %v1780
      %v1811 = vmul.f32 %v1778, %v1780
      %v1812 = vmul.f32 %v1779, %v1780
      %v1813 = vadd.f32 %v1714, %v1781
      %v1814 = vadd.f32 %v1715, %v1782
      %v1815 = vadd.f32 %v1716, %v1783
      %v1816 = vadd.f32 %v1717, %v1784
      %v1817 = vadd.f32 %v1718, %v1785
      %v1818 = vadd.f32 %v1719, %v1786
      %v1819 = vadd.f32 %v1720, %v1787
      %v1820 = vadd.f32 %v1721, %v1788
      %v1821 = vadd.f32 %v1722, %v1789
      %v1822 = vadd.f32 %v1723, %v1790
      %v1823 = vadd.f32 %v1724, %v1791
      %v1824 = vadd.f32 %v1725, %v1792
      %v1825 = vadd.f32 %v1726, %v1793
      %v1826 = vadd.f32 %v1727, %v1794
      %v1827 = vadd.f32 %v1728, %v1795
      %v1828 = vadd.f32 %v1729, %v1796
      %v1829 = vadd.f32 %v1730, %v1797
      %v1830 = vadd.f32 %v1731, %v1798
      %v1831 = vadd.f32 %v1732, %v1799
      %v1832 = vadd.f32 %v1733, %v1800
      %v1833 = vadd.f32 %v1734, %v1801
      %v1834 = vadd.f32 %v1735, %v1802
      %v1835 = vadd.f32 %v1736, %v1803
      %v1836 = vadd.f32 %v1737, %v1804
      %v1837 = vadd.f32 %v1738, %v1805
      %v1838 = vadd.f32 %v1739, %v1806
      %v1839 = vadd.f32 %v1740, %v1807
      %v1840 = vadd.f32 %v1741, %v1808
      %v1841 = vadd.f32 %v1742, %v1809
      %v1842 = vadd.f32 %v1743, %v1810
      %v1843 = vadd.f32 %v1744, %v1811
      %v1844 = vadd.f32 %v1745, %v1812
      %v1845 = vld [vmem:[#allocation2 + $0x110] sm:$0xff]
      %v1846 = vld [vmem:[#allocation2 + $0x118] sm:$0xff]
      %v1847 = vmul.f32 %v1229, %v1097
      %v1848 = vmul.f32 %v1230, %v1098
      %v1849 = vmul.f32 %v1231, %v1099
      %v1850 = vmul.f32 %v1232, %v1100
      %v1851 = vmul.f32 %v1233, %v1101
      %v1852 = vmul.f32 %v1234, %v1102
      %v1853 = vmul.f32 %v1235, %v1103
      %v1854 = vmul.f32 %v1236, %v1104
      %v1855 = vmul.f32 %v1237, %v1105
      %v1856 = vmul.f32 %v1238, %v1106
      %v1857 = vmul.f32 %v1239, %v1107
      %v1858 = vmul.f32 %v1240, %v1108
      %v1859 = vmul.f32 %v1241, %v1109
      %v1860 = vmul.f32 %v1242, %v1110
      %v1861 = vmul.f32 %v1243, %v1111
      %v1862 = vmul.f32 %v1244, %v1112
      %v1863 = vmul.f32 %v1245, %v1113
      %v1864 = vmul.f32 %v1246, %v1114
      %v1865 = vmul.f32 %v1247, %v1115
      %v1866 = vmul.f32 %v1248, %v1116
      %v1867 = vmul.f32 %v1249, %v1117
      %v1868 = vmul.f32 %v1250, %v1118
      %v1869 = vmul.f32 %v1251, %v1119
      %v1870 = vmul.f32 %v1252, %v1120
      %v1871 = vmul.f32 %v1253, %v1121
      %v1872 = vmul.f32 %v1254, %v1122
      %v1873 = vmul.f32 %v1255, %v1123
      %v1874 = vmul.f32 %v1256, %v1124
      %v1875 = vmul.f32 %v1580, %v1125
      %v1876 = vmul.f32 %v1581, %v1126
      %v1877 = vmul.f32 %v1845, %v1127
      %v1878 = vmul.f32 %v1846, %v1128
      %v1879 = vperm.slane %v614, 6
      %v1880 = vmul.f32 %v1847, %v1879
      %v1881 = vmul.f32 %v1848, %v1879
      %v1882 = vmul.f32 %v1849, %v1879
      %v1883 = vmul.f32 %v1850, %v1879
      %v1884 = vmul.f32 %v1851, %v1879
      %v1885 = vmul.f32 %v1852, %v1879
      %v1886 = vmul.f32 %v1853, %v1879
      %v1887 = vmul.f32 %v1854, %v1879
      %v1888 = vmul.f32 %v1855, %v1879
      %v1889 = vmul.f32 %v1856, %v1879
      %v1890 = vmul.f32 %v1857, %v1879
      %v1891 = vmul.f32 %v1858, %v1879
      %v1892 = vmul.f32 %v1859, %v1879
      %v1893 = vmul.f32 %v1860, %v1879
      %v1894 = vmul.f32 %v1861, %v1879
      %v1895 = vmul.f32 %v1862, %v1879
      %v1896 = vmul.f32 %v1863, %v1879
      %v1897 = vmul.f32 %v1864, %v1879
      %v1898 = vmul.f32 %v1865, %v1879
      %v1899 = vmul.f32 %v1866, %v1879
      %v1900 = vmul.f32 %v1867, %v1879
      %v1901 = vmul.f32 %v1868, %v1879
      %v1902 = vmul.f32 %v1869, %v1879
      %v1903 = vmul.f32 %v1870, %v1879
      %v1904 = vmul.f32 %v1871, %v1879
      %v1905 = vmul.f32 %v1872, %v1879
      %v1906 = vmul.f32 %v1873, %v1879
      %v1907 = vmul.f32 %v1874, %v1879
      %v1908 = vmul.f32 %v1875, %v1879
      %v1909 = vmul.f32 %v1876, %v1879
      %v1910 = vmul.f32 %v1877, %v1879
      %v1911 = vmul.f32 %v1878, %v1879
      %v1912 = vadd.f32 %v1813, %v1880
      %v1913 = vadd.f32 %v1814, %v1881
      %v1914 = vadd.f32 %v1815, %v1882
      %v1915 = vadd.f32 %v1816, %v1883
      %v1916 = vadd.f32 %v1817, %v1884
      %v1917 = vadd.f32 %v1818, %v1885
      %v1918 = vadd.f32 %v1819, %v1886
      %v1919 = vadd.f32 %v1820, %v1887
      %v1920 = vadd.f32 %v1821, %v1888
      %v1921 = vadd.f32 %v1822, %v1889
      %v1922 = vadd.f32 %v1823, %v1890
      %v1923 = vadd.f32 %v1824, %v1891
      %v1924 = vadd.f32 %v1825, %v1892
      %v1925 = vadd.f32 %v1826, %v1893
      %v1926 = vadd.f32 %v1827, %v1894
      %v1927 = vadd.f32 %v1828, %v1895
      %v1928 = vadd.f32 %v1829, %v1896
      %v1929 = vadd.f32 %v1830, %v1897
      %v1930 = vadd.f32 %v1831, %v1898
      %v1931 = vadd.f32 %v1832, %v1899
      %v1932 = vadd.f32 %v1833, %v1900
      %v1933 = vadd.f32 %v1834, %v1901
      %v1934 = vadd.f32 %v1835, %v1902
      %v1935 = vadd.f32 %v1836, %v1903
      %v1936 = vadd.f32 %v1837, %v1904
      %v1937 = vadd.f32 %v1838, %v1905
      %v1938 = vadd.f32 %v1839, %v1906
      %v1939 = vadd.f32 %v1840, %v1907
      %v1940 = vadd.f32 %v1841, %v1908
      %v1941 = vadd.f32 %v1842, %v1909
      %v1942 = vadd.f32 %v1843, %v1910
      %v1943 = vadd.f32 %v1844, %v1911
      %v1944 = vld [vmem:[#allocation2 + $0x111] sm:$0xff]
      %v1945 = vld [vmem:[#allocation2 + $0x119] sm:$0xff]
      %v1946 = vperm.slane %v614, 7
      %v1947 = vmul.f32 %v1358, %v1946
      %v1948 = vmul.f32 %v1359, %v1946
      %v1949 = vmul.f32 %v1360, %v1946
      %v1950 = vmul.f32 %v1361, %v1946
      %v1951 = vmul.f32 %v1362, %v1946
      %v1952 = vmul.f32 %v1363, %v1946
      %v1953 = vmul.f32 %v1364, %v1946
      %v1954 = vmul.f32 %v1365, %v1946
      %v1955 = vmul.f32 %v1366, %v1946
      %v1956 = vmul.f32 %v1367, %v1946
      %v1957 = vmul.f32 %v1368, %v1946
      %v1958 = vmul.f32 %v1369, %v1946
      %v1959 = vmul.f32 %v1370, %v1946
      %v1960 = vmul.f32 %v1371, %v1946
      %v1961 = vmul.f32 %v1372, %v1946
      %v1962 = vmul.f32 %v1373, %v1946
      %v1963 = vmul.f32 %v1374, %v1946
      %v1964 = vmul.f32 %v1375, %v1946
      %v1965 = vmul.f32 %v1376, %v1946
      %v1966 = vmul.f32 %v1377, %v1946
      %v1967 = vmul.f32 %v1378, %v1946
      %v1968 = vmul.f32 %v1379, %v1946
      %v1969 = vmul.f32 %v1380, %v1946
      %v1970 = vmul.f32 %v1381, %v1946
      %v1971 = vmul.f32 %v1382, %v1946
      %v1972 = vmul.f32 %v1383, %v1946
      %v1973 = vmul.f32 %v1384, %v1946
      %v1974 = vmul.f32 %v1385, %v1946
      %v1975 = vmul.f32 %v1679, %v1946
      %v1976 = vmul.f32 %v1680, %v1946
      %v1977 = vmul.f32 %v1944, %v1946
      %v1978 = vmul.f32 %v1945, %v1946
      %v1979 = vadd.f32 %v1912, %v1947
      %v1980 = vadd.f32 %v1913, %v1948
      %v1981 = vadd.f32 %v1914, %v1949
      %v1982 = vadd.f32 %v1915, %v1950
      %v1983 = vadd.f32 %v1916, %v1951
      %v1984 = vadd.f32 %v1917, %v1952
      %v1985 = vadd.f32 %v1918, %v1953
      %v1986 = vadd.f32 %v1919, %v1954
      %v1987 = vadd.f32 %v1920, %v1955
      %v1988 = vadd.f32 %v1921, %v1956
      %v1989 = vadd.f32 %v1922, %v1957
      %v1990 = vadd.f32 %v1923, %v1958
      %v1991 = vadd.f32 %v1924, %v1959
      %v1992 = vadd.f32 %v1925, %v1960
      %v1993 = vadd.f32 %v1926, %v1961
      %v1994 = vadd.f32 %v1927, %v1962
      %v1995 = vadd.f32 %v1928, %v1963
      %v1996 = vadd.f32 %v1929, %v1964
      %v1997 = vadd.f32 %v1930, %v1965
      %v1998 = vadd.f32 %v1931, %v1966
      %v1999 = vadd.f32 %v1932, %v1967
      %v2000 = vadd.f32 %v1933, %v1968
      %v2001 = vadd.f32 %v1934, %v1969
      %v2002 = vadd.f32 %v1935, %v1970
      %v2003 = vadd.f32 %v1936, %v1971
      %v2004 = vadd.f32 %v1937, %v1972
      %v2005 = vadd.f32 %v1938, %v1973
      %v2006 = vadd.f32 %v1939, %v1974
      %v2007 = vadd.f32 %v1940, %v1975
      %v2008 = vadd.f32 %v1941, %v1976
      %v2009 = vadd.f32 %v1942, %v1977
      %v2010 = vadd.f32 %v1943, %v1978
      %v2011 = vld [vmem:[#allocation2 + $0x112] sm:$0xff]
      %v2012 = vld [vmem:[#allocation2 + $0x11a] sm:$0xff]
      %v2013 = vmul.f32 %v1455, %v1193
      %v2014 = vmul.f32 %v1456, %v1194
      %v2015 = vmul.f32 %v1457, %v1195
      %v2016 = vmul.f32 %v1458, %v1196
      %v2017 = vmul.f32 %v1459, %v1197
      %v2018 = vmul.f32 %v1460, %v1198
      %v2019 = vmul.f32 %v1461, %v1199
      %v2020 = vmul.f32 %v1462, %v1200
      %v2021 = vmul.f32 %v1463, %v1201
      %v2022 = vmul.f32 %v1464, %v1202
      %v2023 = vmul.f32 %v1465, %v1203
      %v2024 = vmul.f32 %v1466, %v1204
      %v2025 = vmul.f32 %v1467, %v1205
      %v2026 = vmul.f32 %v1468, %v1206
      %v2027 = vmul.f32 %v1469, %v1207
      %v2028 = vmul.f32 %v1470, %v1208
      %v2029 = vmul.f32 %v1471, %v1209
      %v2030 = vmul.f32 %v1472, %v1210
      %v2031 = vmul.f32 %v1473, %v1211
      %v2032 = vmul.f32 %v1474, %v1212
      %v2033 = vmul.f32 %v1475, %v1213
      %v2034 = vmul.f32 %v1476, %v1214
      %v2035 = vmul.f32 %v1477, %v1215
      %v2036 = vmul.f32 %v1478, %v1216
      %v2037 = vmul.f32 %v1479, %v1217
      %v2038 = vmul.f32 %v1480, %v1218
      %v2039 = vmul.f32 %v1481, %v1219
      %v2040 = vmul.f32 %v1482, %v1220
      %v2041 = vmul.f32 %v1746, %v1221
      %v2042 = vmul.f32 %v1747, %v1222
      %v2043 = vmul.f32 %v2011, %v1223
      %v2044 = vmul.f32 %v2012, %v1224
      %v2045 = vperm.slane %v615, 0
      %v2046 = vmul.f32 %v2013, %v2045
      %v2047 = vmul.f32 %v2014, %v2045
      %v2048 = vmul.f32 %v2015, %v2045
      %v2049 = vmul.f32 %v2016, %v2045
      %v2050 = vmul.f32 %v2017, %v2045
      %v2051 = vmul.f32 %v2018, %v2045
      %v2052 = vmul.f32 %v2019, %v2045
      %v2053 = vmul.f32 %v2020, %v2045
      %v2054 = vmul.f32 %v2021, %v2045
      %v2055 = vmul.f32 %v2022, %v2045
      %v2056 = vmul.f32 %v2023, %v2045
      %v2057 = vmul.f32 %v2024, %v2045
      %v2058 = vmul.f32 %v2025, %v2045
      %v2059 = vmul.f32 %v2026, %v2045
      %v2060 = vmul.f32 %v2027, %v2045
      %v2061 = vmul.f32 %v2028, %v2045
      %v2062 = vmul.f32 %v2029, %v2045
      %v2063 = vmul.f32 %v2030, %v2045
      %v2064 = vmul.f32 %v2031, %v2045
      %v2065 = vmul.f32 %v2032, %v2045
      %v2066 = vmul.f32 %v2033, %v2045
      %v2067 = vmul.f32 %v2034, %v2045
      %v2068 = vmul.f32 %v2035, %v2045
      %v2069 = vmul.f32 %v2036, %v2045
      %v2070 = vmul.f32 %v2037, %v2045
      %v2071 = vmul.f32 %v2038, %v2045
      %v2072 = vmul.f32 %v2039, %v2045
      %v2073 = vmul.f32 %v2040, %v2045
      %v2074 = vmul.f32 %v2041, %v2045
      %v2075 = vmul.f32 %v2042, %v2045
      %v2076 = vmul.f32 %v2043, %v2045
      %v2077 = vmul.f32 %v2044, %v2045
      %v2078 = vadd.f32 %v1979, %v2046
      %v2079 = vadd.f32 %v1980, %v2047
      %v2080 = vadd.f32 %v1981, %v2048
      %v2081 = vadd.f32 %v1982, %v2049
      %v2082 = vadd.f32 %v1983, %v2050
      %v2083 = vadd.f32 %v1984, %v2051
      %v2084 = vadd.f32 %v1985, %v2052
      %v2085 = vadd.f32 %v1986, %v2053
      %v2086 = vadd.f32 %v1987, %v2054
      %v2087 = vadd.f32 %v1988, %v2055
      %v2088 = vadd.f32 %v1989, %v2056
      %v2089 = vadd.f32 %v1990, %v2057
      %v2090 = vadd.f32 %v1991, %v2058
      %v2091 = vadd.f32 %v1992, %v2059
      %v2092 = vadd.f32 %v1993, %v2060
      %v2093 = vadd.f32 %v1994, %v2061
      %v2094 = vadd.f32 %v1995, %v2062
      %v2095 = vadd.f32 %v1996, %v2063
      %v2096 = vadd.f32 %v1997, %v2064
      %v2097 = vadd.f32 %v1998, %v2065
      %v2098 = vadd.f32 %v1999, %v2066
      %v2099 = vadd.f32 %v2000, %v2067
      %v2100 = vadd.f32 %v2001, %v2068
      %v2101 = vadd.f32 %v2002, %v2069
      %v2102 = vadd.f32 %v2003, %v2070
      %v2103 = vadd.f32 %v2004, %v2071
      %v2104 = vadd.f32 %v2005, %v2072
      %v2105 = vadd.f32 %v2006, %v2073
      %v2106 = vadd.f32 %v2007, %v2074
      %v2107 = vadd.f32 %v2008, %v2075
      %v2108 = vadd.f32 %v2009, %v2076
      %v2109 = vadd.f32 %v2010, %v2077
      %v2110 = vld [vmem:[%s4] sm:$0x1]
      %v2112 = vperm.slane %v2110, 0
      %v2114 = vadd.f32 %v2078, %v2112
      %v2115 = vadd.f32 %v2079, %v2112
      %v2116 = vadd.f32 %v2080, %v2112
      %v2117 = vadd.f32 %v2081, %v2112
      %v2118 = vadd.f32 %v2082, %v2112
      %v2119 = vadd.f32 %v2083, %v2112
      %v2120 = vadd.f32 %v2084, %v2112
      %v2121 = vadd.f32 %v2085, %v2112
      %v2122 = vadd.f32 %v2086, %v2112
      %v2123 = vadd.f32 %v2087, %v2112
      %v2124 = vadd.f32 %v2088, %v2112
      %v2125 = vadd.f32 %v2089, %v2112
      %v2126 = vadd.f32 %v2090, %v2112
      %v2127 = vadd.f32 %v2091, %v2112
      %v2128 = vadd.f32 %v2092, %v2112
      %v2129 = vadd.f32 %v2093, %v2112
      %v2130 = vadd.f32 %v2094, %v2112
      %v2131 = vadd.f32 %v2095, %v2112
      %v2132 = vadd.f32 %v2096, %v2112
      %v2133 = vadd.f32 %v2097, %v2112
      %v2134 = vadd.f32 %v2098, %v2112
      %v2135 = vadd.f32 %v2099, %v2112
      %v2136 = vadd.f32 %v2100, %v2112
      %v2137 = vadd.f32 %v2101, %v2112
      %v2138 = vadd.f32 %v2102, %v2112
      %v2139 = vadd.f32 %v2103, %v2112
      %v2140 = vadd.f32 %v2104, %v2112
      %v2141 = vadd.f32 %v2105, %v2112
      %v2142 = vadd.f32 %v2106, %v2112
      %v2143 = vadd.f32 %v2107, %v2112
      %v2144 = vadd.f32 %v2108, %v2112
      %v2145 = vadd.f32 %v2109, %v2112
      %v2146 = vpack.c.bf16 %v2115, %v2114
      %v2147 = vpack.c.bf16 %v2117, %v2116
      %v2148 = vpack.c.bf16 %v2119, %v2118
      %v2149 = vpack.c.bf16 %v2121, %v2120
      %v2150 = vpack.c.bf16 %v2123, %v2122
      %v2151 = vpack.c.bf16 %v2125, %v2124
      %v2152 = vpack.c.bf16 %v2127, %v2126
      %v2153 = vpack.c.bf16 %v2129, %v2128
      %v2154 = vpack.c.bf16 %v2131, %v2130
      %v2155 = vpack.c.bf16 %v2133, %v2132
      %v2156 = vpack.c.bf16 %v2135, %v2134
      %v2157 = vpack.c.bf16 %v2137, %v2136
      %v2158 = vpack.c.bf16 %v2139, %v2138
      %v2159 = vpack.c.bf16 %v2141, %v2140
      %v2160 = vpack.c.bf16 %v2143, %v2142
      %v2161 = vpack.c.bf16 %v2145, %v2144
      %v2162 = vld [vmem:[%s5] sm:$0xf]
      %v2163 = vld [vmem:[%s5 + $0x4] sm:$0xf]
      %v2164 = vld [vmem:[%s5 + $0x8] sm:$0xf]
      %v2165 = vld [vmem:[%s5 + $0xc] sm:$0xf]
      %v2166 = vld [vmem:[%s6] sm:$0x1]
      %v2168 = vperm.slane %v2166, 0
      %v2174 = vunpack.c.l.b16 %v2162
      %v2175 = vunpack.c.l.b16 %v2163
      %v2176 = vunpack.c.l.b16 %v2164
      %v2177 = vunpack.c.l.b16 %v2165
      %v2178 = vpack.c.b16 %v2175, %v2174
      %v2179 = vpack.c.b16 %v2177, %v2176
      %v2181 = vsel %vm544, %v2146, 0
      %v2184 = vsel %vm544, %v2147, 0
      %v2187 = vsel %vm544, %v2148, 0
      %v2190 = vsel %vm544, %v2149, 0
      %v2193 = vsel %vm544, %v2150, 0
      %v2196 = vsel %vm544, %v2151, 0
      %v2199 = vsel %vm544, %v2152, 0
      %v2202 = vsel %vm544, %v2153, 0
      %v2205 = vsel %vm544, %v2154, 0
      %v2208 = vsel %vm544, %v2155, 0
      %v2211 = vsel %vm544, %v2156, 0
      %v2214 = vsel %vm544, %v2157, 0
      %v2217 = vsel %vm544, %v2158, 0
      %v2220 = vsel %vm544, %v2159, 0
      %v2223 = vsel %vm544, %v2160, 0
      %v2226 = vsel %vm544, %v2161, 0
      %v2229 = vsel %vm544, %v2178, 0
      %v2232 = vsel %vm544, %v2179, 0
      %2234 = vmatpush.bf16.xpose.msra.mxu0 0
      %2235 = vmatpush.bf16.xpose.msra.mxu0 0
      %2236 = vmatpush.bf16.xpose.msra.mxu0 0
      %2237 = vmatpush.bf16.xpose.msra.mxu0 0
      %2238 = vmatpush.bf16.xpose.msra.mxu0 0
      %2239 = vmatpush.bf16.xpose.msra.mxu0 0
      %2240 = vmatpush.bf16.xpose.msra.mxu0 %v2232
      %2241 = vmatpush.bf16.xpose.msra.mxu0 %v2229
      %2242 = vmatmul.bf16.gmra.mxu0 %v2181
      %v2243 = vpop.f32.mrf.mxu0
      %v2244 = vadd.f32 %v2168, %v2243
      %v2245 = vpop.f32.mrf.mxu0
      %v2246 = vadd.f32 %v2168, %v2245
      %2247 = vmatmul.bf16.gmra.mxu0 %v2184
      %v2248 = vpop.f32.mrf.mxu0
      %v2249 = vadd.f32 %v2168, %v2248
      %v2250 = vpop.f32.mrf.mxu0
      %v2251 = vadd.f32 %v2168, %v2250
      %2252 = vmatmul.bf16.gmra.mxu0 %v2187
      %v2253 = vpop.f32.mrf.mxu0
      %v2254 = vadd.f32 %v2168, %v2253
      %v2255 = vpop.f32.mrf.mxu0
      %v2256 = vadd.f32 %v2168, %v2255
      %2257 = vmatmul.bf16.gmra.mxu0 %v2190
      %v2258 = vpop.f32.mrf.mxu0
      %v2259 = vadd.f32 %v2168, %v2258
      %v2260 = vpop.f32.mrf.mxu0
      %v2261 = vadd.f32 %v2168, %v2260
      %2262 = vmatmul.bf16.gmra.mxu0 %v2193
      %v2263 = vpop.f32.mrf.mxu0
      %v2264 = vadd.f32 %v2168, %v2263
      %v2265 = vpop.f32.mrf.mxu0
      %v2266 = vadd.f32 %v2168, %v2265
      %2267 = vmatmul.bf16.gmra.mxu0 %v2196
      %v2268 = vpop.f32.mrf.mxu0
      %v2269 = vadd.f32 %v2168, %v2268
      %v2270 = vpop.f32.mrf.mxu0
      %v2271 = vadd.f32 %v2168, %v2270
      %2272 = vmatmul.bf16.gmra.mxu0 %v2199
      %v2273 = vpop.f32.mrf.mxu0
      %v2274 = vadd.f32 %v2168, %v2273
      %v2275 = vpop.f32.mrf.mxu0
      %v2276 = vadd.f32 %v2168, %v2275
      %2277 = vmatmul.bf16.gmra.mxu0 %v2202
      %v2278 = vpop.f32.mrf.mxu0
      %v2279 = vadd.f32 %v2168, %v2278
      %v2280 = vpop.f32.mrf.mxu0
      %v2281 = vadd.f32 %v2168, %v2280
      %2282 = vmatmul.bf16.gmra.mxu0 %v2205
      %v2283 = vpop.f32.mrf.mxu0
      %v2284 = vadd.f32 %v2168, %v2283
      %v2285 = vpop.f32.mrf.mxu0
      %v2286 = vadd.f32 %v2168, %v2285
      %2287 = vmatmul.bf16.gmra.mxu0 %v2208
      %v2288 = vpop.f32.mrf.mxu0
      %v2289 = vadd.f32 %v2168, %v2288
      %v2290 = vpop.f32.mrf.mxu0
      %v2291 = vadd.f32 %v2168, %v2290
      %2292 = vmatmul.bf16.gmra.mxu0 %v2211
      %v2293 = vpop.f32.mrf.mxu0
      %v2294 = vadd.f32 %v2168, %v2293
      %v2295 = vpop.f32.mrf.mxu0
      %v2296 = vadd.f32 %v2168, %v2295
      %2297 = vmatmul.bf16.gmra.mxu0 %v2214
      %v2298 = vpop.f32.mrf.mxu0
      %v2299 = vadd.f32 %v2168, %v2298
      %v2300 = vpop.f32.mrf.mxu0
      %v2301 = vadd.f32 %v2168, %v2300
      %2302 = vmatmul.bf16.gmra.mxu0 %v2217
      %v2303 = vpop.f32.mrf.mxu0
      %v2304 = vadd.f32 %v2168, %v2303
      %v2305 = vpop.f32.mrf.mxu0
      %v2306 = vadd.f32 %v2168, %v2305
      %2307 = vmatmul.bf16.gmra.mxu0 %v2220
      %v2308 = vpop.f32.mrf.mxu0
      %v2309 = vadd.f32 %v2168, %v2308
      %v2310 = vpop.f32.mrf.mxu0
      %v2311 = vadd.f32 %v2168, %v2310
      %2312 = vmatmul.bf16.gmra.mxu0 %v2223
      %v2313 = vpop.f32.mrf.mxu0
      %v2314 = vadd.f32 %v2168, %v2313
      %v2315 = vpop.f32.mrf.mxu0
      %v2316 = vadd.f32 %v2168, %v2315
      %2317 = vmatmul.bf16.gmra.mxu0 %v2226
      %v2318 = vpop.f32.mrf.mxu0
      %v2319 = vadd.f32 %v2168, %v2318
      %v2320 = vpop.f32.mrf.mxu0
      %v2321 = vadd.f32 %v2168, %v2320
      %2322 = vdwg.mxu0
      %v2323 = vmul.f32 %v2244, 0.70710677
      %v2324 = vmul.f32 %v2246, 0.70710677
      %v2325 = vmul.f32 %v2249, 0.70710677
      %v2326 = vmul.f32 %v2251, 0.70710677
      %v2327 = vmul.f32 %v2254, 0.70710677
      %v2328 = vmul.f32 %v2256, 0.70710677
      %v2329 = vmul.f32 %v2259, 0.70710677
      %v2330 = vmul.f32 %v2261, 0.70710677
      %v2331 = vmul.f32 %v2264, 0.70710677
      %v2332 = vmul.f32 %v2266, 0.70710677
      %v2333 = vmul.f32 %v2269, 0.70710677
      %v2334 = vmul.f32 %v2271, 0.70710677
      %v2335 = vmul.f32 %v2274, 0.70710677
      %v2336 = vmul.f32 %v2276, 0.70710677
      %v2337 = vmul.f32 %v2279, 0.70710677
      %v2338 = vmul.f32 %v2281, 0.70710677
      %v2339 = vmul.f32 %v2284, 0.70710677
      %v2340 = vmul.f32 %v2286, 0.70710677
      %v2341 = vmul.f32 %v2289, 0.70710677
      %v2342 = vmul.f32 %v2291, 0.70710677
      %v2343 = vmul.f32 %v2294, 0.70710677
      %v2344 = vmul.f32 %v2296, 0.70710677
      %v2345 = vmul.f32 %v2299, 0.70710677
      %v2346 = vmul.f32 %v2301, 0.70710677
      %v2347 = vmul.f32 %v2304, 0.70710677
      %v2348 = vmul.f32 %v2306, 0.70710677
      %v2349 = vmul.f32 %v2309, 0.70710677
      %v2350 = vmul.f32 %v2311, 0.70710677
      %v2351 = vmul.f32 %v2314, 0.70710677
      %v2352 = vmul.f32 %v2316, 0.70710677
      %v2353 = vmul.f32 %v2319, 0.70710677
      %v2354 = vmul.f32 %v2321, 0.70710677
      %v2355 = vand.u32 2147483647, %v2323
      %v2356 = vand.u32 2147483647, %v2324
      %v2357 = vand.u32 2147483647, %v2325
      %v2358 = vand.u32 2147483647, %v2326
      %v2359 = vand.u32 2147483647, %v2327
      %v2360 = vand.u32 2147483647, %v2328
      %v2361 = vand.u32 2147483647, %v2329
      %v2362 = vand.u32 2147483647, %v2330
      %v2363 = vand.u32 2147483647, %v2331
      %v2364 = vand.u32 2147483647, %v2332
      %v2365 = vand.u32 2147483647, %v2333
      %v2366 = vand.u32 2147483647, %v2334
      %v2367 = vand.u32 2147483647, %v2335
      %v2368 = vand.u32 2147483647, %v2336
      %v2369 = vand.u32 2147483647, %v2337
      %v2370 = vand.u32 2147483647, %v2338
      %v2371 = vand.u32 2147483647, %v2339
      %v2372 = vand.u32 2147483647, %v2340
      %v2373 = vand.u32 2147483647, %v2341
      %v2374 = vand.u32 2147483647, %v2342
      %v2375 = vand.u32 2147483647, %v2343
      %v2376 = vand.u32 2147483647, %v2344
      %v2377 = vand.u32 2147483647, %v2345
      %v2378 = vand.u32 2147483647, %v2346
      %v2379 = vand.u32 2147483647, %v2347
      %v2380 = vand.u32 2147483647, %v2348
      %v2381 = vand.u32 2147483647, %v2349
      %v2382 = vand.u32 2147483647, %v2350
      %v2383 = vand.u32 2147483647, %v2351
      %v2384 = vand.u32 2147483647, %v2352
      %v2385 = vand.u32 2147483647, %v2353
      %v2386 = vand.u32 2147483647, %v2354
      %v2387 = vmul.f32 %v2355, 0.3275911
      %v2388 = vmul.f32 %v2356, 0.3275911
      %v2389 = vmul.f32 %v2357, 0.3275911
      %v2390 = vmul.f32 %v2358, 0.3275911
      %v2391 = vmul.f32 %v2359, 0.3275911
      %v2392 = vmul.f32 %v2360, 0.3275911
      %v2393 = vmul.f32 %v2361, 0.3275911
      %v2394 = vmul.f32 %v2362, 0.3275911
      %v2395 = vmul.f32 %v2363, 0.3275911
      %v2396 = vmul.f32 %v2364, 0.3275911
      %v2397 = vmul.f32 %v2365, 0.3275911
      %v2398 = vmul.f32 %v2366, 0.3275911
      %v2399 = vmul.f32 %v2367, 0.3275911
      %v2400 = vmul.f32 %v2368, 0.3275911
      %v2401 = vmul.f32 %v2369, 0.3275911
      %v2402 = vmul.f32 %v2370, 0.3275911
      %v2403 = vmul.f32 %v2371, 0.3275911
      %v2404 = vmul.f32 %v2372, 0.3275911
      %v2405 = vmul.f32 %v2373, 0.3275911
      %v2406 = vmul.f32 %v2374, 0.3275911
      %v2407 = vmul.f32 %v2375, 0.3275911
      %v2408 = vmul.f32 %v2376, 0.3275911
      %v2409 = vmul.f32 %v2377, 0.3275911
      %v2410 = vmul.f32 %v2378, 0.3275911
      %v2411 = vmul.f32 %v2379, 0.3275911
      %v2412 = vmul.f32 %v2380, 0.3275911
      %v2413 = vmul.f32 %v2381, 0.3275911
      %v2414 = vmul.f32 %v2382, 0.3275911
      %v2415 = vmul.f32 %v2383, 0.3275911
      %v2416 = vmul.f32 %v2384, 0.3275911
      %v2417 = vmul.f32 %v2385, 0.3275911
      %v2418 = vmul.f32 %v2386, 0.3275911
      %v2419 = vadd.f32 %v2387, 1.0
      %v2420 = vadd.f32 %v2388, 1.0
      %v2421 = vadd.f32 %v2389, 1.0
      %v2422 = vadd.f32 %v2390, 1.0
      %v2423 = vadd.f32 %v2391, 1.0
      %v2424 = vadd.f32 %v2392, 1.0
      %v2425 = vadd.f32 %v2393, 1.0
      %v2426 = vadd.f32 %v2394, 1.0
      %v2427 = vadd.f32 %v2395, 1.0
      %v2428 = vadd.f32 %v2396, 1.0
      %v2429 = vadd.f32 %v2397, 1.0
      %v2430 = vadd.f32 %v2398, 1.0
      %v2431 = vadd.f32 %v2399, 1.0
      %v2432 = vadd.f32 %v2400, 1.0
      %v2433 = vadd.f32 %v2401, 1.0
      %v2434 = vadd.f32 %v2402, 1.0
      %v2435 = vadd.f32 %v2403, 1.0
      %v2436 = vadd.f32 %v2404, 1.0
      %v2437 = vadd.f32 %v2405, 1.0
      %v2438 = vadd.f32 %v2406, 1.0
      %v2439 = vadd.f32 %v2407, 1.0
      %v2440 = vadd.f32 %v2408, 1.0
      %v2441 = vadd.f32 %v2409, 1.0
      %v2442 = vadd.f32 %v2410, 1.0
      %v2443 = vadd.f32 %v2411, 1.0
      %v2444 = vadd.f32 %v2412, 1.0
      %v2445 = vadd.f32 %v2413, 1.0
      %v2446 = vadd.f32 %v2414, 1.0
      %v2447 = vadd.f32 %v2415, 1.0
      %v2448 = vadd.f32 %v2416, 1.0
      %v2449 = vadd.f32 %v2417, 1.0
      %v2450 = vadd.f32 %v2418, 1.0
      %v2451 = vrcp.pop %v2419
      %v2452 = vrcp.pop %v2420
      %v2453 = vrcp.pop %v2421
      %v2454 = vrcp.pop %v2422
      %v2455 = vrcp.pop %v2423
      %v2456 = vrcp.pop %v2424
      %v2457 = vrcp.pop %v2425
      %v2458 = vrcp.pop %v2426
      %v2459 = vrcp.pop %v2427
      %v2460 = vrcp.pop %v2428
      %v2461 = vrcp.pop %v2429
      %v2462 = vrcp.pop %v2430
      %v2463 = vrcp.pop %v2431
      %v2464 = vrcp.pop %v2432
      %v2465 = vrcp.pop %v2433
      %v2466 = vrcp.pop %v2434
      %v2467 = vrcp.pop %v2435
      %v2468 = vrcp.pop %v2436
      %v2469 = vrcp.pop %v2437
      %v2470 = vrcp.pop %v2438
      %v2471 = vrcp.pop %v2439
      %v2472 = vrcp.pop %v2440
      %v2473 = vrcp.pop %v2441
      %v2474 = vrcp.pop %v2442
      %v2475 = vrcp.pop %v2443
      %v2476 = vrcp.pop %v2444
      %v2477 = vrcp.pop %v2445
      %v2478 = vrcp.pop %v2446
      %v2479 = vrcp.pop %v2447
      %v2480 = vrcp.pop %v2448
      %v2481 = vrcp.pop %v2449
      %v2482 = vrcp.pop %v2450
      %v2483 = vmul.f32 %v2451, 1.0614054
      %v2484 = vmul.f32 %v2452, 1.0614054
      %v2485 = vmul.f32 %v2453, 1.0614054
      %v2486 = vmul.f32 %v2454, 1.0614054
      %v2487 = vmul.f32 %v2455, 1.0614054
      %v2488 = vmul.f32 %v2456, 1.0614054
      %v2489 = vmul.f32 %v2457, 1.0614054
      %v2490 = vmul.f32 %v2458, 1.0614054
      %v2491 = vmul.f32 %v2459, 1.0614054
      %v2492 = vmul.f32 %v2460, 1.0614054
      %v2493 = vmul.f32 %v2461, 1.0614054
      %v2494 = vmul.f32 %v2462, 1.0614054
      %v2495 = vmul.f32 %v2463, 1.0614054
      %v2496 = vmul.f32 %v2464, 1.0614054
      %v2497 = vmul.f32 %v2465, 1.0614054
      %v2498 = vmul.f32 %v2466, 1.0614054
      %v2499 = vmul.f32 %v2467, 1.0614054
      %v2500 = vmul.f32 %v2468, 1.0614054
      %v2501 = vmul.f32 %v2469, 1.0614054
      %v2502 = vmul.f32 %v2470, 1.0614054
      %v2503 = vmul.f32 %v2471, 1.0614054
      %v2504 = vmul.f32 %v2472, 1.0614054
      %v2505 = vmul.f32 %v2473, 1.0614054
      %v2506 = vmul.f32 %v2474, 1.0614054
      %v2507 = vmul.f32 %v2475, 1.0614054
      %v2508 = vmul.f32 %v2476, 1.0614054
      %v2509 = vmul.f32 %v2477, 1.0614054
      %v2510 = vmul.f32 %v2478, 1.0614054
      %v2511 = vmul.f32 %v2479, 1.0614054
      %v2512 = vmul.f32 %v2480, 1.0614054
      %v2513 = vmul.f32 %v2481, 1.0614054
      %v2514 = vmul.f32 %v2482, 1.0614054
      %v2515 = vadd.f32 %v2483, -1.4531521
      %v2516 = vadd.f32 %v2484, -1.4531521
      %v2517 = vadd.f32 %v2485, -1.4531521
      %v2518 = vadd.f32 %v2486, -1.4531521
      %v2519 = vadd.f32 %v2487, -1.4531521
      %v2520 = vadd.f32 %v2488, -1.4531521
      %v2521 = vadd.f32 %v2489, -1.4531521
      %v2522 = vadd.f32 %v2490, -1.4531521
      %v2523 = vadd.f32 %v2491, -1.4531521
      %v2524 = vadd.f32 %v2492, -1.4531521
      %v2525 = vadd.f32 %v2493, -1.4531521
      %v2526 = vadd.f32 %v2494, -1.4531521
      %v2527 = vadd.f32 %v2495, -1.4531521
      %v2528 = vadd.f32 %v2496, -1.4531521
      %v2529 = vadd.f32 %v2497, -1.4531521
      %v2530 = vadd.f32 %v2498, -1.4531521
      %v2531 = vadd.f32 %v2499, -1.4531521
      %v2532 = vadd.f32 %v2500, -1.4531521
      %v2533 = vadd.f32 %v2501, -1.4531521
      %v2534 = vadd.f32 %v2502, -1.4531521
      %v2535 = vadd.f32 %v2503, -1.4531521
      %v2536 = vadd.f32 %v2504, -1.4531521
      %v2537 = vadd.f32 %v2505, -1.4531521
      %v2538 = vadd.f32 %v2506, -1.4531521
      %v2539 = vadd.f32 %v2507, -1.4531521
      %v2540 = vadd.f32 %v2508, -1.4531521
      %v2541 = vadd.f32 %v2509, -1.4531521
      %v2542 = vadd.f32 %v2510, -1.4531521
      %v2543 = vadd.f32 %v2511, -1.4531521
      %v2544 = vadd.f32 %v2512, -1.4531521
      %v2545 = vadd.f32 %v2513, -1.4531521
      %v2546 = vadd.f32 %v2514, -1.4531521
      %v2547 = vmul.f32 %v2451, %v2515
      %v2548 = vmul.f32 %v2452, %v2516
      %v2549 = vmul.f32 %v2453, %v2517
      %v2550 = vmul.f32 %v2454, %v2518
      %v2551 = vmul.f32 %v2455, %v2519
      %v2552 = vmul.f32 %v2456, %v2520
      %v2553 = vmul.f32 %v2457, %v2521
      %v2554 = vmul.f32 %v2458, %v2522
      %v2555 = vmul.f32 %v2459, %v2523
      %v2556 = vmul.f32 %v2460, %v2524
      %v2557 = vmul.f32 %v2461, %v2525
      %v2558 = vmul.f32 %v2462, %v2526
      %v2559 = vmul.f32 %v2463, %v2527
      %v2560 = vmul.f32 %v2464, %v2528
      %v2561 = vmul.f32 %v2465, %v2529
      %v2562 = vmul.f32 %v2466, %v2530
      %v2563 = vmul.f32 %v2467, %v2531
      %v2564 = vmul.f32 %v2468, %v2532
      %v2565 = vmul.f32 %v2469, %v2533
      %v2566 = vmul.f32 %v2470, %v2534
      %v2567 = vmul.f32 %v2471, %v2535
      %v2568 = vmul.f32 %v2472, %v2536
      %v2569 = vmul.f32 %v2473, %v2537
      %v2570 = vmul.f32 %v2474, %v2538
      %v2571 = vmul.f32 %v2475, %v2539
      %v2572 = vmul.f32 %v2476, %v2540
      %v2573 = vmul.f32 %v2477, %v2541
      %v2574 = vmul.f32 %v2478, %v2542
      %v2575 = vmul.f32 %v2479, %v2543
      %v2576 = vmul.f32 %v2480, %v2544
      %v2577 = vmul.f32 %v2481, %v2545
      %v2578 = vmul.f32 %v2482, %v2546
      %v2579 = vadd.f32 %v2547, 1.4214138
      %v2580 = vadd.f32 %v2548, 1.4214138
      %v2581 = vadd.f32 %v2549, 1.4214138
      %v2582 = vadd.f32 %v2550, 1.4214138
      %v2583 = vadd.f32 %v2551, 1.4214138
      %v2584 = vadd.f32 %v2552, 1.4214138
      %v2585 = vadd.f32 %v2553, 1.4214138
      %v2586 = vadd.f32 %v2554, 1.4214138
      %v2587 = vadd.f32 %v2555, 1.4214138
      %v2588 = vadd.f32 %v2556, 1.4214138
      %v2589 = vadd.f32 %v2557, 1.4214138
      %v2590 = vadd.f32 %v2558, 1.4214138
      %v2591 = vadd.f32 %v2559, 1.4214138
      %v2592 = vadd.f32 %v2560, 1.4214138
      %v2593 = vadd.f32 %v2561, 1.4214138
      %v2594 = vadd.f32 %v2562, 1.4214138
      %v2595 = vadd.f32 %v2563, 1.4214138
      %v2596 = vadd.f32 %v2564, 1.4214138
      %v2597 = vadd.f32 %v2565, 1.4214138
      %v2598 = vadd.f32 %v2566, 1.4214138
      %v2599 = vadd.f32 %v2567, 1.4214138
      %v2600 = vadd.f32 %v2568, 1.4214138
      %v2601 = vadd.f32 %v2569, 1.4214138
      %v2602 = vadd.f32 %v2570, 1.4214138
      %v2603 = vadd.f32 %v2571, 1.4214138
      %v2604 = vadd.f32 %v2572, 1.4214138
      %v2605 = vadd.f32 %v2573, 1.4214138
      %v2606 = vadd.f32 %v2574, 1.4214138
      %v2607 = vadd.f32 %v2575, 1.4214138
      %v2608 = vadd.f32 %v2576, 1.4214138
      %v2609 = vadd.f32 %v2577, 1.4214138
      %v2610 = vadd.f32 %v2578, 1.4214138
      %v2611 = vmul.f32 %v2451, %v2579
      %v2612 = vmul.f32 %v2452, %v2580
      %v2613 = vmul.f32 %v2453, %v2581
      %v2614 = vmul.f32 %v2454, %v2582
      %v2615 = vmul.f32 %v2455, %v2583
      %v2616 = vmul.f32 %v2456, %v2584
      %v2617 = vmul.f32 %v2457, %v2585
      %v2618 = vmul.f32 %v2458, %v2586
      %v2619 = vmul.f32 %v2459, %v2587
      %v2620 = vmul.f32 %v2460, %v2588
      %v2621 = vmul.f32 %v2461, %v2589
      %v2622 = vmul.f32 %v2462, %v2590
      %v2623 = vmul.f32 %v2463, %v2591
      %v2624 = vmul.f32 %v2464, %v2592
      %v2625 = vmul.f32 %v2465, %v2593
      %v2626 = vmul.f32 %v2466, %v2594
      %v2627 = vmul.f32 %v2467, %v2595
      %v2628 = vmul.f32 %v2468, %v2596
      %v2629 = vmul.f32 %v2469, %v2597
      %v2630 = vmul.f32 %v2470, %v2598
      %v2631 = vmul.f32 %v2471, %v2599
      %v2632 = vmul.f32 %v2472, %v2600
      %v2633 = vmul.f32 %v2473, %v2601
      %v2634 = vmul.f32 %v2474, %v2602
      %v2635 = vmul.f32 %v2475, %v2603
      %v2636 = vmul.f32 %v2476, %v2604
      %v2637 = vmul.f32 %v2477, %v2605
      %v2638 = vmul.f32 %v2478, %v2606
      %v2639 = vmul.f32 %v2479, %v2607
      %v2640 = vmul.f32 %v2480, %v2608
      %v2641 = vmul.f32 %v2481, %v2609
      %v2642 = vmul.f32 %v2482, %v2610
      %v2643 = vadd.f32 %v2611, -0.28449672
      %v2644 = vadd.f32 %v2612, -0.28449672
      %v2645 = vadd.f32 %v2613, -0.28449672
      %v2646 = vadd.f32 %v2614, -0.28449672
      %v2647 = vadd.f32 %v2615, -0.28449672
      %v2648 = vadd.f32 %v2616, -0.28449672
      %v2649 = vadd.f32 %v2617, -0.28449672
      %v2650 = vadd.f32 %v2618, -0.28449672
      %v2651 = vadd.f32 %v2619, -0.28449672
      %v2652 = vadd.f32 %v2620, -0.28449672
      %v2653 = vadd.f32 %v2621, -0.28449672
      %v2654 = vadd.f32 %v2622, -0.28449672
      %v2655 = vadd.f32 %v2623, -0.28449672
      %v2656 = vadd.f32 %v2624, -0.28449672
      %v2657 = vadd.f32 %v2625, -0.28449672
      %v2658 = vadd.f32 %v2626, -0.28449672
      %v2659 = vadd.f32 %v2627, -0.28449672
      %v2660 = vadd.f32 %v2628, -0.28449672
      %v2661 = vadd.f32 %v2629, -0.28449672
      %v2662 = vadd.f32 %v2630, -0.28449672
      %v2663 = vadd.f32 %v2631, -0.28449672
      %v2664 = vadd.f32 %v2632, -0.28449672
      %v2665 = vadd.f32 %v2633, -0.28449672
      %v2666 = vadd.f32 %v2634, -0.28449672
      %v2667 = vadd.f32 %v2635, -0.28449672
      %v2668 = vadd.f32 %v2636, -0.28449672
      %v2669 = vadd.f32 %v2637, -0.28449672
      %v2670 = vadd.f32 %v2638, -0.28449672
      %v2671 = vadd.f32 %v2639, -0.28449672
      %v2672 = vadd.f32 %v2640, -0.28449672
      %v2673 = vadd.f32 %v2641, -0.28449672
      %v2674 = vadd.f32 %v2642, -0.28449672
      %v2675 = vmul.f32 %v2451, %v2643
      %v2676 = vmul.f32 %v2452, %v2644
      %v2677 = vmul.f32 %v2453, %v2645
      %v2678 = vmul.f32 %v2454, %v2646
      %v2679 = vmul.f32 %v2455, %v2647
      %v2680 = vmul.f32 %v2456, %v2648
      %v2681 = vmul.f32 %v2457, %v2649
      %v2682 = vmul.f32 %v2458, %v2650
      %v2683 = vmul.f32 %v2459, %v2651
      %v2684 = vmul.f32 %v2460, %v2652
      %v2685 = vmul.f32 %v2461, %v2653
      %v2686 = vmul.f32 %v2462, %v2654
      %v2687 = vmul.f32 %v2463, %v2655
      %v2688 = vmul.f32 %v2464, %v2656
      %v2689 = vmul.f32 %v2465, %v2657
      %v2690 = vmul.f32 %v2466, %v2658
      %v2691 = vmul.f32 %v2467, %v2659
      %v2692 = vmul.f32 %v2468, %v2660
      %v2693 = vmul.f32 %v2469, %v2661
      %v2694 = vmul.f32 %v2470, %v2662
      %v2695 = vmul.f32 %v2471, %v2663
      %v2696 = vmul.f32 %v2472, %v2664
      %v2697 = vmul.f32 %v2473, %v2665
      %v2698 = vmul.f32 %v2474, %v2666
      %v2699 = vmul.f32 %v2475, %v2667
      %v2700 = vmul.f32 %v2476, %v2668
      %v2701 = vmul.f32 %v2477, %v2669
      %v2702 = vmul.f32 %v2478, %v2670
      %v2703 = vmul.f32 %v2479, %v2671
      %v2704 = vmul.f32 %v2480, %v2672
      %v2705 = vmul.f32 %v2481, %v2673
      %v2706 = vmul.f32 %v2482, %v2674
      %v2707 = vadd.f32 %v2675, 0.2548296
      %v2708 = vadd.f32 %v2676, 0.2548296
      %v2709 = vadd.f32 %v2677, 0.2548296
      %v2710 = vadd.f32 %v2678, 0.2548296
      %v2711 = vadd.f32 %v2679, 0.2548296
      %v2712 = vadd.f32 %v2680, 0.2548296
      %v2713 = vadd.f32 %v2681, 0.2548296
      %v2714 = vadd.f32 %v2682, 0.2548296
      %v2715 = vadd.f32 %v2683, 0.2548296
      %v2716 = vadd.f32 %v2684, 0.2548296
      %v2717 = vadd.f32 %v2685, 0.2548296
      %v2718 = vadd.f32 %v2686, 0.2548296
      %v2719 = vadd.f32 %v2687, 0.2548296
      %v2720 = vadd.f32 %v2688, 0.2548296
      %v2721 = vadd.f32 %v2689, 0.2548296
      %v2722 = vadd.f32 %v2690, 0.2548296
      %v2723 = vadd.f32 %v2691, 0.2548296
      %v2724 = vadd.f32 %v2692, 0.2548296
      %v2725 = vadd.f32 %v2693, 0.2548296
      %v2726 = vadd.f32 %v2694, 0.2548296
      %v2727 = vadd.f32 %v2695, 0.2548296
      %v2728 = vadd.f32 %v2696, 0.2548296
      %v2729 = vadd.f32 %v2697, 0.2548296
      %v2730 = vadd.f32 %v2698, 0.2548296
      %v2731 = vadd.f32 %v2699, 0.2548296
      %v2732 = vadd.f32 %v2700, 0.2548296
      %v2733 = vadd.f32 %v2701, 0.2548296
      %v2734 = vadd.f32 %v2702, 0.2548296
      %v2735 = vadd.f32 %v2703, 0.2548296
      %v2736 = vadd.f32 %v2704, 0.2548296
      %v2737 = vadd.f32 %v2705, 0.2548296
      %v2738 = vadd.f32 %v2706, 0.2548296
      %v2739 = vmul.f32 %v2451, %v2707
      %v2740 = vmul.f32 %v2452, %v2708
      %v2741 = vmul.f32 %v2453, %v2709
      %v2742 = vmul.f32 %v2454, %v2710
      %v2743 = vmul.f32 %v2455, %v2711
      %v2744 = vmul.f32 %v2456, %v2712
      %v2745 = vmul.f32 %v2457, %v2713
      %v2746 = vmul.f32 %v2458, %v2714
      %v2747 = vmul.f32 %v2459, %v2715
      %v2748 = vmul.f32 %v2460, %v2716
      %v2749 = vmul.f32 %v2461, %v2717
      %v2750 = vmul.f32 %v2462, %v2718
      %v2751 = vmul.f32 %v2463, %v2719
      %v2752 = vmul.f32 %v2464, %v2720
      %v2753 = vmul.f32 %v2465, %v2721
      %v2754 = vmul.f32 %v2466, %v2722
      %v2755 = vmul.f32 %v2467, %v2723
      %v2756 = vmul.f32 %v2468, %v2724
      %v2757 = vmul.f32 %v2469, %v2725
      %v2758 = vmul.f32 %v2470, %v2726
      %v2759 = vmul.f32 %v2471, %v2727
      %v2760 = vmul.f32 %v2472, %v2728
      %v2761 = vmul.f32 %v2473, %v2729
      %v2762 = vmul.f32 %v2474, %v2730
      %v2763 = vmul.f32 %v2475, %v2731
      %v2764 = vmul.f32 %v2476, %v2732
      %v2765 = vmul.f32 %v2477, %v2733
      %v2766 = vmul.f32 %v2478, %v2734
      %v2767 = vmul.f32 %v2479, %v2735
      %v2768 = vmul.f32 %v2480, %v2736
      %v2769 = vmul.f32 %v2481, %v2737
      %v2770 = vmul.f32 %v2482, %v2738
      %v2771 = vsub.f32 0.0, %v2355
      %v2772 = vsub.f32 0.0, %v2356
      %v2773 = vsub.f32 0.0, %v2357
      %v2774 = vsub.f32 0.0, %v2358
      %v2775 = vsub.f32 0.0, %v2359
      %v2776 = vsub.f32 0.0, %v2360
      %v2777 = vsub.f32 0.0, %v2361
      %v2778 = vsub.f32 0.0, %v2362
      %v2779 = vsub.f32 0.0, %v2363
      %v2780 = vsub.f32 0.0, %v2364
      %v2781 = vsub.f32 0.0, %v2365
      %v2782 = vsub.f32 0.0, %v2366
      %v2783 = vsub.f32 0.0, %v2367
      %v2784 = vsub.f32 0.0, %v2368
      %v2785 = vsub.f32 0.0, %v2369
      %v2786 = vsub.f32 0.0, %v2370
      %v2787 = vsub.f32 0.0, %v2371
      %v2788 = vsub.f32 0.0, %v2372
      %v2789 = vsub.f32 0.0, %v2373
      %v2790 = vsub.f32 0.0, %v2374
      %v2791 = vsub.f32 0.0, %v2375
      %v2792 = vsub.f32 0.0, %v2376
      %v2793 = vsub.f32 0.0, %v2377
      %v2794 = vsub.f32 0.0, %v2378
      %v2795 = vsub.f32 0.0, %v2379
      %v2796 = vsub.f32 0.0, %v2380
      %v2797 = vsub.f32 0.0, %v2381
      %v2798 = vsub.f32 0.0, %v2382
      %v2799 = vsub.f32 0.0, %v2383
      %v2800 = vsub.f32 0.0, %v2384
      %v2801 = vsub.f32 0.0, %v2385
      %v2802 = vsub.f32 0.0, %v2386
      %v2803 = vmul.f32 %v2771, %v2355
      %v2804 = vmul.f32 %v2772, %v2356
      %v2805 = vmul.f32 %v2773, %v2357
      %v2806 = vmul.f32 %v2774, %v2358
      %v2807 = vmul.f32 %v2775, %v2359
      %v2808 = vmul.f32 %v2776, %v2360
      %v2809 = vmul.f32 %v2777, %v2361
      %v2810 = vmul.f32 %v2778, %v2362
      %v2811 = vmul.f32 %v2779, %v2363
      %v2812 = vmul.f32 %v2780, %v2364
      %v2813 = vmul.f32 %v2781, %v2365
      %v2814 = vmul.f32 %v2782, %v2366
      %v2815 = vmul.f32 %v2783, %v2367
      %v2816 = vmul.f32 %v2784, %v2368
      %v2817 = vmul.f32 %v2785, %v2369
      %v2818 = vmul.f32 %v2786, %v2370
      %v2819 = vmul.f32 %v2787, %v2371
      %v2820 = vmul.f32 %v2788, %v2372
      %v2821 = vmul.f32 %v2789, %v2373
      %v2822 = vmul.f32 %v2790, %v2374
      %v2823 = vmul.f32 %v2791, %v2375
      %v2824 = vmul.f32 %v2792, %v2376
      %v2825 = vmul.f32 %v2793, %v2377
      %v2826 = vmul.f32 %v2794, %v2378
      %v2827 = vmul.f32 %v2795, %v2379
      %v2828 = vmul.f32 %v2796, %v2380
      %v2829 = vmul.f32 %v2797, %v2381
      %v2830 = vmul.f32 %v2798, %v2382
      %v2831 = vmul.f32 %v2799, %v2383
      %v2832 = vmul.f32 %v2800, %v2384
      %v2833 = vmul.f32 %v2801, %v2385
      %v2834 = vmul.f32 %v2802, %v2386
      %v2835 = vmul.f32 %v2803, 1.442695
      %v2836 = vpow.pop %v2835
      %v2837 = vmul.f32 %v2804, 1.442695
      %v2838 = vpow.pop %v2837
      %v2839 = vmul.f32 %v2805, 1.442695
      %v2840 = vpow.pop %v2839
      %v2841 = vmul.f32 %v2806, 1.442695
      %v2842 = vpow.pop %v2841
      %v2843 = vmul.f32 %v2807, 1.442695
      %v2844 = vpow.pop %v2843
      %v2845 = vmul.f32 %v2808, 1.442695
      %v2846 = vpow.pop %v2845
      %v2847 = vmul.f32 %v2809, 1.442695
      %v2848 = vpow.pop %v2847
      %v2849 = vmul.f32 %v2810, 1.442695
      %v2850 = vpow.pop %v2849
      %v2851 = vmul.f32 %v2811, 1.442695
      %v2852 = vpow.pop %v2851
      %v2853 = vmul.f32 %v2812, 1.442695
      %v2854 = vpow.pop %v2853
      %v2855 = vmul.f32 %v2813, 1.442695
      %v2856 = vpow.pop %v2855
      %v2857 = vmul.f32 %v2814, 1.442695
      %v2858 = vpow.pop %v2857
      %v2859 = vmul.f32 %v2815, 1.442695
      %v2860 = vpow.pop %v2859
      %v2861 = vmul.f32 %v2816, 1.442695
      %v2862 = vpow.pop %v2861
      %v2863 = vmul.f32 %v2817, 1.442695
      %v2864 = vpow.pop %v2863
      %v2865 = vmul.f32 %v2818, 1.442695
      %v2866 = vpow.pop %v2865
      %v2867 = vmul.f32 %v2819, 1.442695
      %v2868 = vpow.pop %v2867
      %v2869 = vmul.f32 %v2820, 1.442695
      %v2870 = vpow.pop %v2869
      %v2871 = vmul.f32 %v2821, 1.442695
      %v2872 = vpow.pop %v2871
      %v2873 = vmul.f32 %v2822, 1.442695
      %v2874 = vpow.pop %v2873
      %v2875 = vmul.f32 %v2823, 1.442695
      %v2876 = vpow.pop %v2875
      %v2877 = vmul.f32 %v2824, 1.442695
      %v2878 = vpow.pop %v2877
      %v2879 = vmul.f32 %v2825, 1.442695
      %v2880 = vpow.pop %v2879
      %v2881 = vmul.f32 %v2826, 1.442695
      %v2882 = vpow.pop %v2881
      %v2883 = vmul.f32 %v2827, 1.442695
      %v2884 = vpow.pop %v2883
      %v2885 = vmul.f32 %v2828, 1.442695
      %v2886 = vpow.pop %v2885
      %v2887 = vmul.f32 %v2829, 1.442695
      %v2888 = vpow.pop %v2887
      %v2889 = vmul.f32 %v2830, 1.442695
      %v2890 = vpow.pop %v2889
      %v2891 = vmul.f32 %v2831, 1.442695
      %v2892 = vpow.pop %v2891
      %v2893 = vmul.f32 %v2832, 1.442695
      %v2894 = vpow.pop %v2893
      %v2895 = vmul.f32 %v2833, 1.442695
      %v2896 = vpow.pop %v2895
      %v2897 = vmul.f32 %v2834, 1.442695
      %v2898 = vpow.pop %v2897
      %v2899 = vmul.f32 %v2739, %v2836
      %v2900 = vmul.f32 %v2740, %v2838
      %v2901 = vmul.f32 %v2741, %v2840
      %v2902 = vmul.f32 %v2742, %v2842
      %v2903 = vmul.f32 %v2743, %v2844
      %v2904 = vmul.f32 %v2744, %v2846
      %v2905 = vmul.f32 %v2745, %v2848
      %v2906 = vmul.f32 %v2746, %v2850
      %v2907 = vmul.f32 %v2747, %v2852
      %v2908 = vmul.f32 %v2748, %v2854
      %v2909 = vmul.f32 %v2749, %v2856
      %v2910 = vmul.f32 %v2750, %v2858
      %v2911 = vmul.f32 %v2751, %v2860
      %v2912 = vmul.f32 %v2752, %v2862
      %v2913 = vmul.f32 %v2753, %v2864
      %v2914 = vmul.f32 %v2754, %v2866
      %v2915 = vmul.f32 %v2755, %v2868
      %v2916 = vmul.f32 %v2756, %v2870
      %v2917 = vmul.f32 %v2757, %v2872
      %v2918 = vmul.f32 %v2758, %v2874
      %v2919 = vmul.f32 %v2759, %v2876
      %v2920 = vmul.f32 %v2760, %v2878
      %v2921 = vmul.f32 %v2761, %v2880
      %v2922 = vmul.f32 %v2762, %v2882
      %v2923 = vmul.f32 %v2763, %v2884
      %v2924 = vmul.f32 %v2764, %v2886
      %v2925 = vmul.f32 %v2765, %v2888
      %v2926 = vmul.f32 %v2766, %v2890
      %v2927 = vmul.f32 %v2767, %v2892
      %v2928 = vmul.f32 %v2768, %v2894
      %v2929 = vmul.f32 %v2769, %v2896
      %v2930 = vmul.f32 %v2770, %v2898
      %v2931 = vsub.f32 1.0, %v2899
      %v2932 = vsub.f32 1.0, %v2900
      %v2933 = vsub.f32 1.0, %v2901
      %v2934 = vsub.f32 1.0, %v2902
      %v2935 = vsub.f32 1.0, %v2903
      %v2936 = vsub.f32 1.0, %v2904
      %v2937 = vsub.f32 1.0, %v2905
      %v2938 = vsub.f32 1.0, %v2906
      %v2939 = vsub.f32 1.0, %v2907
      %v2940 = vsub.f32 1.0, %v2908
      %v2941 = vsub.f32 1.0, %v2909
      %v2942 = vsub.f32 1.0, %v2910
      %v2943 = vsub.f32 1.0, %v2911
      %v2944 = vsub.f32 1.0, %v2912
      %v2945 = vsub.f32 1.0, %v2913
      %v2946 = vsub.f32 1.0, %v2914
      %v2947 = vsub.f32 1.0, %v2915
      %v2948 = vsub.f32 1.0, %v2916
      %v2949 = vsub.f32 1.0, %v2917
      %v2950 = vsub.f32 1.0, %v2918
      %v2951 = vsub.f32 1.0, %v2919
      %v2952 = vsub.f32 1.0, %v2920
      %v2953 = vsub.f32 1.0, %v2921
      %v2954 = vsub.f32 1.0, %v2922
      %v2955 = vsub.f32 1.0, %v2923
      %v2956 = vsub.f32 1.0, %v2924
      %v2957 = vsub.f32 1.0, %v2925
      %v2958 = vsub.f32 1.0, %v2926
      %v2959 = vsub.f32 1.0, %v2927
      %v2960 = vsub.f32 1.0, %v2928
      %v2961 = vsub.f32 1.0, %v2929
      %v2962 = vsub.f32 1.0, %v2930
      %vm2963 = vcmp.ge.f32.partialorder %v2323, 0.0
      %vm2964 = vcmp.ge.f32.partialorder %v2324, 0.0
      %vm2965 = vcmp.ge.f32.partialorder %v2325, 0.0
      %vm2966 = vcmp.ge.f32.partialorder %v2326, 0.0
      %vm2967 = vcmp.ge.f32.partialorder %v2327, 0.0
      %vm2968 = vcmp.ge.f32.partialorder %v2328, 0.0
      %vm2969 = vcmp.ge.f32.partialorder %v2329, 0.0
      %vm2970 = vcmp.ge.f32.partialorder %v2330, 0.0
      %vm2971 = vcmp.ge.f32.partialorder %v2331, 0.0
      %vm2972 = vcmp.ge.f32.partialorder %v2332, 0.0
      %vm2973 = vcmp.ge.f32.partialorder %v2333, 0.0
      %vm2974 = vcmp.ge.f32.partialorder %v2334, 0.0
      %vm2975 = vcmp.ge.f32.partialorder %v2335, 0.0
      %vm2976 = vcmp.ge.f32.partialorder %v2336, 0.0
      %vm2977 = vcmp.ge.f32.partialorder %v2337, 0.0
      %vm2978 = vcmp.ge.f32.partialorder %v2338, 0.0
      %vm2979 = vcmp.ge.f32.partialorder %v2339, 0.0
      %vm2980 = vcmp.ge.f32.partialorder %v2340, 0.0
      %vm2981 = vcmp.ge.f32.partialorder %v2341, 0.0
      %vm2982 = vcmp.ge.f32.partialorder %v2342, 0.0
      %vm2983 = vcmp.ge.f32.partialorder %v2343, 0.0
      %vm2984 = vcmp.ge.f32.partialorder %v2344, 0.0
      %vm2985 = vcmp.ge.f32.partialorder %v2345, 0.0
      %vm2986 = vcmp.ge.f32.partialorder %v2346, 0.0
      %vm2987 = vcmp.ge.f32.partialorder %v2347, 0.0
      %vm2988 = vcmp.ge.f32.partialorder %v2348, 0.0
      %vm2989 = vcmp.ge.f32.partialorder %v2349, 0.0
      %vm2990 = vcmp.ge.f32.partialorder %v2350, 0.0
      %vm2991 = vcmp.ge.f32.partialorder %v2351, 0.0
      %vm2992 = vcmp.ge.f32.partialorder %v2352, 0.0
      %vm2993 = vcmp.ge.f32.partialorder %v2353, 0.0
      %vm2994 = vcmp.ge.f32.partialorder %v2354, 0.0
      %v2995 = vsub.f32 0.0, %v2931
      %v2996 = vsub.f32 0.0, %v2932
      %v2997 = vsub.f32 0.0, %v2933
      %v2998 = vsub.f32 0.0, %v2934
      %v2999 = vsub.f32 0.0, %v2935
      %v3000 = vsub.f32 0.0, %v2936
      %v3001 = vsub.f32 0.0, %v2937
      %v3002 = vsub.f32 0.0, %v2938
      %v3003 = vsub.f32 0.0, %v2939
      %v3004 = vsub.f32 0.0, %v2940
      %v3005 = vsub.f32 0.0, %v2941
      %v3006 = vsub.f32 0.0, %v2942
      %v3007 = vsub.f32 0.0, %v2943
      %v3008 = vsub.f32 0.0, %v2944
      %v3009 = vsub.f32 0.0, %v2945
      %v3010 = vsub.f32 0.0, %v2946
      %v3011 = vsub.f32 0.0, %v2947
      %v3012 = vsub.f32 0.0, %v2948
      %v3013 = vsub.f32 0.0, %v2949
      %v3014 = vsub.f32 0.0, %v2950
      %v3015 = vsub.f32 0.0, %v2951
      %v3016 = vsub.f32 0.0, %v2952
      %v3017 = vsub.f32 0.0, %v2953
      %v3018 = vsub.f32 0.0, %v2954
      %v3019 = vsub.f32 0.0, %v2955
      %v3020 = vsub.f32 0.0, %v2956
      %v3021 = vsub.f32 0.0, %v2957
      %v3022 = vsub.f32 0.0, %v2958
      %v3023 = vsub.f32 0.0, %v2959
      %v3024 = vsub.f32 0.0, %v2960
      %v3025 = vsub.f32 0.0, %v2961
      %v3026 = vsub.f32 0.0, %v2962
      %v3027 = vsel %vm2963, %v2931, %v2995
      %v3028 = vsel %vm2964, %v2932, %v2996
      %v3029 = vsel %vm2965, %v2933, %v2997
      %v3030 = vsel %vm2966, %v2934, %v2998
      %v3031 = vsel %vm2967, %v2935, %v2999
      %v3032 = vsel %vm2968, %v2936, %v3000
      %v3033 = vsel %vm2969, %v2937, %v3001
      %v3034 = vsel %vm2970, %v2938, %v3002
      %v3035 = vsel %vm2971, %v2939, %v3003
      %v3036 = vsel %vm2972, %v2940, %v3004
      %v3037 = vsel %vm2973, %v2941, %v3005
      %v3038 = vsel %vm2974, %v2942, %v3006
      %v3039 = vsel %vm2975, %v2943, %v3007
      %v3040 = vsel %vm2976, %v2944, %v3008
      %v3041 = vsel %vm2977, %v2945, %v3009
      %v3042 = vsel %vm2978, %v2946, %v3010
      %v3043 = vsel %vm2979, %v2947, %v3011
      %v3044 = vsel %vm2980, %v2948, %v3012
      %v3045 = vsel %vm2981, %v2949, %v3013
      %v3046 = vsel %vm2982, %v2950, %v3014
      %v3047 = vsel %vm2983, %v2951, %v3015
      %v3048 = vsel %vm2984, %v2952, %v3016
      %v3049 = vsel %vm2985, %v2953, %v3017
      %v3050 = vsel %vm2986, %v2954, %v3018
      %v3051 = vsel %vm2987, %v2955, %v3019
      %v3052 = vsel %vm2988, %v2956, %v3020
      %v3053 = vsel %vm2989, %v2957, %v3021
      %v3054 = vsel %vm2990, %v2958, %v3022
      %v3055 = vsel %vm2991, %v2959, %v3023
      %v3056 = vsel %vm2992, %v2960, %v3024
      %v3057 = vsel %vm2993, %v2961, %v3025
      %v3058 = vsel %vm2994, %v2962, %v3026
      %v3059 = vmul.f32 %v2244, 0.5
      %v3060 = vmul.f32 %v2246, 0.5
      %v3061 = vmul.f32 %v2249, 0.5
      %v3062 = vmul.f32 %v2251, 0.5
      %v3063 = vmul.f32 %v2254, 0.5
      %v3064 = vmul.f32 %v2256, 0.5
      %v3065 = vmul.f32 %v2259, 0.5
      %v3066 = vmul.f32 %v2261, 0.5
      %v3067 = vmul.f32 %v2264, 0.5
      %v3068 = vmul.f32 %v2266, 0.5
      %v3069 = vmul.f32 %v2269, 0.5
      %v3070 = vmul.f32 %v2271, 0.5
      %v3071 = vmul.f32 %v2274, 0.5
      %v3072 = vmul.f32 %v2276, 0.5
      %v3073 = vmul.f32 %v2279, 0.5
      %v3074 = vmul.f32 %v2281, 0.5
      %v3075 = vmul.f32 %v2284, 0.5
      %v3076 = vmul.f32 %v2286, 0.5
      %v3077 = vmul.f32 %v2289, 0.5
      %v3078 = vmul.f32 %v2291, 0.5
      %v3079 = vmul.f32 %v2294, 0.5
      %v3080 = vmul.f32 %v2296, 0.5
      %v3081 = vmul.f32 %v2299, 0.5
      %v3082 = vmul.f32 %v2301, 0.5
      %v3083 = vmul.f32 %v2304, 0.5
      %v3084 = vmul.f32 %v2306, 0.5
      %v3085 = vmul.f32 %v2309, 0.5
      %v3086 = vmul.f32 %v2311, 0.5
      %v3087 = vmul.f32 %v2314, 0.5
      %v3088 = vmul.f32 %v2316, 0.5
      %v3089 = vmul.f32 %v2319, 0.5
      %v3090 = vmul.f32 %v2321, 0.5
      %v3091 = vadd.f32 %v3027, 1.0
      %v3092 = vadd.f32 %v3028, 1.0
      %v3093 = vadd.f32 %v3029, 1.0
      %v3094 = vadd.f32 %v3030, 1.0
      %v3095 = vadd.f32 %v3031, 1.0
      %v3096 = vadd.f32 %v3032, 1.0
      %v3097 = vadd.f32 %v3033, 1.0
      %v3098 = vadd.f32 %v3034, 1.0
      %v3099 = vadd.f32 %v3035, 1.0
      %v3100 = vadd.f32 %v3036, 1.0
      %v3101 = vadd.f32 %v3037, 1.0
      %v3102 = vadd.f32 %v3038, 1.0
      %v3103 = vadd.f32 %v3039, 1.0
      %v3104 = vadd.f32 %v3040, 1.0
      %v3105 = vadd.f32 %v3041, 1.0
      %v3106 = vadd.f32 %v3042, 1.0
      %v3107 = vadd.f32 %v3043, 1.0
      %v3108 = vadd.f32 %v3044, 1.0
      %v3109 = vadd.f32 %v3045, 1.0
      %v3110 = vadd.f32 %v3046, 1.0
      %v3111 = vadd.f32 %v3047, 1.0
      %v3112 = vadd.f32 %v3048, 1.0
      %v3113 = vadd.f32 %v3049, 1.0
      %v3114 = vadd.f32 %v3050, 1.0
      %v3115 = vadd.f32 %v3051, 1.0
      %v3116 = vadd.f32 %v3052, 1.0
      %v3117 = vadd.f32 %v3053, 1.0
      %v3118 = vadd.f32 %v3054, 1.0
      %v3119 = vadd.f32 %v3055, 1.0
      %v3120 = vadd.f32 %v3056, 1.0
      %v3121 = vadd.f32 %v3057, 1.0
      %v3122 = vadd.f32 %v3058, 1.0
      %v3123 = vmul.f32 %v3059, %v3091
      %v3124 = vmul.f32 %v3060, %v3092
      %v3125 = vmul.f32 %v3061, %v3093
      %v3126 = vmul.f32 %v3062, %v3094
      %v3127 = vmul.f32 %v3063, %v3095
      %v3128 = vmul.f32 %v3064, %v3096
      %v3129 = vmul.f32 %v3065, %v3097
      %v3130 = vmul.f32 %v3066, %v3098
      %v3131 = vmul.f32 %v3067, %v3099
      %v3132 = vmul.f32 %v3068, %v3100
      %v3133 = vmul.f32 %v3069, %v3101
      %v3134 = vmul.f32 %v3070, %v3102
      %v3135 = vmul.f32 %v3071, %v3103
      %v3136 = vmul.f32 %v3072, %v3104
      %v3137 = vmul.f32 %v3073, %v3105
      %v3138 = vmul.f32 %v3074, %v3106
      %v3139 = vmul.f32 %v3075, %v3107
      %v3140 = vmul.f32 %v3076, %v3108
      %v3141 = vmul.f32 %v3077, %v3109
      %v3142 = vmul.f32 %v3078, %v3110
      %v3143 = vmul.f32 %v3079, %v3111
      %v3144 = vmul.f32 %v3080, %v3112
      %v3145 = vmul.f32 %v3081, %v3113
      %v3146 = vmul.f32 %v3082, %v3114
      %v3147 = vmul.f32 %v3083, %v3115
      %v3148 = vmul.f32 %v3084, %v3116
      %v3149 = vmul.f32 %v3085, %v3117
      %v3150 = vmul.f32 %v3086, %v3118
      %v3151 = vmul.f32 %v3087, %v3119
      %v3152 = vmul.f32 %v3088, %v3120
      %v3153 = vmul.f32 %v3089, %v3121
      %v3154 = vmul.f32 %v3090, %v3122
      %v3155 = vld [vmem:[%s7] sm:$0x3]
      %v3156 = vpack.c.bf16 %v3124, %v3123
      %v3157 = vpack.c.bf16 %v3126, %v3125
      %v3158 = vpack.c.bf16 %v3128, %v3127
      %v3159 = vpack.c.bf16 %v3130, %v3129
      %v3160 = vpack.c.bf16 %v3132, %v3131
      %v3161 = vpack.c.bf16 %v3134, %v3133
      %v3162 = vpack.c.bf16 %v3136, %v3135
      %v3163 = vpack.c.bf16 %v3138, %v3137
      %v3164 = vpack.c.bf16 %v3140, %v3139
      %v3165 = vpack.c.bf16 %v3142, %v3141
      %v3166 = vpack.c.bf16 %v3144, %v3143
      %v3167 = vpack.c.bf16 %v3146, %v3145
      %v3168 = vpack.c.bf16 %v3148, %v3147
      %v3169 = vpack.c.bf16 %v3150, %v3149
      %v3170 = vpack.c.bf16 %v3152, %v3151
      %v3171 = vpack.c.bf16 %v3154, %v3153
      %v3172 = vld [vmem:[%s8] sm:$0xf]
      %3174 = vset.pattern.permute.xlu0 0
      %3175 = vperm.xlu0 %3174, %v3172
      %v3176 = vpop.permute.xlu0 %3175
      %v3179 = vsel %vm544, %v3155, 0
      %v3182 = vsel %vm544, %v3156, 0
      %v3185 = vsel %vm544, %v3157, 0
      %v3188 = vsel %vm544, %v3158, 0
      %v3191 = vsel %vm544, %v3159, 0
      %v3194 = vsel %vm544, %v3160, 0
      %v3197 = vsel %vm544, %v3161, 0
      %v3200 = vsel %vm544, %v3162, 0
      %v3203 = vsel %vm544, %v3163, 0
      %v3206 = vsel %vm544, %v3164, 0
      %v3209 = vsel %vm544, %v3165, 0
      %v3212 = vsel %vm544, %v3166, 0
      %v3215 = vsel %vm544, %v3167, 0
      %v3218 = vsel %vm544, %v3168, 0
      %v3221 = vsel %vm544, %v3169, 0
      %v3224 = vsel %vm544, %v3170, 0
      %v3227 = vsel %vm544, %v3171, 0
      %3229 = vmatpush.bf16.xpose.msra.mxu0 %v3203
      %3230 = vmatpush.bf16.xpose.msra.mxu0 %v3200
      %3231 = vmatpush.bf16.xpose.msra.mxu0 %v3197
      %3232 = vmatpush.bf16.xpose.msra.mxu0 %v3194
      %3233 = vmatpush.bf16.xpose.msra.mxu0 %v3191
      %3234 = vmatpush.bf16.xpose.msra.mxu0 %v3188
      %3235 = vmatpush.bf16.xpose.msra.mxu0 %v3185
      %3236 = vmatpush.bf16.xpose.msra.mxu0 %v3182
      %3237 = vmatmul.bf16.gmra.mxu0 %v3179
      %v3238 = vpop.f32.mrf.mxu0
      %v3239 = vadd.f32 %v3176, %v3238
      %v3240 = vpop.f32.mrf.mxu0
      %3241 = vdwg.mxu0
      %3242 = vmatpush.bf16.xpose.msra.mxu0 %v3227
      %3243 = vmatpush.bf16.xpose.msra.mxu0 %v3224
      %3244 = vmatpush.bf16.xpose.msra.mxu0 %v3221
      %3245 = vmatpush.bf16.xpose.msra.mxu0 %v3218
      %3246 = vmatpush.bf16.xpose.msra.mxu0 %v3215
      %3247 = vmatpush.bf16.xpose.msra.mxu0 %v3212
      %3248 = vmatpush.bf16.xpose.msra.mxu0 %v3209
      %3249 = vmatpush.bf16.xpose.msra.mxu0 %v3206
      %3250 = vmatmul.bf16.gmra.mxu0 %v3179
      %v3251 = vpop.f32.mrf.mxu0
      %v3252 = vadd.f32 %v3176, %v3251
      %v3253 = vpop.f32.mrf.mxu0
      %3254 = vdwg.mxu0
      %v3257 = vrot.slane %v3252, 4
      %vm3258 = vcmask 1043456
      %v3259 = vsel %vm3258, %v3239, %v3257
      %3261 = vst [vmem:[%s332] sm:$0xff] %v3259
      %p3262 = scmp.lt.s32.totalorder %s20, 1
      %s3263 = scalar_select %p3262, %s20, 1
      %s3264 = smul.addr %s3263, 2
      %s3265 = smul.addr %s3264, 4
      %s3266 = scalar_lea.vmem %s9, %s3265
      // Predicated region
      $region57: #{mix_feed_forward.1} parent=55 // pred_check
        %p3267 = pneg %p232
      $region58: #{mix_feed_forward.1} parent=55 // pred_check_branch
        %3269 = sbr.rel (%p3267) target = $region60
      $region59: #{mix_feed_forward.1} parent=55 // pred_region
        _
      $region60: #{mix_feed_forward.1} parent=55 // pred_fallthru
        _
    $region56: #{mix_feed_forward.1} parent=5 // pred_fallthru
      _
    %p3270 = scmp.le.s32.totalorder 2, %s15
    // Predicated region
    $region61: #{mix_feed_forward.1} parent=5 // pred_check
      %p3271 = pneg %p3270
    $region62: #{mix_feed_forward.1} parent=5 // pred_check_branch
      %3273 = sbr.rel (%p3271) target = $region64
    $region63: #{mix_feed_forward.1} parent=5 // pred_region
      %s3274 = ssub.s32 %s15, 2
      // Predicated region
      $region65: #{mix_feed_forward.1} parent=63 // pred_check
        %p3275 = pneg %p238
      $region66: #{mix_feed_forward.1} parent=63 // pred_check_branch
        %3277 = sbr.rel (%p3275) target = $region68
      $region67: #{mix_feed_forward.1} parent=63 // pred_region
        %p3278 = scmp.lt.s32.totalorder %s21, 1
        %s3279 = scalar_select %p3278, %s21, 1
        %s3280 = smul.addr %s3279, 2
        %s3281 = smul.addr %s3280, 4
        %s3282 = scalar_lea.vmem %s9, %s3281
      $region68: #{mix_feed_forward.1} parent=63 // pred_fallthru
        _
    $region64: #{mix_feed_forward.1} parent=5 // pred_fallthru
      _
  $region6: #{mix_feed_forward.1} parent=0 // loop_footer
    %s19 = sadd.s32 1, %s15
  $region7: #{mix_feed_forward.1} parent=0 // loop_footer_branch
    %14 = sbr.rel target = $region3
  $region8: #{mix_feed_forward.1} parent=0 // loop_exit
    _

</llo_original>
